<compile_context>
chip_gen: v7x
topology: tpu7x:2x2x1
jax: 0.10.0
libtpu: 0.0.40
codegen_flags: <defaults>
</compile_context>

<pallas_src>
import functools

import jax
import jax.numpy as jnp
from jax.experimental import pallas as pl
from jax.experimental.pallas import tpu as pltpu

LANE = 128


def _round_up(n, m=LANE):
    return ((n + m - 1) // m) * m


# ---------------------------------------------------------------------------
# Fused BottleNeck kernel (one grid step == one image)
# ---------------------------------------------------------------------------
def _bottleneck_kernel(x_ref, w1_ref, b1_ref, w2_ref, b2_ref, w3s_ref, bo_ref,
                       o_ref, h1s_ref, acc_ref, *, stride, ho, wo):
    """
    x_ref  : (1, s*s*Ho*Wo, Cin_p) bf16  parity-split rows (py, px, i, j)
    w1_ref : (Cin_p, Cmid_p)  bf16  (BN1 folded)       b1_ref: (1, Cmid_p) f32
    w2_ref : (5, 2*Cmid_p, Cmid_p) bf16  paired 3x3 taps (BN2 folded):
             pair p = taps (2p, 2p+1) stacked along K; pair 4 = [tap8; zeros]
    b2_ref : (1, Cmid_p) f32
    w3s_ref: (Cmid_p + Cin_p, Cexp_p) bf16  stacked [w3 (BN3 folded); w_sc (BNs folded)]
    bo_ref : (1, Cexp_p) f32  (= b3 + b_shortcut)
    o_ref  : (1, Ho*Wo, Cexp_p) f32
    h1s_ref: VMEM scratch (s*s, Ho+2, Wo+2, Cmid_p) bf16 — zero-bordered,
             parity-split h1 (border realises the 3x3 conv's padding=1).
    acc_ref: VMEM scratch (Ho*Wo, Cmid_p) f32 — stage-2 accumulator.
    """
    s = stride
    n_par = s * s
    rows_out = ho * wo
    cmid = w1_ref.shape[1]

    # ---- stage 1: 1x1 conv (+ folded BN) + ReLU over every input pixel ----
    xb = x_ref[0]                                                 # (rows_in, Cin_p) bf16
    h1 = jnp.dot(xb, w1_ref[...], preferred_element_type=jnp.float32)
    h1 = jnp.maximum(h1 + b1_ref[...], 0.0).astype(jnp.bfloat16)  # (rows_in, Cmid_p)

    # Re-zero only the 1-pixel border strips (every step -> valid per-core
    # under the parallel grid); the interior is fully overwritten below.
    h1s_ref[:, 0:1, :, :] = jnp.zeros((n_par, 1, wo + 2, cmid), jnp.bfloat16)
    h1s_ref[:, ho + 1:ho + 2, :, :] = jnp.zeros((n_par, 1, wo + 2, cmid), jnp.bfloat16)
    h1s_ref[:, 1:ho + 1, 0:1, :] = jnp.zeros((n_par, ho, 1, cmid), jnp.bfloat16)
    h1s_ref[:, 1:ho + 1, wo + 1:wo + 2, :] = jnp.zeros((n_par, ho, 1, cmid), jnp.bfloat16)
    h1s_ref[:, 1:ho + 1, 1:wo + 1, :] = h1.reshape(n_par, ho, wo, cmid)

    # ---- stage 2: 3x3 stride-s conv, taps paired to K=2*Cmid_p (+BN+ReLU) --
    def window(t):
        dy, dx = t // 3, t % 3
        qy, py = divmod(dy - 1, s)          # input row = s*(i+qy) + py
        qx, px = divmod(dx - 1, s)          # input col = s*(j+qx) + px
        w = h1s_ref[py * s + px, 1 + qy:1 + qy + ho, 1 + qx:1 + qx + wo, :]
        return w.reshape(rows_out, cmid)    # bf16

    acc_ref[...] = jnp.dot(jnp.concatenate([window(0), window(1)], axis=-1),
                           w2_ref[0], preferred_element_type=jnp.float32)
    for p in range(1, 4):
        acc_ref[...] += jnp.dot(
            jnp.concatenate([window(2 * p), window(2 * p + 1)], axis=-1),
            w2_ref[p], preferred_element_type=jnp.float32)
    acc_ref[...] += jnp.dot(window(8), w2_ref[4, 0:cmid, :],
                            preferred_element_type=jnp.float32)
    h2 = jnp.maximum(acc_ref[...] + b2_ref[...], 0.0).astype(jnp.bfloat16)

    # ---- stage 3 (1x1) fused with the strided shortcut (1x1) ---------------
    # Parity plane (0,0) == x[::s, ::s]: the first Ho*Wo rows of xb.
    x_sc = xb[0:rows_out, :]
    y = jnp.dot(jnp.concatenate([h2, x_sc], axis=-1), w3s_ref[...],
                preferred_element_type=jnp.float32)
    y = jnp.maximum(y + bo_ref[...], 0.0)
    o_ref[...] = y.reshape(1, rows_out, y.shape[-1]).astype(o_ref.dtype)


# ---------------------------------------------------------------------------
# Host-side parameter prep (BN folding, padding, pairing, bf16) — ONCE per model
# ---------------------------------------------------------------------------
def _fold_bn(gamma, beta, mean, var, eps=1e-5):
    scale = gamma / jnp.sqrt(var + eps)
    return scale, beta - mean * scale


def _pad2(a, rows, cols):
    return jnp.pad(a, ((0, rows - a.shape[0]), (0, cols - a.shape[1])))


def prepare_params(params):
    s1, b1 = _fold_bn(*params["bn1"])
    s2, b2 = _fold_bn(*params["bn2"])
    s3, b3 = _fold_bn(*params["bn3"])
    ss, bs = _fold_bn(*params["bns"])

    cmid_t, cin_t = params["w1"].shape[:2]
    cexp_t = params["w3"].shape[0]
    cin, cmid, cexp = _round_up(cin_t), _round_up(cmid_t), _round_up(cexp_t)

    w1 = _pad2((params["w1"][:, :, 0, 0] * s1[:, None]).T, cin, cmid)
    w3 = _pad2((params["w3"][:, :, 0, 0] * s3[:, None]).T, cmid, cexp)
    ws = _pad2((params["ws"][:, :, 0, 0] * ss[:, None]).T, cin, cexp)
    w3s = jnp.concatenate([w3, ws], axis=0)                       # (Cmid_p+Cin_p, Cexp_p)

    # 3x3 weights: (O, I, 3, 3) -> 9 taps of (I, O) with BN2 scale folded in,
    # then pair taps along K so every MXU dot has K = 2*Cmid_p.
    w2 = jnp.transpose(params["w2"], (2, 3, 1, 0)) * s2            # (3,3,I,O)
    w2 = jnp.pad(w2, ((0, 0), (0, 0), (0, cmid - cmid_t), (0, cmid - cmid_t)))
    w2 = w2.reshape(9, cmid, cmid)
    pairs = [jnp.concatenate([w2[2 * p], w2[2 * p + 1]], axis=0) for p in range(4)]
    pairs.append(jnp.concatenate([w2[8], jnp.zeros_like(w2[8])], axis=0))
    w2p = jnp.stack(pairs, axis=0)                                 # (5, 2*Cmid_p, Cmid_p)

    def padb(b, c):
        return jnp.pad(b, (0, c - b.shape[0])).reshape(1, c).astype(jnp.float32)

    return dict(
        w1=w1.astype(jnp.bfloat16), b1=padb(b1, cmid),
        w2p=w2p.astype(jnp.bfloat16), b2=padb(b2, cmid),
        w3s=w3s.astype(jnp.bfloat16),
        bo=padb(b3 + bs, cexp),
        dims=(cin_t, cmid_t, cexp_t, cin, cmid, cexp),
    )


# ---------------------------------------------------------------------------
# BottleNeck forward (Pallas path) — `prepared` comes from prepare_params()
# ---------------------------------------------------------------------------
def bottleneck_forward(x_nchw, prepared, stride):
    N, Cin, H, W = x_nchw.shape
    s = stride
    assert H % s == 0 and W % s == 0, "spatial dims must be divisible by stride"
    ho, wo = H // s, W // s
    rows_in, rows_out = s * s * ho * wo, ho * wo

    cin_t, cmid_t, cexp_t, cin, cmid, cexp = prepared["dims"]
    assert cin_t == Cin

    # Parity-split row layout, cast to bf16 once on the host:
    # row-major (py, px, i, j); plane (0,0) is the stride-s subsampled image.
    xp = x_nchw.reshape(N, Cin, ho, s, wo, s)
    xp = jnp.transpose(xp, (0, 3, 5, 2, 4, 1)).reshape(N, rows_in, Cin)
    xp = jnp.pad(xp, ((0, 0), (0, 0), (0, cin - Cin))).astype(jnp.bfloat16)

    kernel = functools.partial(_bottleneck_kernel, stride=s, ho=ho, wo=wo)

    out = pl.pallas_call(
        kernel,
        out_shape=jax.ShapeDtypeStruct((N, rows_out, cexp), jnp.float32),
        grid=(N,),
        in_specs=[
            pl.BlockSpec((1, rows_in, cin), lambda n: (n, 0, 0)),      # x (bf16 parity rows)
            pl.BlockSpec((cin, cmid), lambda n: (0, 0)),               # w1
            pl.BlockSpec((1, cmid), lambda n: (0, 0)),                 # b1
            pl.BlockSpec((5, 2 * cmid, cmid), lambda n: (0, 0, 0)),    # w2 paired taps
            pl.BlockSpec((1, cmid), lambda n: (0, 0)),                 # b2
            pl.BlockSpec((cmid + cin, cexp), lambda n: (0, 0)),        # [w3; w_shortcut]
            pl.BlockSpec((1, cexp), lambda n: (0, 0)),                 # b3 + b_sc
        ],
        out_specs=pl.BlockSpec((1, rows_out, cexp), lambda n: (n, 0, 0)),
        scratch_shapes=[
            pltpu.VMEM((s * s, ho + 2, wo + 2, cmid), jnp.bfloat16),   # h1 parity scratch
            pltpu.VMEM((rows_out, cmid), jnp.float32),                 # stage-2 accumulator
        ],
        compiler_params=pltpu.CompilerParams(
            dimension_semantics=("parallel",),
            vmem_limit_bytes=40 * 1024 * 1024),
    )(xp, prepared["w1"], prepared["b1"], prepared["w2p"], prepared["b2"],
      prepared["w3s"], prepared["bo"])

    out = out[:, :, :cexp_t].reshape(N, ho, wo, cexp_t)
    return jnp.transpose(out, (0, 3, 1, 2))     # back to NCHW (module contract)


# ---------------------------------------------------------------------------
# Parameter construction (deterministic, PyTorch-layout weights)
# ---------------------------------------------------------------------------
def init_params(key, in_channels, out_channels, expansion=4):
    ks = list(jax.random.split(key, 20))
    p = {}

    def conv_w(k, cout, cin, kh, kw):
        fan_in = cin * kh * kw
        return jax.random.normal(k, (cout, cin, kh, kw), jnp.float32) * (2.0 / fan_in) ** 0.5

    def bn(k, c):
        k1, k2, k3, k4 = jax.random.split(k, 4)
        gamma = 0.5 + jax.random.uniform(k1, (c,), jnp.float32)
        beta = 0.1 * jax.random.normal(k2, (c,), jnp.float32)
        mean = 0.1 * jax.random.normal(k3, (c,), jnp.float32)
        var = 0.5 + jax.random.uniform(k4, (c,), jnp.float32)
        return gamma, beta, mean, var

    c_exp = out_channels * expansion
    p["w1"] = conv_w(ks[0], out_channels, in_channels, 1, 1)
    p["bn1"] = bn(ks[1], out_channels)
    p["w2"] = conv_w(ks[2], out_channels, out_channels, 3, 3)
    p["bn2"] = bn(ks[3], out_channels)
    p["w3"] = conv_w(ks[4], c_exp, out_channels, 1, 1)
    p["bn3"] = bn(ks[5], c_exp)
    p["ws"] = conv_w(ks[6], c_exp, in_channels, 1, 1)
    p["bns"] = bn(ks[7], c_exp)
    return p


# ---------------------------------------------------------------------------
# Reference (lax.conv) with the same bf16-operand / f32-accumulate quantization
# points as the kernel, for a tight correctness check.
# ---------------------------------------------------------------------------
def bottleneck_ref(x_nchw, params, stride):
    def conv(x, w_oihw, scale, st, padding):
        w = jnp.transpose(w_oihw, (2, 3, 1, 0)) * scale           # HWIO, BN folded
        return jax.lax.conv_general_dilated(
            x.astype(jnp.bfloat16), w.astype(jnp.bfloat16),
            (st, st), padding,
            dimension_numbers=("NHWC", "HWIO", "NHWC"),
            preferred_element_type=jnp.float32)

    s1, b1 = _fold_bn(*params["bn1"])
    s2, b2 = _fold_bn(*params["bn2"])
    s3, b3 = _fold_bn(*params["bn3"])
    ss, bs = _fold_bn(*params["bns"])
    x = jnp.transpose(x_nchw, (0, 2, 3, 1))
    h = jnp.maximum(conv(x, params["w1"], s1, 1, "VALID") + b1, 0.0)
    h = jnp.maximum(conv(h, params["w2"], s2, stride, [(1, 1), (1, 1)]) + b2, 0.0)
    y = conv(h, params["w3"], s3, 1, "VALID") + conv(x, params["ws"], ss, stride, "VALID")
    y = jnp.maximum(y + b3 + bs, 0.0)
    return jnp.transpose(y, (0, 3, 1, 2))


# ---------------------------------------------------------------------------
if __name__ == "__main__":
    key = jax.random.PRNGKey(0)
    k_x, k_p = jax.random.split(key)

    # Small shapes consistent with the module: BottleNeck(in=8, out=4, stride=2)
    N, Cin, H, W = 2, 8, 16, 16
    out_channels, stride = 4, 2

    x = jax.random.normal(k_x, (N, Cin, H, W), jnp.float32)
    params = init_params(k_p, Cin, out_channels)
    prepared = prepare_params(params)          # BN fold / pad / pack — once per model

    out = jax.block_until_ready(bottleneck_forward(x, prepared, stride))
    ref = bottleneck_ref(x, params, stride)

    assert out.shape == (N, out_channels * 4, H // stride, W // stride), out.shape
    # bf16 matmul operands with f32 accumulation -> compare against the
    # identically-quantized conv reference.
    assert jnp.allclose(out, ref, atol=2e-2, rtol=2e-2), (
        "mismatch vs reference, max abs err = %f" % float(jnp.max(jnp.abs(out - ref))))

    print("KERNEL_OK")
</pallas_src>

<mosaic_0001>
module attributes {stable_mosaic.version = 11 : i64} {
  func.func @_bottleneck_kernel(%arg0: i32, %arg1: memref<1x256x128xbf16, #tpu.memory_space<vmem>>, %arg2: memref<128x128xbf16, #tpu.memory_space<vmem>>, %arg3: memref<1x128xf32, #tpu.memory_space<vmem>>, %arg4: memref<5x256x128xbf16, #tpu.memory_space<vmem>>, %arg5: memref<1x128xf32, #tpu.memory_space<vmem>>, %arg6: memref<256x128xbf16, #tpu.memory_space<vmem>>, %arg7: memref<1x128xf32, #tpu.memory_space<vmem>>, %arg8: memref<1x64x128xf32, #tpu.memory_space<vmem>>, %arg9: memref<4x10x10x128xbf16, #tpu.memory_space<vmem>>, %arg10: memref<64x128xf32, #tpu.memory_space<vmem>>) attributes {dimension_semantics = [#tpu.dimension_semantics<parallel>], iteration_bounds = array<i64: 2>, scalar_prefetch = 0 : i64, scratch_operands = 2 : i64, tpu.core_type = #tpu.core_type<tc>, window_params = [{transform_indices = @transform_0, window_bounds = array<i64: 1, 256, 128>}, {pipeline_mode = #tpu.pipeline_mode<synchronous>, transform_indices = @transform_1, window_bounds = array<i64: 128, 128>}, {pipeline_mode = #tpu.pipeline_mode<synchronous>, transform_indices = @transform_2, window_bounds = array<i64: 1, 128>}, {pipeline_mode = #tpu.pipeline_mode<synchronous>, transform_indices = @transform_3, window_bounds = array<i64: 5, 256, 128>}, {pipeline_mode = #tpu.pipeline_mode<synchronous>, transform_indices = @transform_4, window_bounds = array<i64: 1, 128>}, {pipeline_mode = #tpu.pipeline_mode<synchronous>, transform_indices = @transform_5, window_bounds = array<i64: 256, 128>}, {pipeline_mode = #tpu.pipeline_mode<synchronous>, transform_indices = @transform_6, window_bounds = array<i64: 1, 128>}, {transform_indices = @transform_7, window_bounds = array<i64: 1, 64, 128>}]} {
    %c0 = arith.constant 0 : index
    %c0_0 = arith.constant 0 : index
    %c0_1 = arith.constant 0 : index
    %0 = vector.load %arg1[%c0, %c0_0, %c0_1] : memref<1x256x128xbf16, #tpu.memory_space<vmem>>, vector<1x256x128xbf16>
    %1 = vector.shape_cast %0 : vector<1x256x128xbf16> to vector<256x128xbf16>
    %c0_2 = arith.constant 0 : index
    %c0_3 = arith.constant 0 : index
    %2 = vector.load %arg2[%c0_2, %c0_3] : memref<128x128xbf16, #tpu.memory_space<vmem>>, vector<128x128xbf16>
    %cst = arith.constant dense<0.000000e+00> : vector<256x128xf32>
    %3 = tpu.matmul %1, %2, %cst {dimension_numbers = #tpu.dot_dimension_numbers<[1], [0], [0], [1], [0, 0, 1, 1], [], []>} : vector<256x128xbf16>, vector<128x128xbf16>, vector<256x128xf32> -> vector<256x128xf32>
    %c0_4 = arith.constant 0 : index
    %c0_5 = arith.constant 0 : index
    %4 = vector.load %arg3[%c0_4, %c0_5] : memref<1x128xf32, #tpu.memory_space<vmem>>, vector<1x128xf32>
    %5 = vector.broadcast %4 : vector<1x128xf32> to vector<256x128xf32>
    %6 = arith.addf %3, %5 : vector<256x128xf32>
    %cst_6 = arith.constant 0.000000e+00 : f32
    %7 = vector.broadcast %cst_6 : f32 to vector<256x128xf32>
    %8 = arith.maximumf %6, %7 : vector<256x128xf32>
    %9 = arith.truncf %8 : vector<256x128xf32> to vector<256x128xbf16>
    %cst_7 = arith.constant 0.000000e+00 : bf16
    %10 = vector.broadcast %cst_7 : bf16 to vector<4x1x10x128xbf16>
    %c0_8 = arith.constant 0 : index
    %c0_9 = arith.constant 0 : index
    %c0_10 = arith.constant 0 : index
    %c0_11 = arith.constant 0 : index
    %11 = vector.load %arg9[%c0_8, %c0_9, %c0_10, %c0_11] : memref<4x10x10x128xbf16, #tpu.memory_space<vmem>>, vector<4x1x10x128xbf16>
    tpu.vector_store %arg9[%c0_8, %c0_9, %c0_10, %c0_11], %10 {strides = array<i32>} : memref<4x10x10x128xbf16, #tpu.memory_space<vmem>>, vector<4x1x10x128xbf16>,
    %cst_12 = arith.constant 0.000000e+00 : bf16
    %12 = vector.broadcast %cst_12 : bf16 to vector<4x1x10x128xbf16>
    %c0_13 = arith.constant 0 : index
    %c9 = arith.constant 9 : index
    %c0_14 = arith.constant 0 : index
    %c0_15 = arith.constant 0 : index
    %13 = vector.load %arg9[%c0_13, %c9, %c0_14, %c0_15] : memref<4x10x10x128xbf16, #tpu.memory_space<vmem>>, vector<4x1x10x128xbf16>
    tpu.vector_store %arg9[%c0_13, %c9, %c0_14, %c0_15], %12 {strides = array<i32>} : memref<4x10x10x128xbf16, #tpu.memory_space<vmem>>, vector<4x1x10x128xbf16>,
    %cst_16 = arith.constant 0.000000e+00 : bf16
    %14 = vector.broadcast %cst_16 : bf16 to vector<4x8x1x128xbf16>
    %c0_17 = arith.constant 0 : index
    %c1 = arith.constant 1 : index
    %c0_18 = arith.constant 0 : index
    %c0_19 = arith.constant 0 : index
    %15 = vector.load %arg9[%c0_17, %c1, %c0_18, %c0_19] : memref<4x10x10x128xbf16, #tpu.memory_space<vmem>>, vector<4x8x1x128xbf16>
    tpu.vector_store %arg9[%c0_17, %c1, %c0_18, %c0_19], %14 {strides = array<i32>} : memref<4x10x10x128xbf16, #tpu.memory_space<vmem>>, vector<4x8x1x128xbf16>,
    %cst_20 = arith.constant 0.000000e+00 : bf16
    %16 = vector.broadcast %cst_20 : bf16 to vector<4x8x1x128xbf16>
    %c0_21 = arith.constant 0 : index
    %c1_22 = arith.constant 1 : index
    %c9_23 = arith.constant 9 : index
    %c0_24 = arith.constant 0 : index
    %17 = vector.load %arg9[%c0_21, %c1_22, %c9_23, %c0_24] : memref<4x10x10x128xbf16, #tpu.memory_space<vmem>>, vector<4x8x1x128xbf16>
    tpu.vector_store %arg9[%c0_21, %c1_22, %c9_23, %c0_24], %16 {strides = array<i32>} : memref<4x10x10x128xbf16, #tpu.memory_space<vmem>>, vector<4x8x1x128xbf16>,
    %18 = vector.shape_cast %9 : vector<256x128xbf16> to vector<4x8x8x128xbf16>
    %c0_25 = arith.constant 0 : index
    %c1_26 = arith.constant 1 : index
    %c1_27 = arith.constant 1 : index
    %c0_28 = arith.constant 0 : index
    %19 = vector.load %arg9[%c0_25, %c1_26, %c1_27, %c0_28] : memref<4x10x10x128xbf16, #tpu.memory_space<vmem>>, vector<4x8x8x128xbf16>
    tpu.vector_store %arg9[%c0_25, %c1_26, %c1_27, %c0_28], %18 {strides = array<i32>} : memref<4x10x10x128xbf16, #tpu.memory_space<vmem>>, vector<4x8x8x128xbf16>,
    %c3 = arith.constant 3 : index
    %c0_29 = arith.constant 0 : index
    %c0_30 = arith.constant 0 : index
    %c0_31 = arith.constant 0 : index
    %20 = vector.load %arg9[%c3, %c0_29, %c0_30, %c0_31] : memref<4x10x10x128xbf16, #tpu.memory_space<vmem>>, vector<1x8x8x128xbf16>
    %21 = vector.shape_cast %20 : vector<1x8x8x128xbf16> to vector<8x8x128xbf16>
    %22 = vector.shape_cast %21 : vector<8x8x128xbf16> to vector<64x128xbf16>
    %c2 = arith.constant 2 : index
    %c0_32 = arith.constant 0 : index
    %c1_33 = arith.constant 1 : index
    %c0_34 = arith.constant 0 : index
    %23 = vector.load %arg9[%c2, %c0_32, %c1_33, %c0_34] : memref<4x10x10x128xbf16, #tpu.memory_space<vmem>>, vector<1x8x8x128xbf16>
    %24 = vector.shape_cast %23 : vector<1x8x8x128xbf16> to vector<8x8x128xbf16>
    %25 = vector.shape_cast %24 : vector<8x8x128xbf16> to vector<64x128xbf16>
    %26 = tpu.concatenate %22, %25 in 1 : vector<64x128xbf16>, vector<64x128xbf16> -> vector<64x256xbf16>
    %c0_35 = arith.constant 0 : index
    %c0_36 = arith.constant 0 : index
    %c0_37 = arith.constant 0 : index
    %27 = vector.load %arg4[%c0_35, %c0_36, %c0_37] : memref<5x256x128xbf16, #tpu.memory_space<vmem>>, vector<1x256x128xbf16>
    %28 = vector.shape_cast %27 : vector<1x256x128xbf16> to vector<256x128xbf16>
    %cst_38 = arith.constant dense<0.000000e+00> : vector<64x128xf32>
    %29 = tpu.matmul %26, %28, %cst_38 {dimension_numbers = #tpu.dot_dimension_numbers<[1], [0], [0], [1], [0, 0, 1, 1], [], []>} : vector<64x256xbf16>, vector<256x128xbf16>, vector<64x128xf32> -> vector<64x128xf32>
    %c0_39 = arith.constant 0 : index
    %c0_40 = arith.constant 0 : index
    %30 = vector.load %arg10[%c0_39, %c0_40] : memref<64x128xf32, #tpu.memory_space<vmem>>, vector<64x128xf32>
    tpu.vector_store %arg10[%c0_39, %c0_40], %29 {strides = array<i32>} : memref<64x128xf32, #tpu.memory_space<vmem>>, vector<64x128xf32>,
    %c0_41 = arith.constant 0 : index
    %c0_42 = arith.constant 0 : index
    %31 = vector.load %arg10[%c0_41, %c0_42] : memref<64x128xf32, #tpu.memory_space<vmem>>, vector<64x128xf32>
    %c3_43 = arith.constant 3 : index
    %c0_44 = arith.constant 0 : index
    %c1_45 = arith.constant 1 : index
    %c0_46 = arith.constant 0 : index
    %32 = vector.load %arg9[%c3_43, %c0_44, %c1_45, %c0_46] : memref<4x10x10x128xbf16, #tpu.memory_space<vmem>>, vector<1x8x8x128xbf16>
    %33 = vector.shape_cast %32 : vector<1x8x8x128xbf16> to vector<8x8x128xbf16>
    %34 = vector.shape_cast %33 : vector<8x8x128xbf16> to vector<64x128xbf16>
    %c1_47 = arith.constant 1 : index
    %c1_48 = arith.constant 1 : index
    %c0_49 = arith.constant 0 : index
    %c0_50 = arith.constant 0 : index
    %35 = vector.load %arg9[%c1_47, %c1_48, %c0_49, %c0_50] : memref<4x10x10x128xbf16, #tpu.memory_space<vmem>>, vector<1x8x8x128xbf16>
    %36 = vector.shape_cast %35 : vector<1x8x8x128xbf16> to vector<8x8x128xbf16>
    %37 = vector.shape_cast %36 : vector<8x8x128xbf16> to vector<64x128xbf16>
    %38 = tpu.concatenate %34, %37 in 1 : vector<64x128xbf16>, vector<64x128xbf16> -> vector<64x256xbf16>
    %c1_51 = arith.constant 1 : index
    %c0_52 = arith.constant 0 : index
    %c0_53 = arith.constant 0 : index
    %39 = vector.load %arg4[%c1_51, %c0_52, %c0_53] : memref<5x256x128xbf16, #tpu.memory_space<vmem>>, vector<1x256x128xbf16>
    %40 = vector.shape_cast %39 : vector<1x256x128xbf16> to vector<256x128xbf16>
    %cst_54 = arith.constant dense<0.000000e+00> : vector<64x128xf32>
    %41 = tpu.matmul %38, %40, %cst_54 {dimension_numbers = #tpu.dot_dimension_numbers<[1], [0], [0], [1], [0, 0, 1, 1], [], []>} : vector<64x256xbf16>, vector<256x128xbf16>, vector<64x128xf32> -> vector<64x128xf32>
    %42 = arith.addf %31, %41 : vector<64x128xf32>
    %c0_55 = arith.constant 0 : index
    %c0_56 = arith.constant 0 : index
    %43 = vector.load %arg10[%c0_55, %c0_56] : memref<64x128xf32, #tpu.memory_space<vmem>>, vector<64x128xf32>
    tpu.vector_store %arg10[%c0_55, %c0_56], %42 {strides = array<i32>} : memref<64x128xf32, #tpu.memory_space<vmem>>, vector<64x128xf32>,
    %c0_57 = arith.constant 0 : index
    %c0_58 = arith.constant 0 : index
    %44 = vector.load %arg10[%c0_57, %c0_58] : memref<64x128xf32, #tpu.memory_space<vmem>>, vector<64x128xf32>
    %c0_59 = arith.constant 0 : index
    %c1_60 = arith.constant 1 : index
    %c1_61 = arith.constant 1 : index
    %c0_62 = arith.constant 0 : index
    %45 = vector.load %arg9[%c0_59, %c1_60, %c1_61, %c0_62] : memref<4x10x10x128xbf16, #tpu.memory_space<vmem>>, vector<1x8x8x128xbf16>
    %46 = vector.shape_cast %45 : vector<1x8x8x128xbf16> to vector<8x8x128xbf16>
    %47 = vector.shape_cast %46 : vector<8x8x128xbf16> to vector<64x128xbf16>
    %c1_63 = arith.constant 1 : index
    %c1_64 = arith.constant 1 : index
    %c1_65 = arith.constant 1 : index
    %c0_66 = arith.constant 0 : index
    %48 = vector.load %arg9[%c1_63, %c1_64, %c1_65, %c0_66] : memref<4x10x10x128xbf16, #tpu.memory_space<vmem>>, vector<1x8x8x128xbf16>
    %49 = vector.shape_cast %48 : vector<1x8x8x128xbf16> to vector<8x8x128xbf16>
    %50 = vector.shape_cast %49 : vector<8x8x128xbf16> to vector<64x128xbf16>
    %51 = tpu.concatenate %47, %50 in 1 : vector<64x128xbf16>, vector<64x128xbf16> -> vector<64x256xbf16>
    %c2_67 = arith.constant 2 : index
    %c0_68 = arith.constant 0 : index
    %c0_69 = arith.constant 0 : index
    %52 = vector.load %arg4[%c2_67, %c0_68, %c0_69] : memref<5x256x128xbf16, #tpu.memory_space<vmem>>, vector<1x256x128xbf16>
    %53 = vector.shape_cast %52 : vector<1x256x128xbf16> to vector<256x128xbf16>
    %cst_70 = arith.constant dense<0.000000e+00> : vector<64x128xf32>
    %54 = tpu.matmul %51, %53, %cst_70 {dimension_numbers = #tpu.dot_dimension_numbers<[1], [0], [0], [1], [0, 0, 1, 1], [], []>} : vector<64x256xbf16>, vector<256x128xbf16>, vector<64x128xf32> -> vector<64x128xf32>
    %55 = arith.addf %44, %54 : vector<64x128xf32>
    %c0_71 = arith.constant 0 : index
    %c0_72 = arith.constant 0 : index
    %56 = vector.load %arg10[%c0_71, %c0_72] : memref<64x128xf32, #tpu.memory_space<vmem>>, vector<64x128xf32>
    tpu.vector_store %arg10[%c0_71, %c0_72], %55 {strides = array<i32>} : memref<64x128xf32, #tpu.memory_space<vmem>>, vector<64x128xf32>,
    %c0_73 = arith.constant 0 : index
    %c0_74 = arith.constant 0 : index
    %57 = vector.load %arg10[%c0_73, %c0_74] : memref<64x128xf32, #tpu.memory_space<vmem>>, vector<64x128xf32>
    %c3_75 = arith.constant 3 : index
    %c1_76 = arith.constant 1 : index
    %c0_77 = arith.constant 0 : index
    %c0_78 = arith.constant 0 : index
    %58 = vector.load %arg9[%c3_75, %c1_76, %c0_77, %c0_78] : memref<4x10x10x128xbf16, #tpu.memory_space<vmem>>, vector<1x8x8x128xbf16>
    %59 = vector.shape_cast %58 : vector<1x8x8x128xbf16> to vector<8x8x128xbf16>
    %60 = vector.shape_cast %59 : vector<8x8x128xbf16> to vector<64x128xbf16>
    %c2_79 = arith.constant 2 : index
    %c1_80 = arith.constant 1 : index
    %c1_81 = arith.constant 1 : index
    %c0_82 = arith.constant 0 : index
    %61 = vector.load %arg9[%c2_79, %c1_80, %c1_81, %c0_82] : memref<4x10x10x128xbf16, #tpu.memory_space<vmem>>, vector<1x8x8x128xbf16>
    %62 = vector.shape_cast %61 : vector<1x8x8x128xbf16> to vector<8x8x128xbf16>
    %63 = vector.shape_cast %62 : vector<8x8x128xbf16> to vector<64x128xbf16>
    %64 = tpu.concatenate %60, %63 in 1 : vector<64x128xbf16>, vector<64x128xbf16> -> vector<64x256xbf16>
    %c3_83 = arith.constant 3 : index
    %c0_84 = arith.constant 0 : index
    %c0_85 = arith.constant 0 : index
    %65 = vector.load %arg4[%c3_83, %c0_84, %c0_85] : memref<5x256x128xbf16, #tpu.memory_space<vmem>>, vector<1x256x128xbf16>
    %66 = vector.shape_cast %65 : vector<1x256x128xbf16> to vector<256x128xbf16>
    %cst_86 = arith.constant dense<0.000000e+00> : vector<64x128xf32>
    %67 = tpu.matmul %64, %66, %cst_86 {dimension_numbers = #tpu.dot_dimension_numbers<[1], [0], [0], [1], [0, 0, 1, 1], [], []>} : vector<64x256xbf16>, vector<256x128xbf16>, vector<64x128xf32> -> vector<64x128xf32>
    %68 = arith.addf %57, %67 : vector<64x128xf32>
    %c0_87 = arith.constant 0 : index
    %c0_88 = arith.constant 0 : index
    %69 = vector.load %arg10[%c0_87, %c0_88] : memref<64x128xf32, #tpu.memory_space<vmem>>, vector<64x128xf32>
    tpu.vector_store %arg10[%c0_87, %c0_88], %68 {strides = array<i32>} : memref<64x128xf32, #tpu.memory_space<vmem>>, vector<64x128xf32>,
    %c0_89 = arith.constant 0 : index
    %c0_90 = arith.constant 0 : index
    %70 = vector.load %arg10[%c0_89, %c0_90] : memref<64x128xf32, #tpu.memory_space<vmem>>, vector<64x128xf32>
    %c3_91 = arith.constant 3 : index
    %c1_92 = arith.constant 1 : index
    %c1_93 = arith.constant 1 : index
    %c0_94 = arith.constant 0 : index
    %71 = vector.load %arg9[%c3_91, %c1_92, %c1_93, %c0_94] : memref<4x10x10x128xbf16, #tpu.memory_space<vmem>>, vector<1x8x8x128xbf16>
    %72 = vector.shape_cast %71 : vector<1x8x8x128xbf16> to vector<8x8x128xbf16>
    %73 = vector.shape_cast %72 : vector<8x8x128xbf16> to vector<64x128xbf16>
    %c4 = arith.constant 4 : index
    %c0_95 = arith.constant 0 : index
    %c0_96 = arith.constant 0 : index
    %74 = vector.load %arg4[%c4, %c0_95, %c0_96] : memref<5x256x128xbf16, #tpu.memory_space<vmem>>, vector<1x128x128xbf16>
    %75 = vector.shape_cast %74 : vector<1x128x128xbf16> to vector<128x128xbf16>
    %cst_97 = arith.constant dense<0.000000e+00> : vector<64x128xf32>
    %76 = tpu.matmul %73, %75, %cst_97 {dimension_numbers = #tpu.dot_dimension_numbers<[1], [0], [0], [1], [0, 0, 1, 1], [], []>} : vector<64x128xbf16>, vector<128x128xbf16>, vector<64x128xf32> -> vector<64x128xf32>
    %77 = arith.addf %70, %76 : vector<64x128xf32>
    %c0_98 = arith.constant 0 : index
    %c0_99 = arith.constant 0 : index
    %78 = vector.load %arg10[%c0_98, %c0_99] : memref<64x128xf32, #tpu.memory_space<vmem>>, vector<64x128xf32>
    tpu.vector_store %arg10[%c0_98, %c0_99], %77 {strides = array<i32>} : memref<64x128xf32, #tpu.memory_space<vmem>>, vector<64x128xf32>,
    %c0_100 = arith.constant 0 : index
    %c0_101 = arith.constant 0 : index
    %79 = vector.load %arg10[%c0_100, %c0_101] : memref<64x128xf32, #tpu.memory_space<vmem>>, vector<64x128xf32>
    %c0_102 = arith.constant 0 : index
    %c0_103 = arith.constant 0 : index
    %80 = vector.load %arg5[%c0_102, %c0_103] : memref<1x128xf32, #tpu.memory_space<vmem>>, vector<1x128xf32>
    %81 = vector.broadcast %80 : vector<1x128xf32> to vector<64x128xf32>
    %82 = arith.addf %79, %81 : vector<64x128xf32>
    %cst_104 = arith.constant 0.000000e+00 : f32
    %83 = vector.broadcast %cst_104 : f32 to vector<64x128xf32>
    %84 = arith.maximumf %82, %83 : vector<64x128xf32>
    %85 = arith.truncf %84 : vector<64x128xf32> to vector<64x128xbf16>
    %86 = vector.extract_strided_slice %1 {offsets = [0, 0], sizes = [64, 128], strides = [1, 1]} : vector<256x128xbf16> to vector<64x128xbf16>
    %87 = tpu.concatenate %85, %86 in 1 : vector<64x128xbf16>, vector<64x128xbf16> -> vector<64x256xbf16>
    %c0_105 = arith.constant 0 : index
    %c0_106 = arith.constant 0 : index
    %88 = vector.load %arg6[%c0_105, %c0_106] : memref<256x128xbf16, #tpu.memory_space<vmem>>, vector<256x128xbf16>
    %cst_107 = arith.constant dense<0.000000e+00> : vector<64x128xf32>
    %89 = tpu.matmul %87, %88, %cst_107 {dimension_numbers = #tpu.dot_dimension_numbers<[1], [0], [0], [1], [0, 0, 1, 1], [], []>} : vector<64x256xbf16>, vector<256x128xbf16>, vector<64x128xf32> -> vector<64x128xf32>
    %c0_108 = arith.constant 0 : index
    %c0_109 = arith.constant 0 : index
    %90 = vector.load %arg7[%c0_108, %c0_109] : memref<1x128xf32, #tpu.memory_space<vmem>>, vector<1x128xf32>
    %91 = vector.broadcast %90 : vector<1x128xf32> to vector<64x128xf32>
    %92 = arith.addf %89, %91 : vector<64x128xf32>
    %cst_110 = arith.constant 0.000000e+00 : f32
    %93 = vector.broadcast %cst_110 : f32 to vector<64x128xf32>
    %94 = arith.maximumf %92, %93 : vector<64x128xf32>
    %95 = vector.shape_cast %94 : vector<64x128xf32> to vector<1x64x128xf32>
    %c0_111 = arith.constant 0 : index
    %c0_112 = arith.constant 0 : index
    %c0_113 = arith.constant 0 : index
    %96 = vector.load %arg8[%c0_111, %c0_112, %c0_113] : memref<1x64x128xf32, #tpu.memory_space<vmem>>, vector<1x64x128xf32>
    tpu.vector_store %arg8[%c0_111, %c0_112, %c0_113], %95 {strides = array<i32>} : memref<1x64x128xf32, #tpu.memory_space<vmem>>, vector<1x64x128xf32>,
    return
  }
  func.func @transform_0(%arg0: i32) -> (i32, i32, i32) {
    %c0_i32 = arith.constant 0 : i32
    %c0_i32_0 = arith.constant 0 : i32
    %c0_i32_1 = arith.constant 0 : i32
    return %arg0, %c0_i32, %c0_i32_0 : i32, i32, i32
  }
  func.func @transform_1(%arg0: i32) -> (i32, i32) {
    %c0_i32 = arith.constant 0 : i32
    %c0_i32_0 = arith.constant 0 : i32
    %c0_i32_1 = arith.constant 0 : i32
    return %c0_i32, %c0_i32_0 : i32, i32
  }
  func.func @transform_2(%arg0: i32) -> (i32, i32) {
    %c0_i32 = arith.constant 0 : i32
    %c0_i32_0 = arith.constant 0 : i32
    %c0_i32_1 = arith.constant 0 : i32
    return %c0_i32, %c0_i32_0 : i32, i32
  }
  func.func @transform_3(%arg0: i32) -> (i32, i32, i32) {
    %c0_i32 = arith.constant 0 : i32
    %c0_i32_0 = arith.constant 0 : i32
    %c0_i32_1 = arith.constant 0 : i32
    %c0_i32_2 = arith.constant 0 : i32
    return %c0_i32, %c0_i32_0, %c0_i32_1 : i32, i32, i32
  }
  func.func @transform_4(%arg0: i32) -> (i32, i32) {
    %c0_i32 = arith.constant 0 : i32
    %c0_i32_0 = arith.constant 0 : i32
    %c0_i32_1 = arith.constant 0 : i32
    return %c0_i32, %c0_i32_0 : i32, i32
  }
  func.func @transform_5(%arg0: i32) -> (i32, i32) {
    %c0_i32 = arith.constant 0 : i32
    %c0_i32_0 = arith.constant 0 : i32
    %c0_i32_1 = arith.constant 0 : i32
    return %c0_i32, %c0_i32_0 : i32, i32
  }
  func.func @transform_6(%arg0: i32) -> (i32, i32) {
    %c0_i32 = arith.constant 0 : i32
    %c0_i32_0 = arith.constant 0 : i32
    %c0_i32_1 = arith.constant 0 : i32
    return %c0_i32, %c0_i32_0 : i32, i32
  }
  func.func @transform_7(%arg0: i32) -> (i32, i32, i32) {
    %c0_i32 = arith.constant 0 : i32
    %c0_i32_0 = arith.constant 0 : i32
    %c0_i32_1 = arith.constant 0 : i32
    return %arg0, %c0_i32, %c0_i32_0 : i32, i32, i32
  }
}

</mosaic_0001>

<llo_original>
// kernel: tpu_custom_call.1
$region0: #{tpu_custom_call.1}
  #allocation0 [shape = 'u32[]', space=smem, size = 0x4, offset = 0x4, fixed_abs, tag = 'smem constant byte address 0x4 - core index']
  #allocation1 [shape = 'u32[144,128]{1,0:T(1,128)}', space=vmem, size = 0x12000, scoped, tag = 'internal scratch']
  #allocation2 [shape = 'bf16[4,10,10,128]{3,2,1,0:T(8,128)(2,1)}', space=vmem, size = 0x28000, scoped, tag = 'scratch operand']
  #allocation3 [shape = 'f32[64,128]{1,0:T(8,128)}', space=vmem, size = 0x8000, scoped, tag = 'scratch operand']
  %s0 = inlined_call_operand.hbm [shape: bf16[2,256,128], index: 0, kind: input, shape index: {}]
  %s1 = inlined_call_operand.hbm [shape: bf16[128,128], index: 1, kind: input, shape index: {}]
  %s2 = inlined_call_operand.vmem [shape: f32[1,128], index: 2, kind: input, shape index: {}]
  %s3 = inlined_call_operand.hbm [shape: bf16[5,256,128], index: 3, kind: input, shape index: {}]
  %s4 = inlined_call_operand.vmem [shape: f32[1,128], index: 4, kind: input, shape index: {}]
  %s5 = inlined_call_operand.hbm [shape: bf16[256,128], index: 5, kind: input, shape index: {}]
  %s6 = inlined_call_operand.vmem [shape: f32[1,128], index: 6, kind: input, shape index: {}]
  %s7 = inlined_call_operand.hbm [shape: f32[2,64,128], index: 7, kind: output, shape index: {}]
  %s8 = sld [smem:[#allocation0]]
  $region77: #{tpu_custom_call.1} parent=0
    _
  %s10 = ssub.s32 1, %s8
  %s11 = scalar_select 0, %s10, %s8
  $region1: #{tpu_custom_call.1} parent=0
    #allocation4 [shape = 'u8[131072]{0}', space=vmem, size = 0x20000, scoped, tag = 'input window, operand 0']
    #allocation5 [shape = 's32[2]{0}', space=sflag, size = 0x8, scoped, tag = 'scoped memory for tpu_custom_call.1']
    #allocation6 [shape = 's32[2]{0}', space=sflag, size = 0x8, scoped, tag = 'scoped memory for tpu_custom_call.1']
    #allocation7 [shape = 'u8[32768]{0}', space=vmem, size = 0x8000, scoped, tag = 'input window, operand 1, single buffered']
    #allocation8 [shape = 's32[1]{0}', space=sflag, size = 0x4, scoped, tag = 'scoped memory for tpu_custom_call.1']
    #allocation9 [shape = 'u8[327680]{0}', space=vmem, size = 0x50000, scoped, tag = 'input window, operand 3, single buffered']
    #allocation10 [shape = 'u8[65536]{0}', space=vmem, size = 0x10000, scoped, tag = 'input window, operand 5, single buffered']
    #allocation11 [shape = 's32[1]{0}', space=sflag, size = 0x4, scoped, tag = 'scoped memory for tpu_custom_call.1']
    #allocation12 [shape = 'u8[65536]{0}', space=vmem, size = 0x10000, scoped, tag = 'output window, operand 0']
    %12 = vsyncpa [#allocation5], 0
    %s13 = scalar_lea.sflag [#allocation5], 1
    %14 = vsyncpa %s13, 0
    %15 = vsyncpa [#allocation8], 0
    %16 = vsyncpa [#allocation11], 0
    %17 = vsyncpa [#allocation6], 0
    %s18 = scalar_lea.sflag [#allocation6], 1
    %19 = vsyncpa %s18, 0
    loop: start=0, step=1, limit=4
    $region2: #{tpu_custom_call.1} parent=1 // loop_pre_header
      _
    $region3: #{tpu_custom_call.1} parent=1 // loop_header
      %s21 = sphi 0, %s25
      %p22 = scmp.ge.s32.totalorder %s21, 4
      %s31 = sphi 0, %s33
      %s34 = sphi 0, %s31
      %s35 = sphi 0, %s34
      %s51 = sphi 0, %s35
      %s55 = sphi 0, %s55
      %s57 = sphi 0, %s55
      %s58 = sphi 0, %s57
      %s72 = sphi 0, %s58
      %s76 = sphi 0, %s76
      %s78 = sphi 0, %s76
      %s79 = sphi 0, %s78
      %s93 = sphi 0, %s79
      %s97 = sphi 0, %s97
      %s99 = sphi 0, %s97
      %s100 = sphi 0, %s99
      %s114 = sphi 0, %s100
      %s118 = sphi 0, %s118
      %s120 = sphi 0, %s118
      %s121 = sphi 0, %s120
      %s135 = sphi 0, %s121
      %s139 = sphi 0, %s139
      %s141 = sphi 0, %s139
      %s142 = sphi 0, %s141
      %s156 = sphi 0, %s142
      %s160 = sphi 0, %s160
      %s162 = sphi 0, %s160
      %s163 = sphi 0, %s162
      %s177 = sphi 0, %s163
      %s183 = sphi 0, %s185
      %s186 = sphi 0, %s183
      %s187 = sphi 0, %s186
      %s203 = sphi 0, %s187
    $region4: #{tpu_custom_call.1} parent=1 // loop_header_branch
      %24 = sbr.rel (%p22) target = $region8
    $region5: #{tpu_custom_call.1} parent=1 // loop_body
      %s26 = ssub.s32 %s21, 1
      %s27 = ssub.s32 %s21, 2
      %s28 = sadd.s32 %s21, 1
      %s29 = ssub.s32 %s21, %s28
      %p30 = scmp.eq.s32.totalorder %s29, 0
      %s32 = sadd.s32 %s31, 1
      %s33 = scalar_select %p30, %s31, %s32
      %p36 = pneg %p30
      %p37 = scmp.eq.s32.totalorder %s21, 1
      %p38 = por %p36, %p37
      %p39 = scmp.ne.s32.totalorder %s31, %s34
      %p40 = scmp.eq.s32.totalorder %s21, 0
      %p41 = por %p39, %p40
      %p42 = scmp.ne.s32.totalorder %s31, %s34
      %p43 = scmp.eq.s32.totalorder %s26, 1
      %p44 = por %p42, %p43
      %p45 = scmp.ne.s32.totalorder %s34, %s35
      %p46 = scmp.eq.s32.totalorder %s26, 0
      %p47 = por %p45, %p46
      %p48 = scmp.ne.s32.totalorder %s34, %s35
      %p49 = scmp.eq.s32.totalorder %s27, 1
      %p50 = por %p48, %p49
      %p52 = scmp.ne.s32.totalorder %s35, %s51
      %p53 = scmp.eq.s32.totalorder %s27, 0
      %p54 = por %p52, %p53
      %s56 = sadd.s32 %s55, 1
      %p59 = scmp.eq.s32.totalorder %s21, 1
      %p60 = scmp.ne.s32.totalorder %s55, %s57
      %p61 = scmp.eq.s32.totalorder %s21, 0
      %p62 = por %p60, %p61
      %p63 = scmp.ne.s32.totalorder %s55, %s57
      %p64 = scmp.eq.s32.totalorder %s26, 1
      %p65 = por %p63, %p64
      %p66 = scmp.ne.s32.totalorder %s57, %s58
      %p67 = scmp.eq.s32.totalorder %s26, 0
      %p68 = por %p66, %p67
      %p69 = scmp.ne.s32.totalorder %s57, %s58
      %p70 = scmp.eq.s32.totalorder %s27, 1
      %p71 = por %p69, %p70
      %p73 = scmp.ne.s32.totalorder %s58, %s72
      %p74 = scmp.eq.s32.totalorder %s27, 0
      %p75 = por %p73, %p74
      %s77 = sadd.s32 %s76, 1
      %p80 = scmp.eq.s32.totalorder %s21, 1
      %p81 = scmp.ne.s32.totalorder %s76, %s78
      %p82 = scmp.eq.s32.totalorder %s21, 0
      %p83 = por %p81, %p82
      %p84 = scmp.ne.s32.totalorder %s76, %s78
      %p85 = scmp.eq.s32.totalorder %s26, 1
      %p86 = por %p84, %p85
      %p87 = scmp.ne.s32.totalorder %s78, %s79
      %p88 = scmp.eq.s32.totalorder %s26, 0
      %p89 = por %p87, %p88
      %p90 = scmp.ne.s32.totalorder %s78, %s79
      %p91 = scmp.eq.s32.totalorder %s27, 1
      %p92 = por %p90, %p91
      %p94 = scmp.ne.s32.totalorder %s79, %s93
      %p95 = scmp.eq.s32.totalorder %s27, 0
      %p96 = por %p94, %p95
      %s98 = sadd.s32 %s97, 1
      %p101 = scmp.eq.s32.totalorder %s21, 1
      %p102 = scmp.ne.s32.totalorder %s97, %s99
      %p103 = scmp.eq.s32.totalorder %s21, 0
      %p104 = por %p102, %p103
      %p105 = scmp.ne.s32.totalorder %s97, %s99
      %p106 = scmp.eq.s32.totalorder %s26, 1
      %p107 = por %p105, %p106
      %p108 = scmp.ne.s32.totalorder %s99, %s100
      %p109 = scmp.eq.s32.totalorder %s26, 0
      %p110 = por %p108, %p109
      %p111 = scmp.ne.s32.totalorder %s99, %s100
      %p112 = scmp.eq.s32.totalorder %s27, 1
      %p113 = por %p111, %p112
      %p115 = scmp.ne.s32.totalorder %s100, %s114
      %p116 = scmp.eq.s32.totalorder %s27, 0
      %p117 = por %p115, %p116
      %s119 = sadd.s32 %s118, 1
      %p122 = scmp.eq.s32.totalorder %s21, 1
      %p123 = scmp.ne.s32.totalorder %s118, %s120
      %p124 = scmp.eq.s32.totalorder %s21, 0
      %p125 = por %p123, %p124
      %p126 = scmp.ne.s32.totalorder %s118, %s120
      %p127 = scmp.eq.s32.totalorder %s26, 1
      %p128 = por %p126, %p127
      %p129 = scmp.ne.s32.totalorder %s120, %s121
      %p130 = scmp.eq.s32.totalorder %s26, 0
      %p131 = por %p129, %p130
      %p132 = scmp.ne.s32.totalorder %s120, %s121
      %p133 = scmp.eq.s32.totalorder %s27, 1
      %p134 = por %p132, %p133
      %p136 = scmp.ne.s32.totalorder %s121, %s135
      %p137 = scmp.eq.s32.totalorder %s27, 0
      %p138 = por %p136, %p137
      %s140 = sadd.s32 %s139, 1
      %p143 = scmp.eq.s32.totalorder %s21, 1
      %p144 = scmp.ne.s32.totalorder %s139, %s141
      %p145 = scmp.eq.s32.totalorder %s21, 0
      %p146 = por %p144, %p145
      %p147 = scmp.ne.s32.totalorder %s139, %s141
      %p148 = scmp.eq.s32.totalorder %s26, 1
      %p149 = por %p147, %p148
      %p150 = scmp.ne.s32.totalorder %s141, %s142
      %p151 = scmp.eq.s32.totalorder %s26, 0
      %p152 = por %p150, %p151
      %p153 = scmp.ne.s32.totalorder %s141, %s142
      %p154 = scmp.eq.s32.totalorder %s27, 1
      %p155 = por %p153, %p154
      %p157 = scmp.ne.s32.totalorder %s142, %s156
      %p158 = scmp.eq.s32.totalorder %s27, 0
      %p159 = por %p157, %p158
      %s161 = sadd.s32 %s160, 1
      %p164 = scmp.eq.s32.totalorder %s21, 1
      %p165 = scmp.ne.s32.totalorder %s160, %s162
      %p166 = scmp.eq.s32.totalorder %s21, 0
      %p167 = por %p165, %p166
      %p168 = scmp.ne.s32.totalorder %s160, %s162
      %p169 = scmp.eq.s32.totalorder %s26, 1
      %p170 = por %p168, %p169
      %p171 = scmp.ne.s32.totalorder %s162, %s163
      %p172 = scmp.eq.s32.totalorder %s26, 0
      %p173 = por %p171, %p172
      %p174 = scmp.ne.s32.totalorder %s162, %s163
      %p175 = scmp.eq.s32.totalorder %s27, 1
      %p176 = por %p174, %p175
      %p178 = scmp.ne.s32.totalorder %s163, %s177
      %p179 = scmp.eq.s32.totalorder %s27, 0
      %p180 = por %p178, %p179
      %s181 = ssub.s32 %s21, %s28
      %p182 = scmp.eq.s32.totalorder %s181, 0
      %s184 = sadd.s32 %s183, 1
      %s185 = scalar_select %p182, %s183, %s184
      %p188 = pneg %p182
      %p189 = scmp.eq.s32.totalorder %s21, 1
      %p190 = por %p188, %p189
      %p191 = scmp.ne.s32.totalorder %s183, %s186
      %p192 = scmp.eq.s32.totalorder %s21, 0
      %p193 = por %p191, %p192
      %p194 = scmp.ne.s32.totalorder %s183, %s186
      %p195 = scmp.eq.s32.totalorder %s26, 1
      %p196 = por %p194, %p195
      %p197 = scmp.ne.s32.totalorder %s186, %s187
      %p198 = scmp.eq.s32.totalorder %s26, 0
      %p199 = por %p197, %p198
      %p200 = scmp.ne.s32.totalorder %s186, %s187
      %p201 = scmp.eq.s32.totalorder %s27, 1
      %p202 = por %p200, %p201
      %p204 = scmp.ne.s32.totalorder %s187, %s203
      %p205 = scmp.eq.s32.totalorder %s27, 0
      %p206 = por %p204, %p205
      %p207 = scmp.le.s32.totalorder 1, %s21
      %p208 = scmp.lt.s32.totalorder %s21, 3
      %p209 = pnand %p207, %p208
      %p210 = pneg %p209
      // Predicated region
      $region9: #{tpu_custom_call.1} parent=5 // pred_check
        _
      $region10: #{tpu_custom_call.1} parent=5 // pred_check_branch
        %212 = sbr.rel (%p209) target = $region12
      $region11: #{tpu_custom_call.1} parent=5 // pred_region
        %s213 = ssub.s32 %s21, 1
        // Predicated region
        $region13: #{tpu_custom_call.1} parent=11 // pred_check
          %p214 = pneg %p68
        $region14: #{tpu_custom_call.1} parent=11 // pred_check_branch
          %216 = sbr.rel (%p214) target = $region16
        $region15: #{tpu_custom_call.1} parent=11 // pred_region
          %s218 = ssub.s32 1024, 1024
          %219 = vsyncadd [#allocation8], %s218
          %s220 = sshll.u32 [#allocation7], 4
          %s221 = int_to_ptr.vmem [resolvable:$true] %s220
          %226 = dma.hbm_to_vmem [thread:$0]  %s1, 1024, %s221, [#allocation8], 64, 64, 4
        $region16: #{tpu_custom_call.1} parent=11 // pred_fallthru
          _
        // Predicated region
        $region17: #{tpu_custom_call.1} parent=11 // pred_check
          %p227 = pneg %p89
        $region18: #{tpu_custom_call.1} parent=11 // pred_check_branch
          %229 = sbr.rel (%p227) target = $region20
        $region19: #{tpu_custom_call.1} parent=11 // pred_region
          _
        $region20: #{tpu_custom_call.1} parent=11 // pred_fallthru
          _
        // Predicated region
        $region21: #{tpu_custom_call.1} parent=11 // pred_check
          %p230 = pneg %p110
        $region22: #{tpu_custom_call.1} parent=11 // pred_check_branch
          %232 = sbr.rel (%p230) target = $region24
        $region23: #{tpu_custom_call.1} parent=11 // pred_region
          %s234 = ssub.s32 10240, 10240
          %235 = vsyncadd [#allocation8], %s234
          %s236 = sshll.u32 [#allocation9], 4
          %s237 = int_to_ptr.vmem [resolvable:$true] %s236
          %242 = dma.hbm_to_vmem [thread:$0]  %s3, 10240, %s237, [#allocation8], 64, 64, 4
        $region24: #{tpu_custom_call.1} parent=11 // pred_fallthru
          _
        // Predicated region
        $region25: #{tpu_custom_call.1} parent=11 // pred_check
          %p243 = pneg %p131
        $region26: #{tpu_custom_call.1} parent=11 // pred_check_branch
          %245 = sbr.rel (%p243) target = $region28
        $region27: #{tpu_custom_call.1} parent=11 // pred_region
          _
        $region28: #{tpu_custom_call.1} parent=11 // pred_fallthru
          _
        // Predicated region
        $region29: #{tpu_custom_call.1} parent=11 // pred_check
          %p246 = pneg %p152
        $region30: #{tpu_custom_call.1} parent=11 // pred_check_branch
          %248 = sbr.rel (%p246) target = $region32
        $region31: #{tpu_custom_call.1} parent=11 // pred_region
          %s250 = ssub.s32 2048, 2048
          %251 = vsyncadd [#allocation11], %s250
          %s252 = sshll.u32 [#allocation10], 4
          %s253 = int_to_ptr.vmem [resolvable:$true] %s252
          %258 = dma.hbm_to_vmem [thread:$0]  %s5, 2048, %s253, [#allocation11], 64, 64, 4
        $region32: #{tpu_custom_call.1} parent=11 // pred_fallthru
          _
        // Predicated region
        $region33: #{tpu_custom_call.1} parent=11 // pred_check
          %p259 = pneg %p173
        $region34: #{tpu_custom_call.1} parent=11 // pred_check_branch
          %261 = sbr.rel (%p259) target = $region36
        $region35: #{tpu_custom_call.1} parent=11 // pred_region
          _
        $region36: #{tpu_custom_call.1} parent=11 // pred_fallthru
          _
      $region12: #{tpu_custom_call.1} parent=5 // pred_fallthru
        _
      %p262 = scmp.lt.s32.totalorder %s21, 2
      // Predicated region
      $region37: #{tpu_custom_call.1} parent=5 // pred_check
        %p263 = pneg %p262
      $region38: #{tpu_custom_call.1} parent=5 // pred_check_branch
        %265 = sbr.rel (%p263) target = $region40
      $region39: #{tpu_custom_call.1} parent=5 // pred_region
        // Predicated region
        $region41: #{tpu_custom_call.1} parent=39 // pred_check
          %p266 = pneg %p41
        $region42: #{tpu_custom_call.1} parent=39 // pred_check_branch
          %268 = sbr.rel (%p266) target = $region44
        $region43: #{tpu_custom_call.1} parent=39 // pred_region
          %s269 = sand.u32 %s31, 1
          %s270 = scalar_lea.sflag [#allocation5], %s269
          %s271 = sand.u32 %s31, 1
          %s272 = smul.addr %s271, 128
          %s273 = scalar_lea.vmem [#allocation4], %s272
          %s275 = ssub.s32 2048, 2048
          %276 = vsyncadd %s270, %s275
          %s277 = smul.addr %s21, 32
          %s278 = smul.addr %s277, 64
          %s279 = scalar_lea.hbm %s0, %s278
          %s280 = sshll.u32 %s273, 4
          %s281 = int_to_ptr.vmem [resolvable:$true] %s280
          %286 = dma.hbm_to_vmem [thread:$0]  %s279, 2048, %s281, %s270, 64, 64, 4
        $region44: #{tpu_custom_call.1} parent=39 // pred_fallthru
          _
      $region40: #{tpu_custom_call.1} parent=5 // pred_fallthru
        _
      %p287 = scmp.le.s32.totalorder 1, %s21
      %p288 = scmp.lt.s32.totalorder %s21, 3
      %p289 = pnand %p287, %p288
      %p290 = pneg %p289
      // Predicated region
      $region45: #{tpu_custom_call.1} parent=5 // pred_check
        _
      $region46: #{tpu_custom_call.1} parent=5 // pred_check_branch
        %292 = sbr.rel (%p289) target = $region48
      $region47: #{tpu_custom_call.1} parent=5 // pred_region
        %s293 = ssub.s32 %s21, 1
        %s294 = sand.u32 %s34, 1
        %s295 = scalar_lea.sflag [#allocation5], %s294
        %s296 = sand.u32 %s34, 1
        %s297 = smul.addr %s296, 128
        %s298 = scalar_lea.vmem [#allocation4], %s297
        // Predicated region
        $region49: #{tpu_custom_call.1} parent=47 // pred_check
          %p299 = pneg %p47
        $region50: #{tpu_custom_call.1} parent=47 // pred_check_branch
          %301 = sbr.rel (%p299) target = $region52
        $region51: #{tpu_custom_call.1} parent=47 // pred_region
          %302 = dma.done %s295, 2048
        $region52: #{tpu_custom_call.1} parent=47 // pred_fallthru
          _
        // Predicated region
        $region53: #{tpu_custom_call.1} parent=47 // pred_check
          %p303 = pneg %p68
        $region54: #{tpu_custom_call.1} parent=47 // pred_check_branch
          %305 = sbr.rel (%p303) target = $region56
        $region55: #{tpu_custom_call.1} parent=47 // pred_region
          %306 = dma.done [#allocation8], 1024
        $region56: #{tpu_custom_call.1} parent=47 // pred_fallthru
          _
        // Predicated region
        $region57: #{tpu_custom_call.1} parent=47 // pred_check
          %p307 = pneg %p110
        $region58: #{tpu_custom_call.1} parent=47 // pred_check_branch
          %309 = sbr.rel (%p307) target = $region60
        $region59: #{tpu_custom_call.1} parent=47 // pred_region
          %310 = dma.done [#allocation8], 10240
        $region60: #{tpu_custom_call.1} parent=47 // pred_fallthru
          _
        // Predicated region
        $region61: #{tpu_custom_call.1} parent=47 // pred_check
          %p311 = pneg %p152
        $region62: #{tpu_custom_call.1} parent=47 // pred_check_branch
          %313 = sbr.rel (%p311) target = $region64
        $region63: #{tpu_custom_call.1} parent=47 // pred_region
          %314 = dma.done [#allocation11], 2048
        $region64: #{tpu_custom_call.1} parent=47 // pred_fallthru
          _
        %s315 = sand.u32 %s34, 1
        %s316 = scalar_lea.sflag [#allocation5], %s315
        %s317 = sand.u32 %s34, 1
        %s318 = smul.addr %s317, 128
        %s319 = scalar_lea.vmem [#allocation4], %s318
        %p320 = pneg %p47
        %p321 = pneg %p44
        %p322 = pneg %p68
        %p323 = pneg %p65
        %p324 = pneg %p89
        %p325 = pneg %p86
        %p326 = pneg %p110
        %p327 = pneg %p107
        %p328 = pneg %p131
        %p329 = pneg %p128
        %p330 = pneg %p152
        %p331 = pneg %p149
        %p332 = pneg %p173
        %p333 = pneg %p170
        %p334 = pneg %p199
        %p335 = pneg %p196
        %s336 = sand.u32 %s186, 1
        %s337 = scalar_lea.sflag [#allocation6], %s336
        %s338 = sand.u32 %s186, 1
        %s339 = smul.addr %s338, 64
        %s340 = scalar_lea.vmem [#allocation12], %s339
        %v342 = vld [vmem:[%s298] sm:$0xf]
        %v343 = vld [vmem:[%s298 + $0x4] sm:$0xf]
        %v344 = vld [vmem:[%s298 + $0x8] sm:$0xf]
        %v345 = vld [vmem:[%s298 + $0xc] sm:$0xf]
        %v346 = vld [vmem:[%s298 + $0x10] sm:$0xf]
        %v347 = vld [vmem:[%s298 + $0x14] sm:$0xf]
        %v348 = vld [vmem:[%s298 + $0x18] sm:$0xf]
        %v349 = vld [vmem:[%s298 + $0x1c] sm:$0xf]
        %v350 = vld [vmem:[%s298 + $0x20] sm:$0xf]
        %v351 = vld [vmem:[%s298 + $0x24] sm:$0xf]
        %v352 = vld [vmem:[%s298 + $0x28] sm:$0xf]
        %v353 = vld [vmem:[%s298 + $0x2c] sm:$0xf]
        %v354 = vld [vmem:[%s298 + $0x30] sm:$0xf]
        %v355 = vld [vmem:[%s298 + $0x34] sm:$0xf]
        %v356 = vld [vmem:[%s298 + $0x38] sm:$0xf]
        %v357 = vld [vmem:[%s298 + $0x3c] sm:$0xf]
        %v358 = vld [vmem:[%s298 + $0x40] sm:$0xf]
        %v359 = vld [vmem:[%s298 + $0x44] sm:$0xf]
        %v360 = vld [vmem:[%s298 + $0x48] sm:$0xf]
        %v361 = vld [vmem:[%s298 + $0x4c] sm:$0xf]
        %v362 = vld [vmem:[%s298 + $0x50] sm:$0xf]
        %v363 = vld [vmem:[%s298 + $0x54] sm:$0xf]
        %v364 = vld [vmem:[%s298 + $0x58] sm:$0xf]
        %v365 = vld [vmem:[%s298 + $0x5c] sm:$0xf]
        %v366 = vld [vmem:[%s298 + $0x60] sm:$0xf]
        %v367 = vld [vmem:[%s298 + $0x64] sm:$0xf]
        %v368 = vld [vmem:[%s298 + $0x68] sm:$0xf]
        %v369 = vld [vmem:[%s298 + $0x6c] sm:$0xf]
        %v370 = vld [vmem:[%s298 + $0x70] sm:$0xf]
        %v371 = vld [vmem:[%s298 + $0x74] sm:$0xf]
        %v372 = vld [vmem:[%s298 + $0x78] sm:$0xf]
        %v373 = vld [vmem:[%s298 + $0x7c] sm:$0xf]
        %v374 = vld [vmem:[#allocation7] sm:$0xf]
        %v375 = vld [vmem:[#allocation7 + $0x4] sm:$0xf]
        %v376 = vld [vmem:[#allocation7 + $0x8] sm:$0xf]
        %v377 = vld [vmem:[#allocation7 + $0xc] sm:$0xf]
        %v378 = vld [vmem:[#allocation7 + $0x10] sm:$0xf]
        %v379 = vld [vmem:[#allocation7 + $0x14] sm:$0xf]
        %v380 = vld [vmem:[#allocation7 + $0x18] sm:$0xf]
        %v381 = vld [vmem:[#allocation7 + $0x1c] sm:$0xf]
        %v382 = vld [vmem:[#allocation7 + $0x20] sm:$0xf]
        %v383 = vld [vmem:[#allocation7 + $0x24] sm:$0xf]
        %v384 = vld [vmem:[#allocation7 + $0x28] sm:$0xf]
        %v385 = vld [vmem:[#allocation7 + $0x2c] sm:$0xf]
        %v386 = vld [vmem:[#allocation7 + $0x30] sm:$0xf]
        %v387 = vld [vmem:[#allocation7 + $0x34] sm:$0xf]
        %v388 = vld [vmem:[#allocation7 + $0x38] sm:$0xf]
        %v389 = vld [vmem:[#allocation7 + $0x3c] sm:$0xf]
        %v390 = vld [vmem:[%s2] sm:$0x1]
        %v392 = vlaneseq
        %v393 = vshrl.u32 %v392, 7
        %v394 = vsub.s32 0, %v393
        %v395 = vrot.slane %v390, %v394
        %v429 = vunpack.c.l.b16 %v342
        %v430 = vunpack.c.l.b16 %v343
        %v431 = vunpack.c.l.b16 %v344
        %v432 = vunpack.c.l.b16 %v345
        %v433 = vunpack.c.l.b16 %v346
        %v434 = vunpack.c.l.b16 %v347
        %v435 = vunpack.c.l.b16 %v348
        %v436 = vunpack.c.l.b16 %v349
        %v437 = vunpack.c.l.b16 %v350
        %v438 = vunpack.c.l.b16 %v351
        %v439 = vunpack.c.l.b16 %v352
        %v440 = vunpack.c.l.b16 %v353
        %v441 = vunpack.c.l.b16 %v354
        %v442 = vunpack.c.l.b16 %v355
        %v443 = vunpack.c.l.b16 %v356
        %v444 = vunpack.c.l.b16 %v357
        %v445 = vunpack.c.l.b16 %v358
        %v446 = vunpack.c.l.b16 %v359
        %v447 = vunpack.c.l.b16 %v360
        %v448 = vunpack.c.l.b16 %v361
        %v449 = vunpack.c.l.b16 %v362
        %v450 = vunpack.c.l.b16 %v363
        %v451 = vunpack.c.l.b16 %v364
        %v452 = vunpack.c.l.b16 %v365
        %v453 = vunpack.c.l.b16 %v366
        %v454 = vunpack.c.l.b16 %v367
        %v455 = vunpack.c.l.b16 %v368
        %v456 = vunpack.c.l.b16 %v369
        %v457 = vunpack.c.l.b16 %v370
        %v458 = vunpack.c.l.b16 %v371
        %v459 = vunpack.c.l.b16 %v372
        %v460 = vunpack.c.l.b16 %v373
        %v461 = vpack.c.b16 %v430, %v429
        %v462 = vpack.c.b16 %v432, %v431
        %v463 = vpack.c.b16 %v434, %v433
        %v464 = vpack.c.b16 %v436, %v435
        %v465 = vpack.c.b16 %v438, %v437
        %v466 = vpack.c.b16 %v440, %v439
        %v467 = vpack.c.b16 %v442, %v441
        %v468 = vpack.c.b16 %v444, %v443
        %v469 = vpack.c.b16 %v446, %v445
        %v470 = vpack.c.b16 %v448, %v447
        %v471 = vpack.c.b16 %v450, %v449
        %v472 = vpack.c.b16 %v452, %v451
        %v473 = vpack.c.b16 %v454, %v453
        %v474 = vpack.c.b16 %v456, %v455
        %v475 = vpack.c.b16 %v458, %v457
        %v476 = vpack.c.b16 %v460, %v459
        %v509 = vunpack.c.l.b16 %v374
        %v510 = vunpack.c.l.b16 %v375
        %v511 = vunpack.c.l.b16 %v376
        %v512 = vunpack.c.l.b16 %v377
        %v513 = vunpack.c.l.b16 %v378
        %v514 = vunpack.c.l.b16 %v379
        %v515 = vunpack.c.l.b16 %v380
        %v516 = vunpack.c.l.b16 %v381
        %v517 = vunpack.c.l.b16 %v382
        %v518 = vunpack.c.l.b16 %v383
        %v519 = vunpack.c.l.b16 %v384
        %v520 = vunpack.c.l.b16 %v385
        %v521 = vunpack.c.l.b16 %v386
        %v522 = vunpack.c.l.b16 %v387
        %v523 = vunpack.c.l.b16 %v388
        %v524 = vunpack.c.l.b16 %v389
        %v525 = vpack.c.b16 %v510, %v509
        %v526 = vpack.c.b16 %v512, %v511
        %v527 = vpack.c.b16 %v514, %v513
        %v528 = vpack.c.b16 %v516, %v515
        %v529 = vpack.c.b16 %v518, %v517
        %v530 = vpack.c.b16 %v520, %v519
        %v531 = vpack.c.b16 %v522, %v521
        %v532 = vpack.c.b16 %v524, %v523
        %541 = vmatprep.subr.bf16.mxu0 0
        %542 = vmatpush1.bf16.msra.mxu0 %v525
        %543 = vmatprep.subr.bf16.mxu0 0
        %544 = vmatpush1.bf16.msra.mxu0 %v526
        %545 = vmatprep.subr.bf16.mxu0 0
        %546 = vmatpush1.bf16.msra.mxu0 %v527
        %547 = vmatprep.subr.bf16.mxu0 0
        %548 = vmatpush1.bf16.msra.mxu0 %v528
        %549 = vmatprep.subr.bf16.mxu0 0
        %550 = vmatpush1.bf16.msra.mxu0 %v529
        %551 = vmatprep.subr.bf16.mxu0 0
        %552 = vmatpush1.bf16.msra.mxu0 %v530
        %553 = vmatprep.subr.bf16.mxu0 0
        %554 = vmatpush1.bf16.msra.mxu0 %v531
        %555 = vmatprep.subr.bf16.mxu0 0
        %556 = vmatpush1.bf16.msra.mxu0 %v532
        %557 = vmatprep.subr.bf16.mxu0 0
        %558 = vmatpush1.bf16.msra.mxu0 0
        %559 = vmatprep.subr.bf16.mxu0 0
        %560 = vmatpush1.bf16.msra.mxu0 0
        %561 = vmatprep.subr.bf16.mxu0 0
        %562 = vmatpush1.bf16.msra.mxu0 0
        %563 = vmatprep.subr.bf16.mxu0 0
        %564 = vmatpush1.bf16.msra.mxu0 0
        %565 = vmatprep.subr.bf16.mxu0 0
        %566 = vmatpush1.bf16.msra.mxu0 0
        %567 = vmatprep.subr.bf16.mxu0 0
        %568 = vmatpush1.bf16.msra.mxu0 0
        %569 = vmatprep.subr.bf16.mxu0 0
        %570 = vmatpush1.bf16.msra.mxu0 0
        %571 = vmatprep.subr.bf16.mxu0 0
        %572 = vmatpush1.bf16.msra.mxu0 0
        %573 = vmatprep.mubr.bf16.mxu0 0
        %574 = vmatmul.mubr.bf16.gmra.mrb[0].mxu0 %v461
        %v575 = vpop.f32.mrb[0].mxu0
        %v576 = vadd.f32 %v395, %v575
        %v577 = vpop.f32.mrb[0].mxu0
        %v578 = vpop.f32.mrb[0].mxu0
        %v579 = vadd.f32 %v395, %v578
        %v580 = vpop.f32.mrb[0].mxu0
        %581 = vmatprep.mubr.bf16.mxu0 0
        %582 = vmatmul.mubr.bf16.gmra.mrb[0].mxu0 %v462
        %v583 = vpop.f32.mrb[0].mxu0
        %v584 = vadd.f32 %v395, %v583
        %v585 = vpop.f32.mrb[0].mxu0
        %v586 = vpop.f32.mrb[0].mxu0
        %v587 = vadd.f32 %v395, %v586
        %v588 = vpop.f32.mrb[0].mxu0
        %589 = vmatprep.mubr.bf16.mxu0 0
        %590 = vmatmul.mubr.bf16.gmra.mrb[0].mxu0 %v463
        %v591 = vpop.f32.mrb[0].mxu0
        %v592 = vadd.f32 %v395, %v591
        %v593 = vpop.f32.mrb[0].mxu0
        %v594 = vpop.f32.mrb[0].mxu0
        %v595 = vadd.f32 %v395, %v594
        %v596 = vpop.f32.mrb[0].mxu0
        %597 = vmatprep.mubr.bf16.mxu0 0
        %598 = vmatmul.mubr.bf16.gmra.mrb[0].mxu0 %v464
        %v599 = vpop.f32.mrb[0].mxu0
        %v600 = vadd.f32 %v395, %v599
        %v601 = vpop.f32.mrb[0].mxu0
        %v602 = vpop.f32.mrb[0].mxu0
        %v603 = vadd.f32 %v395, %v602
        %v604 = vpop.f32.mrb[0].mxu0
        %605 = vmatprep.mubr.bf16.mxu0 0
        %606 = vmatmul.mubr.bf16.gmra.mrb[0].mxu0 %v465
        %v607 = vpop.f32.mrb[0].mxu0
        %v608 = vadd.f32 %v395, %v607
        %v609 = vpop.f32.mrb[0].mxu0
        %v610 = vpop.f32.mrb[0].mxu0
        %v611 = vadd.f32 %v395, %v610
        %v612 = vpop.f32.mrb[0].mxu0
        %613 = vmatprep.mubr.bf16.mxu0 0
        %614 = vmatmul.mubr.bf16.gmra.mrb[0].mxu0 %v466
        %v615 = vpop.f32.mrb[0].mxu0
        %v616 = vadd.f32 %v395, %v615
        %v617 = vpop.f32.mrb[0].mxu0
        %v618 = vpop.f32.mrb[0].mxu0
        %v619 = vadd.f32 %v395, %v618
        %v620 = vpop.f32.mrb[0].mxu0
        %621 = vmatprep.mubr.bf16.mxu0 0
        %622 = vmatmul.mubr.bf16.gmra.mrb[0].mxu0 %v467
        %v623 = vpop.f32.mrb[0].mxu0
        %v624 = vadd.f32 %v395, %v623
        %v625 = vpop.f32.mrb[0].mxu0
        %v626 = vpop.f32.mrb[0].mxu0
        %v627 = vadd.f32 %v395, %v626
        %v628 = vpop.f32.mrb[0].mxu0
        %629 = vmatprep.mubr.bf16.mxu0 0
        %630 = vmatmul.mubr.bf16.gmra.mrb[0].mxu0 %v468
        %v631 = vpop.f32.mrb[0].mxu0
        %v632 = vadd.f32 %v395, %v631
        %v633 = vpop.f32.mrb[0].mxu0
        %v634 = vpop.f32.mrb[0].mxu0
        %v635 = vadd.f32 %v395, %v634
        %v636 = vpop.f32.mrb[0].mxu0
        %637 = vmatprep.mubr.bf16.mxu0 0
        %638 = vmatmul.mubr.bf16.gmra.mrb[0].mxu0 %v469
        %v639 = vpop.f32.mrb[0].mxu0
        %v640 = vadd.f32 %v395, %v639
        %v641 = vpop.f32.mrb[0].mxu0
        %v642 = vpop.f32.mrb[0].mxu0
        %v643 = vadd.f32 %v395, %v642
        %v644 = vpop.f32.mrb[0].mxu0
        %645 = vmatprep.mubr.bf16.mxu0 0
        %646 = vmatmul.mubr.bf16.gmra.mrb[0].mxu0 %v470
        %v647 = vpop.f32.mrb[0].mxu0
        %v648 = vadd.f32 %v395, %v647
        %v649 = vpop.f32.mrb[0].mxu0
        %v650 = vpop.f32.mrb[0].mxu0
        %v651 = vadd.f32 %v395, %v650
        %v652 = vpop.f32.mrb[0].mxu0
        %653 = vmatprep.mubr.bf16.mxu0 0
        %654 = vmatmul.mubr.bf16.gmra.mrb[0].mxu0 %v471
        %v655 = vpop.f32.mrb[0].mxu0
        %v656 = vadd.f32 %v395, %v655
        %v657 = vpop.f32.mrb[0].mxu0
        %v658 = vpop.f32.mrb[0].mxu0
        %v659 = vadd.f32 %v395, %v658
        %v660 = vpop.f32.mrb[0].mxu0
        %661 = vmatprep.mubr.bf16.mxu0 0
        %662 = vmatmul.mubr.bf16.gmra.mrb[0].mxu0 %v472
        %v663 = vpop.f32.mrb[0].mxu0
        %v664 = vadd.f32 %v395, %v663
        %v665 = vpop.f32.mrb[0].mxu0
        %v666 = vpop.f32.mrb[0].mxu0
        %v667 = vadd.f32 %v395, %v666
        %v668 = vpop.f32.mrb[0].mxu0
        %669 = vmatprep.mubr.bf16.mxu0 0
        %670 = vmatmul.mubr.bf16.gmra.mrb[0].mxu0 %v473
        %v671 = vpop.f32.mrb[0].mxu0
        %v672 = vadd.f32 %v395, %v671
        %v673 = vpop.f32.mrb[0].mxu0
        %v674 = vpop.f32.mrb[0].mxu0
        %v675 = vadd.f32 %v395, %v674
        %v676 = vpop.f32.mrb[0].mxu0
        %677 = vmatprep.mubr.bf16.mxu0 0
        %678 = vmatmul.mubr.bf16.gmra.mrb[0].mxu0 %v474
        %v679 = vpop.f32.mrb[0].mxu0
        %v680 = vadd.f32 %v395, %v679
        %v681 = vpop.f32.mrb[0].mxu0
        %v682 = vpop.f32.mrb[0].mxu0
        %v683 = vadd.f32 %v395, %v682
        %v684 = vpop.f32.mrb[0].mxu0
        %685 = vmatprep.mubr.bf16.mxu0 0
        %686 = vmatmul.mubr.bf16.gmra.mrb[0].mxu0 %v475
        %v687 = vpop.f32.mrb[0].mxu0
        %v688 = vadd.f32 %v395, %v687
        %v689 = vpop.f32.mrb[0].mxu0
        %v690 = vpop.f32.mrb[0].mxu0
        %v691 = vadd.f32 %v395, %v690
        %v692 = vpop.f32.mrb[0].mxu0
        %693 = vmatprep.mubr.bf16.mxu0 0
        %694 = vmatmul.mubr.bf16.gmra.mrb[0].mxu0 %v476
        %v695 = vpop.f32.mrb[0].mxu0
        %v696 = vadd.f32 %v395, %v695
        %v697 = vpop.f32.mrb[0].mxu0
        %v698 = vpop.f32.mrb[0].mxu0
        %v699 = vadd.f32 %v395, %v698
        %v700 = vpop.f32.mrb[0].mxu0
        %701 = vdwg.mxu0
        %v702 = vmax.f32 %v576, 0.0
        %v703 = vmax.f32 %v579, 0.0
        %v704 = vmax.f32 %v584, 0.0
        %v705 = vmax.f32 %v587, 0.0
        %v706 = vmax.f32 %v592, 0.0
        %v707 = vmax.f32 %v595, 0.0
        %v708 = vmax.f32 %v600, 0.0
        %v709 = vmax.f32 %v603, 0.0
        %v710 = vmax.f32 %v608, 0.0
        %v711 = vmax.f32 %v611, 0.0
        %v712 = vmax.f32 %v616, 0.0
        %v713 = vmax.f32 %v619, 0.0
        %v714 = vmax.f32 %v624, 0.0
        %v715 = vmax.f32 %v627, 0.0
        %v716 = vmax.f32 %v632, 0.0
        %v717 = vmax.f32 %v635, 0.0
        %v718 = vmax.f32 %v640, 0.0
        %v719 = vmax.f32 %v643, 0.0
        %v720 = vmax.f32 %v648, 0.0
        %v721 = vmax.f32 %v651, 0.0
        %v722 = vmax.f32 %v656, 0.0
        %v723 = vmax.f32 %v659, 0.0
        %v724 = vmax.f32 %v664, 0.0
        %v725 = vmax.f32 %v667, 0.0
        %v726 = vmax.f32 %v672, 0.0
        %v727 = vmax.f32 %v675, 0.0
        %v728 = vmax.f32 %v680, 0.0
        %v729 = vmax.f32 %v683, 0.0
        %v730 = vmax.f32 %v688, 0.0
        %v731 = vmax.f32 %v691, 0.0
        %v732 = vmax.f32 %v696, 0.0
        %v733 = vmax.f32 %v699, 0.0
        %v734 = vpack.c.bf16 %v703, %v702
        %v735 = vpack.c.bf16 %v705, %v704
        %v736 = vpack.c.bf16 %v707, %v706
        %v737 = vpack.c.bf16 %v709, %v708
        %v738 = vpack.c.bf16 %v711, %v710
        %v739 = vpack.c.bf16 %v713, %v712
        %v740 = vpack.c.bf16 %v715, %v714
        %v741 = vpack.c.bf16 %v717, %v716
        %v742 = vpack.c.bf16 %v719, %v718
        %v743 = vpack.c.bf16 %v721, %v720
        %v744 = vpack.c.bf16 %v723, %v722
        %v745 = vpack.c.bf16 %v725, %v724
        %v746 = vpack.c.bf16 %v727, %v726
        %v747 = vpack.c.bf16 %v729, %v728
        %v748 = vpack.c.bf16 %v731, %v730
        %v749 = vpack.c.bf16 %v733, %v732
        %750 = vst [vmem:[#allocation2] sm:$0xf] 0
        %751 = vst [vmem:[#allocation2 + $0x4] sm:$0x1] 0
        %752 = vst [vmem:[#allocation2 + $0x50] sm:$0xf] 0
        %753 = vst [vmem:[#allocation2 + $0x54] sm:$0x1] 0
        %754 = vst [vmem:[#allocation2 + $0xa0] sm:$0xf] 0
        %755 = vst [vmem:[#allocation2 + $0xa4] sm:$0x1] 0
        %756 = vst [vmem:[#allocation2 + $0xf0] sm:$0xf] 0
        %757 = vst [vmem:[#allocation2 + $0xf4] sm:$0x1] 0
        %s758 = scalar_lea.vmem [#allocation2], 72
        %759 = vst [vmem:[%s758] sm:$0xf] 0
        %760 = vst [vmem:[%s758 + $0x4] sm:$0x1] 0
        %761 = vst [vmem:[%s758 + $0x50] sm:$0xf] 0
        %762 = vst [vmem:[%s758 + $0x54] sm:$0x1] 0
        %763 = vst [vmem:[%s758 + $0xa0] sm:$0xf] 0
        %764 = vst [vmem:[%s758 + $0xa4] sm:$0x1] 0
        %765 = vst [vmem:[%s758 + $0xf0] sm:$0xf] 0
        %766 = vst [vmem:[%s758 + $0xf4] sm:$0x1] 0
        %s767 = scalar_lea.vmem [#allocation2], 8
        %vm768 = vcmask 1040384
        %vm769 = vsmask.f32 256
        %vm770 = vmand %vm768, %vm769
        %v771 = vld [vmem:[%s767] sm:$0x1]
        %v772 = vsel %vm770, 0, %v771
        %773 = vst [vmem:[%s767] sm:$0x1] %v772
        %v774 = vld [vmem:[%s767 + $0x8] sm:$0x1]
        %v775 = vsel %vm770, 0, %v774
        %776 = vst [vmem:[%s767 + $0x8] sm:$0x1] %v775
        %v777 = vld [vmem:[%s767 + $0x10] sm:$0x1]
        %v778 = vsel %vm770, 0, %v777
        %779 = vst [vmem:[%s767 + $0x10] sm:$0x1] %v778
        %v780 = vld [vmem:[%s767 + $0x18] sm:$0x1]
        %v781 = vsel %vm770, 0, %v780
        %782 = vst [vmem:[%s767 + $0x18] sm:$0x1] %v781
        %v783 = vld [vmem:[%s767 + $0x20] sm:$0x1]
        %v784 = vsel %vm770, 0, %v783
        %785 = vst [vmem:[%s767 + $0x20] sm:$0x1] %v784
        %v786 = vld [vmem:[%s767 + $0x28] sm:$0x1]
        %v787 = vsel %vm770, 0, %v786
        %788 = vst [vmem:[%s767 + $0x28] sm:$0x1] %v787
        %v789 = vld [vmem:[%s767 + $0x30] sm:$0x1]
        %v790 = vsel %vm770, 0, %v789
        %791 = vst [vmem:[%s767 + $0x30] sm:$0x1] %v790
        %v792 = vld [vmem:[%s767 + $0x38] sm:$0x1]
        %v793 = vsel %vm770, 0, %v792
        %794 = vst [vmem:[%s767 + $0x38] sm:$0x1] %v793
        %v795 = vld [vmem:[%s767 + $0x50] sm:$0x1]
        %v796 = vsel %vm770, 0, %v795
        %797 = vst [vmem:[%s767 + $0x50] sm:$0x1] %v796
        %v798 = vld [vmem:[%s767 + $0x58] sm:$0x1]
        %v799 = vsel %vm770, 0, %v798
        %800 = vst [vmem:[%s767 + $0x58] sm:$0x1] %v799
        %v801 = vld [vmem:[%s767 + $0x60] sm:$0x1]
        %v802 = vsel %vm770, 0, %v801
        %803 = vst [vmem:[%s767 + $0x60] sm:$0x1] %v802
        %v804 = vld [vmem:[%s767 + $0x68] sm:$0x1]
        %v805 = vsel %vm770, 0, %v804
        %806 = vst [vmem:[%s767 + $0x68] sm:$0x1] %v805
        %v807 = vld [vmem:[%s767 + $0x70] sm:$0x1]
        %v808 = vsel %vm770, 0, %v807
        %809 = vst [vmem:[%s767 + $0x70] sm:$0x1] %v808
        %v810 = vld [vmem:[%s767 + $0x78] sm:$0x1]
        %v811 = vsel %vm770, 0, %v810
        %812 = vst [vmem:[%s767 + $0x78] sm:$0x1] %v811
        %v813 = vld [vmem:[%s767 + $0x80] sm:$0x1]
        %v814 = vsel %vm770, 0, %v813
        %815 = vst [vmem:[%s767 + $0x80] sm:$0x1] %v814
        %v816 = vld [vmem:[%s767 + $0x88] sm:$0x1]
        %v817 = vsel %vm770, 0, %v816
        %818 = vst [vmem:[%s767 + $0x88] sm:$0x1] %v817
        %v819 = vld [vmem:[%s767 + $0xa0] sm:$0x1]
        %v820 = vsel %vm770, 0, %v819
        %821 = vst [vmem:[%s767 + $0xa0] sm:$0x1] %v820
        %v822 = vld [vmem:[%s767 + $0xa8] sm:$0x1]
        %v823 = vsel %vm770, 0, %v822
        %824 = vst [vmem:[%s767 + $0xa8] sm:$0x1] %v823
        %v825 = vld [vmem:[%s767 + $0xb0] sm:$0x1]
        %v826 = vsel %vm770, 0, %v825
        %827 = vst [vmem:[%s767 + $0xb0] sm:$0x1] %v826
        %v828 = vld [vmem:[%s767 + $0xb8] sm:$0x1]
        %v829 = vsel %vm770, 0, %v828
        %830 = vst [vmem:[%s767 + $0xb8] sm:$0x1] %v829
        %v831 = vld [vmem:[%s767 + $0xc0] sm:$0x1]
        %v832 = vsel %vm770, 0, %v831
        %833 = vst [vmem:[%s767 + $0xc0] sm:$0x1] %v832
        %v834 = vld [vmem:[%s767 + $0xc8] sm:$0x1]
        %v835 = vsel %vm770, 0, %v834
        %836 = vst [vmem:[%s767 + $0xc8] sm:$0x1] %v835
        %v837 = vld [vmem:[%s767 + $0xd0] sm:$0x1]
        %v838 = vsel %vm770, 0, %v837
        %839 = vst [vmem:[%s767 + $0xd0] sm:$0x1] %v838
        %v840 = vld [vmem:[%s767 + $0xd8] sm:$0x1]
        %v841 = vsel %vm770, 0, %v840
        %842 = vst [vmem:[%s767 + $0xd8] sm:$0x1] %v841
        %v843 = vld [vmem:[%s767 + $0xf0] sm:$0x1]
        %v844 = vsel %vm770, 0, %v843
        %845 = vst [vmem:[%s767 + $0xf0] sm:$0x1] %v844
        %v846 = vld [vmem:[%s767 + $0xf8] sm:$0x1]
        %v847 = vsel %vm770, 0, %v846
        %848 = vst [vmem:[%s767 + $0xf8] sm:$0x1] %v847
        %v849 = vld [vmem:[%s767 + $0x100] sm:$0x1]
        %v850 = vsel %vm770, 0, %v849
        %851 = vst [vmem:[%s767 + $0x100] sm:$0x1] %v850
        %v852 = vld [vmem:[%s767 + $0x108] sm:$0x1]
        %v853 = vsel %vm770, 0, %v852
        %854 = vst [vmem:[%s767 + $0x108] sm:$0x1] %v853
        %v855 = vld [vmem:[%s767 + $0x110] sm:$0x1]
        %v856 = vsel %vm770, 0, %v855
        %857 = vst [vmem:[%s767 + $0x110] sm:$0x1] %v856
        %v858 = vld [vmem:[%s767 + $0x118] sm:$0x1]
        %v859 = vsel %vm770, 0, %v858
        %860 = vst [vmem:[%s767 + $0x118] sm:$0x1] %v859
        %v861 = vld [vmem:[%s767 + $0x120] sm:$0x1]
        %v862 = vsel %vm770, 0, %v861
        %863 = vst [vmem:[%s767 + $0x120] sm:$0x1] %v862
        %v864 = vld [vmem:[%s767 + $0x128] sm:$0x1]
        %v865 = vsel %vm770, 0, %v864
        %866 = vst [vmem:[%s767 + $0x128] sm:$0x1] %v865
        %vm867 = vsmask.f32 7938
        %vm868 = vmand %vm768, %vm867
        %v869 = vld [vmem:[%s767 + $0x4] sm:$0x1]
        %v870 = vsel %vm868, 0, %v869
        %871 = vst [vmem:[%s767 + $0x4] sm:$0x1] %v870
        %v872 = vld [vmem:[%s767 + $0xc] sm:$0x1]
        %v873 = vsel %vm868, 0, %v872
        %874 = vst [vmem:[%s767 + $0xc] sm:$0x1] %v873
        %v875 = vld [vmem:[%s767 + $0x14] sm:$0x1]
        %v876 = vsel %vm868, 0, %v875
        %877 = vst [vmem:[%s767 + $0x14] sm:$0x1] %v876
        %v878 = vld [vmem:[%s767 + $0x1c] sm:$0x1]
        %v879 = vsel %vm868, 0, %v878
        %880 = vst [vmem:[%s767 + $0x1c] sm:$0x1] %v879
        %v881 = vld [vmem:[%s767 + $0x24] sm:$0x1]
        %v882 = vsel %vm868, 0, %v881
        %883 = vst [vmem:[%s767 + $0x24] sm:$0x1] %v882
        %v884 = vld [vmem:[%s767 + $0x2c] sm:$0x1]
        %v885 = vsel %vm868, 0, %v884
        %886 = vst [vmem:[%s767 + $0x2c] sm:$0x1] %v885
        %v887 = vld [vmem:[%s767 + $0x34] sm:$0x1]
        %v888 = vsel %vm868, 0, %v887
        %889 = vst [vmem:[%s767 + $0x34] sm:$0x1] %v888
        %v890 = vld [vmem:[%s767 + $0x3c] sm:$0x1]
        %v891 = vsel %vm868, 0, %v890
        %892 = vst [vmem:[%s767 + $0x3c] sm:$0x1] %v891
        %v893 = vld [vmem:[%s767 + $0x54] sm:$0x1]
        %v894 = vsel %vm868, 0, %v893
        %895 = vst [vmem:[%s767 + $0x54] sm:$0x1] %v894
        %v896 = vld [vmem:[%s767 + $0x5c] sm:$0x1]
        %v897 = vsel %vm868, 0, %v896
        %898 = vst [vmem:[%s767 + $0x5c] sm:$0x1] %v897
        %v899 = vld [vmem:[%s767 + $0x64] sm:$0x1]
        %v900 = vsel %vm868, 0, %v899
        %901 = vst [vmem:[%s767 + $0x64] sm:$0x1] %v900
        %v902 = vld [vmem:[%s767 + $0x6c] sm:$0x1]
        %v903 = vsel %vm868, 0, %v902
        %904 = vst [vmem:[%s767 + $0x6c] sm:$0x1] %v903
        %v905 = vld [vmem:[%s767 + $0x74] sm:$0x1]
        %v906 = vsel %vm868, 0, %v905
        %907 = vst [vmem:[%s767 + $0x74] sm:$0x1] %v906
        %v908 = vld [vmem:[%s767 + $0x7c] sm:$0x1]
        %v909 = vsel %vm868, 0, %v908
        %910 = vst [vmem:[%s767 + $0x7c] sm:$0x1] %v909
        %v911 = vld [vmem:[%s767 + $0x84] sm:$0x1]
        %v912 = vsel %vm868, 0, %v911
        %913 = vst [vmem:[%s767 + $0x84] sm:$0x1] %v912
        %v914 = vld [vmem:[%s767 + $0x8c] sm:$0x1]
        %v915 = vsel %vm868, 0, %v914
        %916 = vst [vmem:[%s767 + $0x8c] sm:$0x1] %v915
        %v917 = vld [vmem:[%s767 + $0xa4] sm:$0x1]
        %v918 = vsel %vm868, 0, %v917
        %919 = vst [vmem:[%s767 + $0xa4] sm:$0x1] %v918
        %v920 = vld [vmem:[%s767 + $0xac] sm:$0x1]
        %v921 = vsel %vm868, 0, %v920
        %922 = vst [vmem:[%s767 + $0xac] sm:$0x1] %v921
        %v923 = vld [vmem:[%s767 + $0xb4] sm:$0x1]
        %v924 = vsel %vm868, 0, %v923
        %925 = vst [vmem:[%s767 + $0xb4] sm:$0x1] %v924
        %v926 = vld [vmem:[%s767 + $0xbc] sm:$0x1]
        %v927 = vsel %vm868, 0, %v926
        %928 = vst [vmem:[%s767 + $0xbc] sm:$0x1] %v927
        %v929 = vld [vmem:[%s767 + $0xc4] sm:$0x1]
        %v930 = vsel %vm868, 0, %v929
        %931 = vst [vmem:[%s767 + $0xc4] sm:$0x1] %v930
        %v932 = vld [vmem:[%s767 + $0xcc] sm:$0x1]
        %v933 = vsel %vm868, 0, %v932
        %934 = vst [vmem:[%s767 + $0xcc] sm:$0x1] %v933
        %v935 = vld [vmem:[%s767 + $0xd4] sm:$0x1]
        %v936 = vsel %vm868, 0, %v935
        %937 = vst [vmem:[%s767 + $0xd4] sm:$0x1] %v936
        %v938 = vld [vmem:[%s767 + $0xdc] sm:$0x1]
        %v939 = vsel %vm868, 0, %v938
        %940 = vst [vmem:[%s767 + $0xdc] sm:$0x1] %v939
        %v941 = vld [vmem:[%s767 + $0xf4] sm:$0x1]
        %v942 = vsel %vm868, 0, %v941
        %943 = vst [vmem:[%s767 + $0xf4] sm:$0x1] %v942
        %v944 = vld [vmem:[%s767 + $0xfc] sm:$0x1]
        %v945 = vsel %vm868, 0, %v944
        %946 = vst [vmem:[%s767 + $0xfc] sm:$0x1] %v945
        %v947 = vld [vmem:[%s767 + $0x104] sm:$0x1]
        %v948 = vsel %vm868, 0, %v947
        %949 = vst [vmem:[%s767 + $0x104] sm:$0x1] %v948
        %v950 = vld [vmem:[%s767 + $0x10c] sm:$0x1]
        %v951 = vsel %vm868, 0, %v950
        %952 = vst [vmem:[%s767 + $0x10c] sm:$0x1] %v951
        %v953 = vld [vmem:[%s767 + $0x114] sm:$0x1]
        %v954 = vsel %vm868, 0, %v953
        %955 = vst [vmem:[%s767 + $0x114] sm:$0x1] %v954
        %v956 = vld [vmem:[%s767 + $0x11c] sm:$0x1]
        %v957 = vsel %vm868, 0, %v956
        %958 = vst [vmem:[%s767 + $0x11c] sm:$0x1] %v957
        %v959 = vld [vmem:[%s767 + $0x124] sm:$0x1]
        %v960 = vsel %vm868, 0, %v959
        %961 = vst [vmem:[%s767 + $0x124] sm:$0x1] %v960
        %v962 = vld [vmem:[%s767 + $0x12c] sm:$0x1]
        %v963 = vsel %vm868, 0, %v962
        %964 = vst [vmem:[%s767 + $0x12c] sm:$0x1] %v963
        %v981 = vunpack.c.l.b16 %v734
        %v982 = vunpack.c.h.b16 %v734
        %v983 = vunpack.c.l.b16 %v735
        %v984 = vunpack.c.h.b16 %v735
        %v985 = vunpack.c.l.b16 %v736
        %v986 = vunpack.c.h.b16 %v736
        %v987 = vunpack.c.l.b16 %v737
        %v988 = vunpack.c.h.b16 %v737
        %v989 = vunpack.c.l.b16 %v738
        %v990 = vunpack.c.h.b16 %v738
        %v991 = vunpack.c.l.b16 %v739
        %v992 = vunpack.c.h.b16 %v739
        %v993 = vunpack.c.l.b16 %v740
        %v994 = vunpack.c.h.b16 %v740
        %v995 = vunpack.c.l.b16 %v741
        %v996 = vunpack.c.h.b16 %v741
        %v997 = vunpack.c.l.b16 %v742
        %v998 = vunpack.c.h.b16 %v742
        %v999 = vunpack.c.l.b16 %v743
        %v1000 = vunpack.c.h.b16 %v743
        %v1001 = vunpack.c.l.b16 %v744
        %v1002 = vunpack.c.h.b16 %v744
        %v1003 = vunpack.c.l.b16 %v745
        %v1004 = vunpack.c.h.b16 %v745
        %v1005 = vunpack.c.l.b16 %v746
        %v1006 = vunpack.c.h.b16 %v746
        %v1007 = vunpack.c.l.b16 %v747
        %v1008 = vunpack.c.h.b16 %v747
        %v1009 = vunpack.c.l.b16 %v748
        %v1010 = vunpack.c.h.b16 %v748
        %v1011 = vunpack.c.l.b16 %v749
        %v1012 = vunpack.c.h.b16 %v749
        %v1013 = vpack.c.b16 %v981, %v981
        %v1014 = vpack.c.b16 %v982, %v982
        %v1015 = vpack.c.b16 %v983, %v983
        %v1016 = vpack.c.b16 %v984, %v984
        %v1017 = vpack.c.b16 %v985, %v985
        %v1018 = vpack.c.b16 %v986, %v986
        %v1019 = vpack.c.b16 %v987, %v987
        %v1020 = vpack.c.b16 %v988, %v988
        %v1021 = vpack.c.b16 %v989, %v989
        %v1022 = vpack.c.b16 %v990, %v990
        %v1023 = vpack.c.b16 %v991, %v991
        %v1024 = vpack.c.b16 %v992, %v992
        %v1025 = vpack.c.b16 %v993, %v993
        %v1026 = vpack.c.b16 %v994, %v994
        %v1027 = vpack.c.b16 %v995, %v995
        %v1028 = vpack.c.b16 %v996, %v996
        %v1029 = vpack.c.b16 %v997, %v997
        %v1030 = vpack.c.b16 %v998, %v998
        %v1031 = vpack.c.b16 %v999, %v999
        %v1032 = vpack.c.b16 %v1000, %v1000
        %v1033 = vpack.c.b16 %v1001, %v1001
        %v1034 = vpack.c.b16 %v1002, %v1002
        %v1035 = vpack.c.b16 %v1003, %v1003
        %v1036 = vpack.c.b16 %v1004, %v1004
        %v1037 = vpack.c.b16 %v1005, %v1005
        %v1038 = vpack.c.b16 %v1006, %v1006
        %v1039 = vpack.c.b16 %v1007, %v1007
        %v1040 = vpack.c.b16 %v1008, %v1008
        %v1041 = vpack.c.b16 %v1009, %v1009
        %v1042 = vpack.c.b16 %v1010, %v1010
        %v1043 = vpack.c.b16 %v1011, %v1011
        %v1044 = vpack.c.b16 %v1012, %v1012
        %v1046 = vshrl.u32 %v1013, 16
        %v1048 = vrot.slane %v1046, 7
        %v1049 = vshll.u32 %v1013, 16
        %v1051 = vor.u32 %v1048, %v1049
        %v1052 = vrot.slane %v1048, 4
        %v1054 = vshrl.u32 %v1014, 16
        %v1056 = vrot.slane %v1054, 7
        %v1057 = vshll.u32 %v1014, 16
        %v1059 = vor.u32 %v1056, %v1057
        %v1060 = vrot.slane %v1056, 4
        %v1062 = vshrl.u32 %v1015, 16
        %v1064 = vrot.slane %v1062, 7
        %v1065 = vshll.u32 %v1015, 16
        %v1067 = vor.u32 %v1064, %v1065
        %v1068 = vrot.slane %v1064, 4
        %v1070 = vshrl.u32 %v1016, 16
        %v1072 = vrot.slane %v1070, 7
        %v1073 = vshll.u32 %v1016, 16
        %v1075 = vor.u32 %v1072, %v1073
        %v1076 = vrot.slane %v1072, 4
        %v1078 = vshrl.u32 %v1017, 16
        %v1080 = vrot.slane %v1078, 7
        %v1081 = vshll.u32 %v1017, 16
        %v1083 = vor.u32 %v1080, %v1081
        %v1084 = vrot.slane %v1080, 4
        %v1086 = vshrl.u32 %v1018, 16
        %v1088 = vrot.slane %v1086, 7
        %v1089 = vshll.u32 %v1018, 16
        %v1091 = vor.u32 %v1088, %v1089
        %v1092 = vrot.slane %v1088, 4
        %v1094 = vshrl.u32 %v1019, 16
        %v1096 = vrot.slane %v1094, 7
        %v1097 = vshll.u32 %v1019, 16
        %v1099 = vor.u32 %v1096, %v1097
        %v1100 = vrot.slane %v1096, 4
        %v1102 = vshrl.u32 %v1020, 16
        %v1104 = vrot.slane %v1102, 7
        %v1105 = vshll.u32 %v1020, 16
        %v1107 = vor.u32 %v1104, %v1105
        %v1108 = vrot.slane %v1104, 4
        %v1110 = vshrl.u32 %v1021, 16
        %v1112 = vrot.slane %v1110, 7
        %v1113 = vshll.u32 %v1021, 16
        %v1115 = vor.u32 %v1112, %v1113
        %v1116 = vrot.slane %v1112, 4
        %v1118 = vshrl.u32 %v1022, 16
        %v1120 = vrot.slane %v1118, 7
        %v1121 = vshll.u32 %v1022, 16
        %v1123 = vor.u32 %v1120, %v1121
        %v1124 = vrot.slane %v1120, 4
        %v1126 = vshrl.u32 %v1023, 16
        %v1128 = vrot.slane %v1126, 7
        %v1129 = vshll.u32 %v1023, 16
        %v1131 = vor.u32 %v1128, %v1129
        %v1132 = vrot.slane %v1128, 4
        %v1134 = vshrl.u32 %v1024, 16
        %v1136 = vrot.slane %v1134, 7
        %v1137 = vshll.u32 %v1024, 16
        %v1139 = vor.u32 %v1136, %v1137
        %v1140 = vrot.slane %v1136, 4
        %v1142 = vshrl.u32 %v1025, 16
        %v1144 = vrot.slane %v1142, 7
        %v1145 = vshll.u32 %v1025, 16
        %v1147 = vor.u32 %v1144, %v1145
        %v1148 = vrot.slane %v1144, 4
        %v1150 = vshrl.u32 %v1026, 16
        %v1152 = vrot.slane %v1150, 7
        %v1153 = vshll.u32 %v1026, 16
        %v1155 = vor.u32 %v1152, %v1153
        %v1156 = vrot.slane %v1152, 4
        %v1158 = vshrl.u32 %v1027, 16
        %v1160 = vrot.slane %v1158, 7
        %v1161 = vshll.u32 %v1027, 16
        %v1163 = vor.u32 %v1160, %v1161
        %v1164 = vrot.slane %v1160, 4
        %v1166 = vshrl.u32 %v1028, 16
        %v1168 = vrot.slane %v1166, 7
        %v1169 = vshll.u32 %v1028, 16
        %v1171 = vor.u32 %v1168, %v1169
        %v1172 = vrot.slane %v1168, 4
        %v1174 = vshrl.u32 %v1029, 16
        %v1176 = vrot.slane %v1174, 7
        %v1177 = vshll.u32 %v1029, 16
        %v1179 = vor.u32 %v1176, %v1177
        %v1180 = vrot.slane %v1176, 4
        %v1182 = vshrl.u32 %v1030, 16
        %v1184 = vrot.slane %v1182, 7
        %v1185 = vshll.u32 %v1030, 16
        %v1187 = vor.u32 %v1184, %v1185
        %v1188 = vrot.slane %v1184, 4
        %v1190 = vshrl.u32 %v1031, 16
        %v1192 = vrot.slane %v1190, 7
        %v1193 = vshll.u32 %v1031, 16
        %v1195 = vor.u32 %v1192, %v1193
        %v1196 = vrot.slane %v1192, 4
        %v1198 = vshrl.u32 %v1032, 16
        %v1200 = vrot.slane %v1198, 7
        %v1201 = vshll.u32 %v1032, 16
        %v1203 = vor.u32 %v1200, %v1201
        %v1204 = vrot.slane %v1200, 4
        %v1206 = vshrl.u32 %v1033, 16
        %v1208 = vrot.slane %v1206, 7
        %v1209 = vshll.u32 %v1033, 16
        %v1211 = vor.u32 %v1208, %v1209
        %v1212 = vrot.slane %v1208, 4
        %v1214 = vshrl.u32 %v1034, 16
        %v1216 = vrot.slane %v1214, 7
        %v1217 = vshll.u32 %v1034, 16
        %v1219 = vor.u32 %v1216, %v1217
        %v1220 = vrot.slane %v1216, 4
        %v1222 = vshrl.u32 %v1035, 16
        %v1224 = vrot.slane %v1222, 7
        %v1225 = vshll.u32 %v1035, 16
        %v1227 = vor.u32 %v1224, %v1225
        %v1228 = vrot.slane %v1224, 4
        %v1230 = vshrl.u32 %v1036, 16
        %v1232 = vrot.slane %v1230, 7
        %v1233 = vshll.u32 %v1036, 16
        %v1235 = vor.u32 %v1232, %v1233
        %v1236 = vrot.slane %v1232, 4
        %v1238 = vshrl.u32 %v1037, 16
        %v1240 = vrot.slane %v1238, 7
        %v1241 = vshll.u32 %v1037, 16
        %v1243 = vor.u32 %v1240, %v1241
        %v1244 = vrot.slane %v1240, 4
        %v1246 = vshrl.u32 %v1038, 16
        %v1248 = vrot.slane %v1246, 7
        %v1249 = vshll.u32 %v1038, 16
        %v1251 = vor.u32 %v1248, %v1249
        %v1252 = vrot.slane %v1248, 4
        %v1254 = vshrl.u32 %v1039, 16
        %v1256 = vrot.slane %v1254, 7
        %v1257 = vshll.u32 %v1039, 16
        %v1259 = vor.u32 %v1256, %v1257
        %v1260 = vrot.slane %v1256, 4
        %v1262 = vshrl.u32 %v1040, 16
        %v1264 = vrot.slane %v1262, 7
        %v1265 = vshll.u32 %v1040, 16
        %v1267 = vor.u32 %v1264, %v1265
        %v1268 = vrot.slane %v1264, 4
        %v1270 = vshrl.u32 %v1041, 16
        %v1272 = vrot.slane %v1270, 7
        %v1273 = vshll.u32 %v1041, 16
        %v1275 = vor.u32 %v1272, %v1273
        %v1276 = vrot.slane %v1272, 4
        %v1278 = vshrl.u32 %v1042, 16
        %v1280 = vrot.slane %v1278, 7
        %v1281 = vshll.u32 %v1042, 16
        %v1283 = vor.u32 %v1280, %v1281
        %v1284 = vrot.slane %v1280, 4
        %v1286 = vshrl.u32 %v1043, 16
        %v1288 = vrot.slane %v1286, 7
        %v1289 = vshll.u32 %v1043, 16
        %v1291 = vor.u32 %v1288, %v1289
        %v1292 = vrot.slane %v1288, 4
        %v1294 = vshrl.u32 %v1044, 16
        %v1296 = vrot.slane %v1294, 7
        %v1297 = vshll.u32 %v1044, 16
        %v1299 = vor.u32 %v1296, %v1297
        %v1300 = vrot.slane %v1296, 4
        %vm1365 = vcmask 1043456
        %vm1366 = vmand %vm1365, %vm867
        %v1367 = vld [vmem:[%s767] sm:$0xf]
        %v1368 = vsel %vm1366, %v1051, %v1367
        %1369 = vst [vmem:[%s767] sm:$0xf] %v1368
        %v1370 = vld [vmem:[%s767 + $0x4] sm:$0x1]
        %v1371 = vsel %vm770, %v1052, %v1370
        %1372 = vst [vmem:[%s767 + $0x4] sm:$0x1] %v1371
        %v1373 = vld [vmem:[%s767 + $0x8] sm:$0xf]
        %v1374 = vsel %vm1366, %v1059, %v1373
        %1375 = vst [vmem:[%s767 + $0x8] sm:$0xf] %v1374
        %v1376 = vld [vmem:[%s767 + $0xc] sm:$0x1]
        %v1377 = vsel %vm770, %v1060, %v1376
        %1378 = vst [vmem:[%s767 + $0xc] sm:$0x1] %v1377
        %v1379 = vld [vmem:[%s767 + $0x10] sm:$0xf]
        %v1380 = vsel %vm1366, %v1067, %v1379
        %1381 = vst [vmem:[%s767 + $0x10] sm:$0xf] %v1380
        %v1382 = vld [vmem:[%s767 + $0x14] sm:$0x1]
        %v1383 = vsel %vm770, %v1068, %v1382
        %1384 = vst [vmem:[%s767 + $0x14] sm:$0x1] %v1383
        %v1385 = vld [vmem:[%s767 + $0x18] sm:$0xf]
        %v1386 = vsel %vm1366, %v1075, %v1385
        %1387 = vst [vmem:[%s767 + $0x18] sm:$0xf] %v1386
        %v1388 = vld [vmem:[%s767 + $0x1c] sm:$0x1]
        %v1389 = vsel %vm770, %v1076, %v1388
        %1390 = vst [vmem:[%s767 + $0x1c] sm:$0x1] %v1389
        %v1391 = vld [vmem:[%s767 + $0x20] sm:$0xf]
        %v1392 = vsel %vm1366, %v1083, %v1391
        %1393 = vst [vmem:[%s767 + $0x20] sm:$0xf] %v1392
        %v1394 = vld [vmem:[%s767 + $0x24] sm:$0x1]
        %v1395 = vsel %vm770, %v1084, %v1394
        %1396 = vst [vmem:[%s767 + $0x24] sm:$0x1] %v1395
        %v1397 = vld [vmem:[%s767 + $0x28] sm:$0xf]
        %v1398 = vsel %vm1366, %v1091, %v1397
        %1399 = vst [vmem:[%s767 + $0x28] sm:$0xf] %v1398
        %v1400 = vld [vmem:[%s767 + $0x2c] sm:$0x1]
        %v1401 = vsel %vm770, %v1092, %v1400
        %1402 = vst [vmem:[%s767 + $0x2c] sm:$0x1] %v1401
        %v1403 = vld [vmem:[%s767 + $0x30] sm:$0xf]
        %v1404 = vsel %vm1366, %v1099, %v1403
        %1405 = vst [vmem:[%s767 + $0x30] sm:$0xf] %v1404
        %v1406 = vld [vmem:[%s767 + $0x34] sm:$0x1]
        %v1407 = vsel %vm770, %v1100, %v1406
        %1408 = vst [vmem:[%s767 + $0x34] sm:$0x1] %v1407
        %v1409 = vld [vmem:[%s767 + $0x38] sm:$0xf]
        %v1410 = vsel %vm1366, %v1107, %v1409
        %1411 = vst [vmem:[%s767 + $0x38] sm:$0xf] %v1410
        %v1412 = vld [vmem:[%s767 + $0x3c] sm:$0x1]
        %v1413 = vsel %vm770, %v1108, %v1412
        %1414 = vst [vmem:[%s767 + $0x3c] sm:$0x1] %v1413
        %v1415 = vld [vmem:[%s767 + $0x50] sm:$0xf]
        %v1416 = vsel %vm1366, %v1115, %v1415
        %1417 = vst [vmem:[%s767 + $0x50] sm:$0xf] %v1416
        %v1418 = vld [vmem:[%s767 + $0x54] sm:$0x1]
        %v1419 = vsel %vm770, %v1116, %v1418
        %1420 = vst [vmem:[%s767 + $0x54] sm:$0x1] %v1419
        %v1421 = vld [vmem:[%s767 + $0x58] sm:$0xf]
        %v1422 = vsel %vm1366, %v1123, %v1421
        %1423 = vst [vmem:[%s767 + $0x58] sm:$0xf] %v1422
        %v1424 = vld [vmem:[%s767 + $0x5c] sm:$0x1]
        %v1425 = vsel %vm770, %v1124, %v1424
        %1426 = vst [vmem:[%s767 + $0x5c] sm:$0x1] %v1425
        %v1427 = vld [vmem:[%s767 + $0x60] sm:$0xf]
        %v1428 = vsel %vm1366, %v1131, %v1427
        %1429 = vst [vmem:[%s767 + $0x60] sm:$0xf] %v1428
        %v1430 = vld [vmem:[%s767 + $0x64] sm:$0x1]
        %v1431 = vsel %vm770, %v1132, %v1430
        %1432 = vst [vmem:[%s767 + $0x64] sm:$0x1] %v1431
        %v1433 = vld [vmem:[%s767 + $0x68] sm:$0xf]
        %v1434 = vsel %vm1366, %v1139, %v1433
        %1435 = vst [vmem:[%s767 + $0x68] sm:$0xf] %v1434
        %v1436 = vld [vmem:[%s767 + $0x6c] sm:$0x1]
        %v1437 = vsel %vm770, %v1140, %v1436
        %1438 = vst [vmem:[%s767 + $0x6c] sm:$0x1] %v1437
        %v1439 = vld [vmem:[%s767 + $0x70] sm:$0xf]
        %v1440 = vsel %vm1366, %v1147, %v1439
        %1441 = vst [vmem:[%s767 + $0x70] sm:$0xf] %v1440
        %v1442 = vld [vmem:[%s767 + $0x74] sm:$0x1]
        %v1443 = vsel %vm770, %v1148, %v1442
        %1444 = vst [vmem:[%s767 + $0x74] sm:$0x1] %v1443
        %v1445 = vld [vmem:[%s767 + $0x78] sm:$0xf]
        %v1446 = vsel %vm1366, %v1155, %v1445
        %1447 = vst [vmem:[%s767 + $0x78] sm:$0xf] %v1446
        %v1448 = vld [vmem:[%s767 + $0x7c] sm:$0x1]
        %v1449 = vsel %vm770, %v1156, %v1448
        %1450 = vst [vmem:[%s767 + $0x7c] sm:$0x1] %v1449
        %v1451 = vld [vmem:[%s767 + $0x80] sm:$0xf]
        %v1452 = vsel %vm1366, %v1163, %v1451
        %1453 = vst [vmem:[%s767 + $0x80] sm:$0xf] %v1452
        %v1454 = vld [vmem:[%s767 + $0x84] sm:$0x1]
        %v1455 = vsel %vm770, %v1164, %v1454
        %1456 = vst [vmem:[%s767 + $0x84] sm:$0x1] %v1455
        %v1457 = vld [vmem:[%s767 + $0x88] sm:$0xf]
        %v1458 = vsel %vm1366, %v1171, %v1457
        %1459 = vst [vmem:[%s767 + $0x88] sm:$0xf] %v1458
        %v1460 = vld [vmem:[%s767 + $0x8c] sm:$0x1]
        %v1461 = vsel %vm770, %v1172, %v1460
        %1462 = vst [vmem:[%s767 + $0x8c] sm:$0x1] %v1461
        %v1463 = vld [vmem:[%s767 + $0xa0] sm:$0xf]
        %v1464 = vsel %vm1366, %v1179, %v1463
        %1465 = vst [vmem:[%s767 + $0xa0] sm:$0xf] %v1464
        %v1466 = vld [vmem:[%s767 + $0xa4] sm:$0x1]
        %v1467 = vsel %vm770, %v1180, %v1466
        %1468 = vst [vmem:[%s767 + $0xa4] sm:$0x1] %v1467
        %v1469 = vld [vmem:[%s767 + $0xa8] sm:$0xf]
        %v1470 = vsel %vm1366, %v1187, %v1469
        %1471 = vst [vmem:[%s767 + $0xa8] sm:$0xf] %v1470
        %v1472 = vld [vmem:[%s767 + $0xac] sm:$0x1]
        %v1473 = vsel %vm770, %v1188, %v1472
        %1474 = vst [vmem:[%s767 + $0xac] sm:$0x1] %v1473
        %v1475 = vld [vmem:[%s767 + $0xb0] sm:$0xf]
        %v1476 = vsel %vm1366, %v1195, %v1475
        %1477 = vst [vmem:[%s767 + $0xb0] sm:$0xf] %v1476
        %v1478 = vld [vmem:[%s767 + $0xb4] sm:$0x1]
        %v1479 = vsel %vm770, %v1196, %v1478
        %1480 = vst [vmem:[%s767 + $0xb4] sm:$0x1] %v1479
        %v1481 = vld [vmem:[%s767 + $0xb8] sm:$0xf]
        %v1482 = vsel %vm1366, %v1203, %v1481
        %1483 = vst [vmem:[%s767 + $0xb8] sm:$0xf] %v1482
        %v1484 = vld [vmem:[%s767 + $0xbc] sm:$0x1]
        %v1485 = vsel %vm770, %v1204, %v1484
        %1486 = vst [vmem:[%s767 + $0xbc] sm:$0x1] %v1485
        %v1487 = vld [vmem:[%s767 + $0xc0] sm:$0xf]
        %v1488 = vsel %vm1366, %v1211, %v1487
        %1489 = vst [vmem:[%s767 + $0xc0] sm:$0xf] %v1488
        %v1490 = vld [vmem:[%s767 + $0xc4] sm:$0x1]
        %v1491 = vsel %vm770, %v1212, %v1490
        %1492 = vst [vmem:[%s767 + $0xc4] sm:$0x1] %v1491
        %v1493 = vld [vmem:[%s767 + $0xc8] sm:$0xf]
        %v1494 = vsel %vm1366, %v1219, %v1493
        %1495 = vst [vmem:[%s767 + $0xc8] sm:$0xf] %v1494
        %v1496 = vld [vmem:[%s767 + $0xcc] sm:$0x1]
        %v1497 = vsel %vm770, %v1220, %v1496
        %1498 = vst [vmem:[%s767 + $0xcc] sm:$0x1] %v1497
        %v1499 = vld [vmem:[%s767 + $0xd0] sm:$0xf]
        %v1500 = vsel %vm1366, %v1227, %v1499
        %1501 = vst [vmem:[%s767 + $0xd0] sm:$0xf] %v1500
        %v1502 = vld [vmem:[%s767 + $0xd4] sm:$0x1]
        %v1503 = vsel %vm770, %v1228, %v1502
        %1504 = vst [vmem:[%s767 + $0xd4] sm:$0x1] %v1503
        %v1505 = vld [vmem:[%s767 + $0xd8] sm:$0xf]
        %v1506 = vsel %vm1366, %v1235, %v1505
        %1507 = vst [vmem:[%s767 + $0xd8] sm:$0xf] %v1506
        %v1508 = vld [vmem:[%s767 + $0xdc] sm:$0x1]
        %v1509 = vsel %vm770, %v1236, %v1508
        %1510 = vst [vmem:[%s767 + $0xdc] sm:$0x1] %v1509
        %v1511 = vld [vmem:[%s767 + $0xf0] sm:$0xf]
        %v1512 = vsel %vm1366, %v1243, %v1511
        %1513 = vst [vmem:[%s767 + $0xf0] sm:$0xf] %v1512
        %v1514 = vld [vmem:[%s767 + $0xf4] sm:$0x1]
        %v1515 = vsel %vm770, %v1244, %v1514
        %1516 = vst [vmem:[%s767 + $0xf4] sm:$0x1] %v1515
        %v1517 = vld [vmem:[%s767 + $0xf8] sm:$0xf]
        %v1518 = vsel %vm1366, %v1251, %v1517
        %1519 = vst [vmem:[%s767 + $0xf8] sm:$0xf] %v1518
        %v1520 = vld [vmem:[%s767 + $0xfc] sm:$0x1]
        %v1521 = vsel %vm770, %v1252, %v1520
        %1522 = vst [vmem:[%s767 + $0xfc] sm:$0x1] %v1521
        %v1523 = vld [vmem:[%s767 + $0x100] sm:$0xf]
        %v1524 = vsel %vm1366, %v1259, %v1523
        %1525 = vst [vmem:[%s767 + $0x100] sm:$0xf] %v1524
        %v1526 = vld [vmem:[%s767 + $0x104] sm:$0x1]
        %v1527 = vsel %vm770, %v1260, %v1526
        %1528 = vst [vmem:[%s767 + $0x104] sm:$0x1] %v1527
        %v1529 = vld [vmem:[%s767 + $0x108] sm:$0xf]
        %v1530 = vsel %vm1366, %v1267, %v1529
        %1531 = vst [vmem:[%s767 + $0x108] sm:$0xf] %v1530
        %v1532 = vld [vmem:[%s767 + $0x10c] sm:$0x1]
        %v1533 = vsel %vm770, %v1268, %v1532
        %1534 = vst [vmem:[%s767 + $0x10c] sm:$0x1] %v1533
        %v1535 = vld [vmem:[%s767 + $0x110] sm:$0xf]
        %v1536 = vsel %vm1366, %v1275, %v1535
        %1537 = vst [vmem:[%s767 + $0x110] sm:$0xf] %v1536
        %v1538 = vld [vmem:[%s767 + $0x114] sm:$0x1]
        %v1539 = vsel %vm770, %v1276, %v1538
        %1540 = vst [vmem:[%s767 + $0x114] sm:$0x1] %v1539
        %v1541 = vld [vmem:[%s767 + $0x118] sm:$0xf]
        %v1542 = vsel %vm1366, %v1283, %v1541
        %1543 = vst [vmem:[%s767 + $0x118] sm:$0xf] %v1542
        %v1544 = vld [vmem:[%s767 + $0x11c] sm:$0x1]
        %v1545 = vsel %vm770, %v1284, %v1544
        %1546 = vst [vmem:[%s767 + $0x11c] sm:$0x1] %v1545
        %v1547 = vld [vmem:[%s767 + $0x120] sm:$0xf]
        %v1548 = vsel %vm1366, %v1291, %v1547
        %1549 = vst [vmem:[%s767 + $0x120] sm:$0xf] %v1548
        %v1550 = vld [vmem:[%s767 + $0x124] sm:$0x1]
        %v1551 = vsel %vm770, %v1292, %v1550
        %1552 = vst [vmem:[%s767 + $0x124] sm:$0x1] %v1551
        %v1553 = vld [vmem:[%s767 + $0x128] sm:$0xf]
        %v1554 = vsel %vm1366, %v1299, %v1553
        %1555 = vst [vmem:[%s767 + $0x128] sm:$0xf] %v1554
        %v1556 = vld [vmem:[%s767 + $0x12c] sm:$0x1]
        %v1557 = vsel %vm770, %v1300, %v1556
        %1558 = vst [vmem:[%s767 + $0x12c] sm:$0x1] %v1557
        %s1559 = scalar_lea.vmem [#allocation2], 240
        %v1560 = vld [vmem:[%s1559] sm:$0xf]
        %v1561 = vld [vmem:[%s1559 + $0x8] sm:$0xf]
        %v1562 = vld [vmem:[%s1559 + $0x10] sm:$0xf]
        %v1563 = vld [vmem:[%s1559 + $0x18] sm:$0xf]
        %v1564 = vld [vmem:[%s1559 + $0x20] sm:$0xf]
        %v1565 = vld [vmem:[%s1559 + $0x28] sm:$0xf]
        %v1566 = vld [vmem:[%s1559 + $0x30] sm:$0xf]
        %v1567 = vld [vmem:[%s1559 + $0x38] sm:$0xf]
        %s1568 = scalar_lea.vmem [#allocation2], 160
        %v1569 = vld [vmem:[%s1568] sm:$0xf]
        %v1570 = vld [vmem:[%s1568 + $0x4] sm:$0x1]
        %v1571 = vld [vmem:[%s1568 + $0x8] sm:$0xf]
        %v1572 = vld [vmem:[%s1568 + $0xc] sm:$0x1]
        %v1573 = vld [vmem:[%s1568 + $0x10] sm:$0xf]
        %v1574 = vld [vmem:[%s1568 + $0x14] sm:$0x1]
        %v1575 = vld [vmem:[%s1568 + $0x18] sm:$0xf]
        %v1576 = vld [vmem:[%s1568 + $0x1c] sm:$0x1]
        %v1577 = vld [vmem:[%s1568 + $0x20] sm:$0xf]
        %v1578 = vld [vmem:[%s1568 + $0x24] sm:$0x1]
        %v1579 = vld [vmem:[%s1568 + $0x28] sm:$0xf]
        %v1580 = vld [vmem:[%s1568 + $0x2c] sm:$0x1]
        %v1581 = vld [vmem:[%s1568 + $0x30] sm:$0xf]
        %v1582 = vld [vmem:[%s1568 + $0x34] sm:$0x1]
        %v1583 = vld [vmem:[%s1568 + $0x38] sm:$0xf]
        %v1584 = vld [vmem:[%s1568 + $0x3c] sm:$0x1]
        %vm1585 = vsmask.f32 3328
        %vm1586 = vsmask.f32 7440
        %vm1587 = vmor %vm1585, %vm1586
        %v1589 = vshrl.u32 %v1569, 16
        %v1591 = vrot.slane %v1589, 4
        %v1592 = vshll.u32 %v1569, 16
        %v1594 = vrot.slane %v1592, 5
        %v1595 = vor.u32 %v1591, %v1594
        %v1596 = vrot.slane %v1595, 4
        %v1598 = vshll.u32 %v1570, 16
        %v1600 = vrot.slane %v1598, 5
        %v1601 = vsel %vm1587, %v1596, %v1600
        %v1603 = vshrl.u32 %v1571, 16
        %v1605 = vrot.slane %v1603, 4
        %v1606 = vshll.u32 %v1571, 16
        %v1608 = vrot.slane %v1606, 5
        %v1609 = vor.u32 %v1605, %v1608
        %v1610 = vrot.slane %v1609, 4
        %v1612 = vshll.u32 %v1572, 16
        %v1614 = vrot.slane %v1612, 5
        %v1615 = vsel %vm1587, %v1610, %v1614
        %v1617 = vshrl.u32 %v1573, 16
        %v1619 = vrot.slane %v1617, 4
        %v1620 = vshll.u32 %v1573, 16
        %v1622 = vrot.slane %v1620, 5
        %v1623 = vor.u32 %v1619, %v1622
        %v1624 = vrot.slane %v1623, 4
        %v1626 = vshll.u32 %v1574, 16
        %v1628 = vrot.slane %v1626, 5
        %v1629 = vsel %vm1587, %v1624, %v1628
        %v1631 = vshrl.u32 %v1575, 16
        %v1633 = vrot.slane %v1631, 4
        %v1634 = vshll.u32 %v1575, 16
        %v1636 = vrot.slane %v1634, 5
        %v1637 = vor.u32 %v1633, %v1636
        %v1638 = vrot.slane %v1637, 4
        %v1640 = vshll.u32 %v1576, 16
        %v1642 = vrot.slane %v1640, 5
        %v1643 = vsel %vm1587, %v1638, %v1642
        %v1645 = vshrl.u32 %v1577, 16
        %v1647 = vrot.slane %v1645, 4
        %v1648 = vshll.u32 %v1577, 16
        %v1650 = vrot.slane %v1648, 5
        %v1651 = vor.u32 %v1647, %v1650
        %v1652 = vrot.slane %v1651, 4
        %v1654 = vshll.u32 %v1578, 16
        %v1656 = vrot.slane %v1654, 5
        %v1657 = vsel %vm1587, %v1652, %v1656
        %v1659 = vshrl.u32 %v1579, 16
        %v1661 = vrot.slane %v1659, 4
        %v1662 = vshll.u32 %v1579, 16
        %v1664 = vrot.slane %v1662, 5
        %v1665 = vor.u32 %v1661, %v1664
        %v1666 = vrot.slane %v1665, 4
        %v1668 = vshll.u32 %v1580, 16
        %v1670 = vrot.slane %v1668, 5
        %v1671 = vsel %vm1587, %v1666, %v1670
        %v1673 = vshrl.u32 %v1581, 16
        %v1675 = vrot.slane %v1673, 4
        %v1676 = vshll.u32 %v1581, 16
        %v1678 = vrot.slane %v1676, 5
        %v1679 = vor.u32 %v1675, %v1678
        %v1680 = vrot.slane %v1679, 4
        %v1682 = vshll.u32 %v1582, 16
        %v1684 = vrot.slane %v1682, 5
        %v1685 = vsel %vm1587, %v1680, %v1684
        %v1687 = vshrl.u32 %v1583, 16
        %v1689 = vrot.slane %v1687, 4
        %v1690 = vshll.u32 %v1583, 16
        %v1692 = vrot.slane %v1690, 5
        %v1693 = vor.u32 %v1689, %v1692
        %v1694 = vrot.slane %v1693, 4
        %v1696 = vshll.u32 %v1584, 16
        %v1698 = vrot.slane %v1696, 5
        %v1699 = vsel %vm1587, %v1694, %v1698
        %v1708 = vunpack.c.l.b16 %v1560
        %v1709 = vunpack.c.l.b16 %v1561
        %v1710 = vunpack.c.l.b16 %v1562
        %v1711 = vunpack.c.l.b16 %v1563
        %v1712 = vunpack.c.l.b16 %v1564
        %v1713 = vunpack.c.l.b16 %v1565
        %v1714 = vunpack.c.l.b16 %v1566
        %v1715 = vunpack.c.l.b16 %v1567
        %v1716 = vpack.c.b16 %v1709, %v1708
        %v1717 = vpack.c.b16 %v1711, %v1710
        %v1718 = vpack.c.b16 %v1713, %v1712
        %v1719 = vpack.c.b16 %v1715, %v1714
        %v1724 = vunpack.c.l.b16 %v1601
        %v1725 = vunpack.c.l.b16 %v1615
        %v1726 = vunpack.c.l.b16 %v1629
        %v1727 = vunpack.c.l.b16 %v1643
        %v1728 = vunpack.c.l.b16 %v1657
        %v1729 = vunpack.c.l.b16 %v1671
        %v1730 = vunpack.c.l.b16 %v1685
        %v1731 = vunpack.c.l.b16 %v1699
        %v1732 = vpack.c.b16 %v1725, %v1724
        %v1733 = vpack.c.b16 %v1727, %v1726
        %v1734 = vpack.c.b16 %v1729, %v1728
        %v1735 = vpack.c.b16 %v1731, %v1730
        %v1740 = vld [vmem:[#allocation9] sm:$0xf]
        %v1741 = vld [vmem:[#allocation9 + $0x4] sm:$0xf]
        %v1742 = vld [vmem:[#allocation9 + $0x8] sm:$0xf]
        %v1743 = vld [vmem:[#allocation9 + $0xc] sm:$0xf]
        %v1744 = vld [vmem:[#allocation9 + $0x10] sm:$0xf]
        %v1745 = vld [vmem:[#allocation9 + $0x14] sm:$0xf]
        %v1746 = vld [vmem:[#allocation9 + $0x18] sm:$0xf]
        %v1747 = vld [vmem:[#allocation9 + $0x1c] sm:$0xf]
        %v1748 = vld [vmem:[#allocation9 + $0x20] sm:$0xf]
        %v1749 = vld [vmem:[#allocation9 + $0x24] sm:$0xf]
        %v1750 = vld [vmem:[#allocation9 + $0x28] sm:$0xf]
        %v1751 = vld [vmem:[#allocation9 + $0x2c] sm:$0xf]
        %v1752 = vld [vmem:[#allocation9 + $0x30] sm:$0xf]
        %v1753 = vld [vmem:[#allocation9 + $0x34] sm:$0xf]
        %v1754 = vld [vmem:[#allocation9 + $0x38] sm:$0xf]
        %v1755 = vld [vmem:[#allocation9 + $0x3c] sm:$0xf]
        %v1756 = vld [vmem:[#allocation9 + $0x40] sm:$0xf]
        %v1757 = vld [vmem:[#allocation9 + $0x44] sm:$0xf]
        %v1758 = vld [vmem:[#allocation9 + $0x48] sm:$0xf]
        %v1759 = vld [vmem:[#allocation9 + $0x4c] sm:$0xf]
        %v1760 = vld [vmem:[#allocation9 + $0x50] sm:$0xf]
        %v1761 = vld [vmem:[#allocation9 + $0x54] sm:$0xf]
        %v1762 = vld [vmem:[#allocation9 + $0x58] sm:$0xf]
        %v1763 = vld [vmem:[#allocation9 + $0x5c] sm:$0xf]
        %v1764 = vld [vmem:[#allocation9 + $0x60] sm:$0xf]
        %v1765 = vld [vmem:[#allocation9 + $0x64] sm:$0xf]
        %v1766 = vld [vmem:[#allocation9 + $0x68] sm:$0xf]
        %v1767 = vld [vmem:[#allocation9 + $0x6c] sm:$0xf]
        %v1768 = vld [vmem:[#allocation9 + $0x70] sm:$0xf]
        %v1769 = vld [vmem:[#allocation9 + $0x74] sm:$0xf]
        %v1770 = vld [vmem:[#allocation9 + $0x78] sm:$0xf]
        %v1771 = vld [vmem:[#allocation9 + $0x7c] sm:$0xf]
        %v1804 = vunpack.c.l.b16 %v1740
        %v1805 = vunpack.c.l.b16 %v1741
        %v1806 = vunpack.c.l.b16 %v1742
        %v1807 = vunpack.c.l.b16 %v1743
        %v1808 = vunpack.c.l.b16 %v1744
        %v1809 = vunpack.c.l.b16 %v1745
        %v1810 = vunpack.c.l.b16 %v1746
        %v1811 = vunpack.c.l.b16 %v1747
        %v1812 = vunpack.c.l.b16 %v1748
        %v1813 = vunpack.c.l.b16 %v1749
        %v1814 = vunpack.c.l.b16 %v1750
        %v1815 = vunpack.c.l.b16 %v1751
        %v1816 = vunpack.c.l.b16 %v1752
        %v1817 = vunpack.c.l.b16 %v1753
        %v1818 = vunpack.c.l.b16 %v1754
        %v1819 = vunpack.c.l.b16 %v1755
        %v1820 = vunpack.c.l.b16 %v1756
        %v1821 = vunpack.c.l.b16 %v1757
        %v1822 = vunpack.c.l.b16 %v1758
        %v1823 = vunpack.c.l.b16 %v1759
        %v1824 = vunpack.c.l.b16 %v1760
        %v1825 = vunpack.c.l.b16 %v1761
        %v1826 = vunpack.c.l.b16 %v1762
        %v1827 = vunpack.c.l.b16 %v1763
        %v1828 = vunpack.c.l.b16 %v1764
        %v1829 = vunpack.c.l.b16 %v1765
        %v1830 = vunpack.c.l.b16 %v1766
        %v1831 = vunpack.c.l.b16 %v1767
        %v1832 = vunpack.c.l.b16 %v1768
        %v1833 = vunpack.c.l.b16 %v1769
        %v1834 = vunpack.c.l.b16 %v1770
        %v1835 = vunpack.c.l.b16 %v1771
        %v1836 = vpack.c.b16 %v1805, %v1804
        %v1837 = vpack.c.b16 %v1807, %v1806
        %v1838 = vpack.c.b16 %v1809, %v1808
        %v1839 = vpack.c.b16 %v1811, %v1810
        %v1840 = vpack.c.b16 %v1813, %v1812
        %v1841 = vpack.c.b16 %v1815, %v1814
        %v1842 = vpack.c.b16 %v1817, %v1816
        %v1843 = vpack.c.b16 %v1819, %v1818
        %v1844 = vpack.c.b16 %v1821, %v1820
        %v1845 = vpack.c.b16 %v1823, %v1822
        %v1846 = vpack.c.b16 %v1825, %v1824
        %v1847 = vpack.c.b16 %v1827, %v1826
        %v1848 = vpack.c.b16 %v1829, %v1828
        %v1849 = vpack.c.b16 %v1831, %v1830
        %v1850 = vpack.c.b16 %v1833, %v1832
        %v1851 = vpack.c.b16 %v1835, %v1834
        %1868 = vmatprep.subr.bf16.mxu0 0
        %1869 = vmatpush1.bf16.msra.mxu0 %v1836
        %1870 = vmatprep.subr.bf16.mxu0 0
        %1871 = vmatpush1.bf16.msra.mxu0 %v1837
        %1872 = vmatprep.subr.bf16.mxu0 0
        %1873 = vmatpush1.bf16.msra.mxu0 %v1838
        %1874 = vmatprep.subr.bf16.mxu0 0
        %1875 = vmatpush1.bf16.msra.mxu0 %v1839
        %1876 = vmatprep.subr.bf16.mxu0 0
        %1877 = vmatpush1.bf16.msra.mxu0 %v1840
        %1878 = vmatprep.subr.bf16.mxu0 0
        %1879 = vmatpush1.bf16.msra.mxu0 %v1841
        %1880 = vmatprep.subr.bf16.mxu0 0
        %1881 = vmatpush1.bf16.msra.mxu0 %v1842
        %1882 = vmatprep.subr.bf16.mxu0 0
        %1883 = vmatpush1.bf16.msra.mxu0 %v1843
        %1884 = vmatprep.subr.bf16.mxu0 0
        %1885 = vmatpush1.bf16.msra.mxu0 %v1844
        %1886 = vmatprep.subr.bf16.mxu0 0
        %1887 = vmatpush1.bf16.msra.mxu0 %v1845
        %1888 = vmatprep.subr.bf16.mxu0 0
        %1889 = vmatpush1.bf16.msra.mxu0 %v1846
        %1890 = vmatprep.subr.bf16.mxu0 0
        %1891 = vmatpush1.bf16.msra.mxu0 %v1847
        %1892 = vmatprep.subr.bf16.mxu0 0
        %1893 = vmatpush1.bf16.msra.mxu0 %v1848
        %1894 = vmatprep.subr.bf16.mxu0 0
        %1895 = vmatpush1.bf16.msra.mxu0 %v1849
        %1896 = vmatprep.subr.bf16.mxu0 0
        %1897 = vmatpush1.bf16.msra.mxu0 %v1850
        %1898 = vmatprep.subr.bf16.mxu0 0
        %1899 = vmatpush1.bf16.msra.mxu0 %v1851
        %1900 = vmatprep.mubr.bf16.mxu0 %v1732
        %1901 = vmatmul.mubr.bf16.gmra.mrb[0].mxu0 %v1716
        %v1902 = vpop.f32.mrb[0].mxu0
        %v1903 = vadd.f32 0.0, %v1902
        %v1904 = vpop.f32.mrb[0].mxu0
        %v1905 = vpop.f32.mrb[0].mxu0
        %v1906 = vadd.f32 0.0, %v1905
        %v1907 = vpop.f32.mrb[0].mxu0
        %1908 = vmatprep.mubr.bf16.mxu0 %v1733
        %1909 = vmatmul.mubr.bf16.gmra.mrb[0].mxu0 %v1717
        %v1910 = vpop.f32.mrb[0].mxu0
        %v1911 = vadd.f32 0.0, %v1910
        %v1912 = vpop.f32.mrb[0].mxu0
        %v1913 = vpop.f32.mrb[0].mxu0
        %v1914 = vadd.f32 0.0, %v1913
        %v1915 = vpop.f32.mrb[0].mxu0
        %1916 = vmatprep.mubr.bf16.mxu0 %v1734
        %1917 = vmatmul.mubr.bf16.gmra.mrb[0].mxu0 %v1718
        %v1918 = vpop.f32.mrb[0].mxu0
        %v1919 = vadd.f32 0.0, %v1918
        %v1920 = vpop.f32.mrb[0].mxu0
        %v1921 = vpop.f32.mrb[0].mxu0
        %v1922 = vadd.f32 0.0, %v1921
        %v1923 = vpop.f32.mrb[0].mxu0
        %1924 = vmatprep.mubr.bf16.mxu0 %v1735
        %1925 = vmatmul.mubr.bf16.gmra.mrb[0].mxu0 %v1719
        %v1926 = vpop.f32.mrb[0].mxu0
        %v1927 = vadd.f32 0.0, %v1926
        %v1928 = vpop.f32.mrb[0].mxu0
        %v1929 = vpop.f32.mrb[0].mxu0
        %v1930 = vadd.f32 0.0, %v1929
        %v1931 = vpop.f32.mrb[0].mxu0
        %1932 = vdwg.mxu0
        %1933 = vst [vmem:[#allocation3] sm:$0xff] %v1903
        %1934 = vst [vmem:[#allocation3 + $0x8] sm:$0xff] %v1906
        %1935 = vst [vmem:[#allocation3 + $0x10] sm:$0xff] %v1911
        %1936 = vst [vmem:[#allocation3 + $0x18] sm:$0xff] %v1914
        %1937 = vst [vmem:[#allocation3 + $0x20] sm:$0xff] %v1919
        %1938 = vst [vmem:[#allocation3 + $0x28] sm:$0xff] %v1922
        %1939 = vst [vmem:[#allocation3 + $0x30] sm:$0xff] %v1927
        %1940 = vst [vmem:[#allocation3 + $0x38] sm:$0xff] %v1930
        %v1941 = vld [vmem:[#allocation3] sm:$0xff]
        %v1942 = vld [vmem:[#allocation3 + $0x8] sm:$0xff]
        %v1943 = vld [vmem:[#allocation3 + $0x10] sm:$0xff]
        %v1944 = vld [vmem:[#allocation3 + $0x18] sm:$0xff]
        %v1945 = vld [vmem:[#allocation3 + $0x20] sm:$0xff]
        %v1946 = vld [vmem:[#allocation3 + $0x28] sm:$0xff]
        %v1947 = vld [vmem:[#allocation3 + $0x30] sm:$0xff]
        %v1948 = vld [vmem:[#allocation3 + $0x38] sm:$0xff]
        %v1949 = vld [vmem:[%s1559] sm:$0xf]
        %v1950 = vld [vmem:[%s1559 + $0x4] sm:$0x1]
        %v1951 = vld [vmem:[%s1559 + $0x8] sm:$0xf]
        %v1952 = vld [vmem:[%s1559 + $0xc] sm:$0x1]
        %v1953 = vld [vmem:[%s1559 + $0x10] sm:$0xf]
        %v1954 = vld [vmem:[%s1559 + $0x14] sm:$0x1]
        %v1955 = vld [vmem:[%s1559 + $0x18] sm:$0xf]
        %v1956 = vld [vmem:[%s1559 + $0x1c] sm:$0x1]
        %v1957 = vld [vmem:[%s1559 + $0x20] sm:$0xf]
        %v1958 = vld [vmem:[%s1559 + $0x24] sm:$0x1]
        %v1959 = vld [vmem:[%s1559 + $0x28] sm:$0xf]
        %v1960 = vld [vmem:[%s1559 + $0x2c] sm:$0x1]
        %v1961 = vld [vmem:[%s1559 + $0x30] sm:$0xf]
        %v1962 = vld [vmem:[%s1559 + $0x34] sm:$0x1]
        %v1963 = vld [vmem:[%s1559 + $0x38] sm:$0xf]
        %v1964 = vld [vmem:[%s1559 + $0x3c] sm:$0x1]
        %v1966 = vshrl.u32 %v1949, 16
        %v1968 = vrot.slane %v1966, 4
        %v1969 = vshll.u32 %v1949, 16
        %v1971 = vrot.slane %v1969, 5
        %v1972 = vor.u32 %v1968, %v1971
        %v1973 = vrot.slane %v1972, 4
        %v1975 = vshll.u32 %v1950, 16
        %v1977 = vrot.slane %v1975, 5
        %v1978 = vsel %vm1587, %v1973, %v1977
        %v1980 = vshrl.u32 %v1951, 16
        %v1982 = vrot.slane %v1980, 4
        %v1983 = vshll.u32 %v1951, 16
        %v1985 = vrot.slane %v1983, 5
        %v1986 = vor.u32 %v1982, %v1985
        %v1987 = vrot.slane %v1986, 4
        %v1989 = vshll.u32 %v1952, 16
        %v1991 = vrot.slane %v1989, 5
        %v1992 = vsel %vm1587, %v1987, %v1991
        %v1994 = vshrl.u32 %v1953, 16
        %v1996 = vrot.slane %v1994, 4
        %v1997 = vshll.u32 %v1953, 16
        %v1999 = vrot.slane %v1997, 5
        %v2000 = vor.u32 %v1996, %v1999
        %v2001 = vrot.slane %v2000, 4
        %v2003 = vshll.u32 %v1954, 16
        %v2005 = vrot.slane %v2003, 5
        %v2006 = vsel %vm1587, %v2001, %v2005
        %v2008 = vshrl.u32 %v1955, 16
        %v2010 = vrot.slane %v2008, 4
        %v2011 = vshll.u32 %v1955, 16
        %v2013 = vrot.slane %v2011, 5
        %v2014 = vor.u32 %v2010, %v2013
        %v2015 = vrot.slane %v2014, 4
        %v2017 = vshll.u32 %v1956, 16
        %v2019 = vrot.slane %v2017, 5
        %v2020 = vsel %vm1587, %v2015, %v2019
        %v2022 = vshrl.u32 %v1957, 16
        %v2024 = vrot.slane %v2022, 4
        %v2025 = vshll.u32 %v1957, 16
        %v2027 = vrot.slane %v2025, 5
        %v2028 = vor.u32 %v2024, %v2027
        %v2029 = vrot.slane %v2028, 4
        %v2031 = vshll.u32 %v1958, 16
        %v2033 = vrot.slane %v2031, 5
        %v2034 = vsel %vm1587, %v2029, %v2033
        %v2036 = vshrl.u32 %v1959, 16
        %v2038 = vrot.slane %v2036, 4
        %v2039 = vshll.u32 %v1959, 16
        %v2041 = vrot.slane %v2039, 5
        %v2042 = vor.u32 %v2038, %v2041
        %v2043 = vrot.slane %v2042, 4
        %v2045 = vshll.u32 %v1960, 16
        %v2047 = vrot.slane %v2045, 5
        %v2048 = vsel %vm1587, %v2043, %v2047
        %v2050 = vshrl.u32 %v1961, 16
        %v2052 = vrot.slane %v2050, 4
        %v2053 = vshll.u32 %v1961, 16
        %v2055 = vrot.slane %v2053, 5
        %v2056 = vor.u32 %v2052, %v2055
        %v2057 = vrot.slane %v2056, 4
        %v2059 = vshll.u32 %v1962, 16
        %v2061 = vrot.slane %v2059, 5
        %v2062 = vsel %vm1587, %v2057, %v2061
        %v2064 = vshrl.u32 %v1963, 16
        %v2066 = vrot.slane %v2064, 4
        %v2067 = vshll.u32 %v1963, 16
        %v2069 = vrot.slane %v2067, 5
        %v2070 = vor.u32 %v2066, %v2069
        %v2071 = vrot.slane %v2070, 4
        %v2073 = vshll.u32 %v1964, 16
        %v2075 = vrot.slane %v2073, 5
        %v2076 = vsel %vm1587, %v2071, %v2075
        %s2077 = scalar_lea.vmem [#allocation2], 88
        %v2078 = vld [vmem:[%s2077] sm:$0xf]
        %v2079 = vld [vmem:[%s2077 + $0x8] sm:$0xf]
        %v2080 = vld [vmem:[%s2077 + $0x10] sm:$0xf]
        %v2081 = vld [vmem:[%s2077 + $0x18] sm:$0xf]
        %v2082 = vld [vmem:[%s2077 + $0x20] sm:$0xf]
        %v2083 = vld [vmem:[%s2077 + $0x28] sm:$0xf]
        %v2084 = vld [vmem:[%s2077 + $0x30] sm:$0xf]
        %v2085 = vld [vmem:[%s2077 + $0x38] sm:$0xf]
        %v2086 = vunpack.c.l.b16 %v1978
        %v2087 = vunpack.c.l.b16 %v1992
        %v2088 = vunpack.c.l.b16 %v2006
        %v2089 = vunpack.c.l.b16 %v2020
        %v2090 = vunpack.c.l.b16 %v2034
        %v2091 = vunpack.c.l.b16 %v2048
        %v2092 = vunpack.c.l.b16 %v2062
        %v2093 = vunpack.c.l.b16 %v2076
        %v2094 = vpack.c.b16 %v2087, %v2086
        %v2095 = vpack.c.b16 %v2089, %v2088
        %v2096 = vpack.c.b16 %v2091, %v2090
        %v2097 = vpack.c.b16 %v2093, %v2092
        %v2110 = vunpack.c.l.b16 %v2078
        %v2111 = vunpack.c.l.b16 %v2079
        %v2112 = vunpack.c.l.b16 %v2080
        %v2113 = vunpack.c.l.b16 %v2081
        %v2114 = vunpack.c.l.b16 %v2082
        %v2115 = vunpack.c.l.b16 %v2083
        %v2116 = vunpack.c.l.b16 %v2084
        %v2117 = vunpack.c.l.b16 %v2085
        %v2118 = vpack.c.b16 %v2111, %v2110
        %v2119 = vpack.c.b16 %v2113, %v2112
        %v2120 = vpack.c.b16 %v2115, %v2114
        %v2121 = vpack.c.b16 %v2117, %v2116
        %s2126 = scalar_lea.vmem [#allocation9], 128
        %v2127 = vld [vmem:[%s2126] sm:$0xf]
        %v2128 = vld [vmem:[%s2126 + $0x4] sm:$0xf]
        %v2129 = vld [vmem:[%s2126 + $0x8] sm:$0xf]
        %v2130 = vld [vmem:[%s2126 + $0xc] sm:$0xf]
        %v2131 = vld [vmem:[%s2126 + $0x10] sm:$0xf]
        %v2132 = vld [vmem:[%s2126 + $0x14] sm:$0xf]
        %v2133 = vld [vmem:[%s2126 + $0x18] sm:$0xf]
        %v2134 = vld [vmem:[%s2126 + $0x1c] sm:$0xf]
        %v2135 = vld [vmem:[%s2126 + $0x20] sm:$0xf]
        %v2136 = vld [vmem:[%s2126 + $0x24] sm:$0xf]
        %v2137 = vld [vmem:[%s2126 + $0x28] sm:$0xf]
        %v2138 = vld [vmem:[%s2126 + $0x2c] sm:$0xf]
        %v2139 = vld [vmem:[%s2126 + $0x30] sm:$0xf]
        %v2140 = vld [vmem:[%s2126 + $0x34] sm:$0xf]
        %v2141 = vld [vmem:[%s2126 + $0x38] sm:$0xf]
        %v2142 = vld [vmem:[%s2126 + $0x3c] sm:$0xf]
        %v2143 = vld [vmem:[%s2126 + $0x40] sm:$0xf]
        %v2144 = vld [vmem:[%s2126 + $0x44] sm:$0xf]
        %v2145 = vld [vmem:[%s2126 + $0x48] sm:$0xf]
        %v2146 = vld [vmem:[%s2126 + $0x4c] sm:$0xf]
        %v2147 = vld [vmem:[%s2126 + $0x50] sm:$0xf]
        %v2148 = vld [vmem:[%s2126 + $0x54] sm:$0xf]
        %v2149 = vld [vmem:[%s2126 + $0x58] sm:$0xf]
        %v2150 = vld [vmem:[%s2126 + $0x5c] sm:$0xf]
        %v2151 = vld [vmem:[%s2126 + $0x60] sm:$0xf]
        %v2152 = vld [vmem:[%s2126 + $0x64] sm:$0xf]
        %v2153 = vld [vmem:[%s2126 + $0x68] sm:$0xf]
        %v2154 = vld [vmem:[%s2126 + $0x6c] sm:$0xf]
        %v2155 = vld [vmem:[%s2126 + $0x70] sm:$0xf]
        %v2156 = vld [vmem:[%s2126 + $0x74] sm:$0xf]
        %v2157 = vld [vmem:[%s2126 + $0x78] sm:$0xf]
        %v2158 = vld [vmem:[%s2126 + $0x7c] sm:$0xf]
        %v2191 = vunpack.c.l.b16 %v2127
        %v2192 = vunpack.c.l.b16 %v2128
        %v2193 = vunpack.c.l.b16 %v2129
        %v2194 = vunpack.c.l.b16 %v2130
        %v2195 = vunpack.c.l.b16 %v2131
        %v2196 = vunpack.c.l.b16 %v2132
        %v2197 = vunpack.c.l.b16 %v2133
        %v2198 = vunpack.c.l.b16 %v2134
        %v2199 = vunpack.c.l.b16 %v2135
        %v2200 = vunpack.c.l.b16 %v2136
        %v2201 = vunpack.c.l.b16 %v2137
        %v2202 = vunpack.c.l.b16 %v2138
        %v2203 = vunpack.c.l.b16 %v2139
        %v2204 = vunpack.c.l.b16 %v2140
        %v2205 = vunpack.c.l.b16 %v2141
        %v2206 = vunpack.c.l.b16 %v2142
        %v2207 = vunpack.c.l.b16 %v2143
        %v2208 = vunpack.c.l.b16 %v2144
        %v2209 = vunpack.c.l.b16 %v2145
        %v2210 = vunpack.c.l.b16 %v2146
        %v2211 = vunpack.c.l.b16 %v2147
        %v2212 = vunpack.c.l.b16 %v2148
        %v2213 = vunpack.c.l.b16 %v2149
        %v2214 = vunpack.c.l.b16 %v2150
        %v2215 = vunpack.c.l.b16 %v2151
        %v2216 = vunpack.c.l.b16 %v2152
        %v2217 = vunpack.c.l.b16 %v2153
        %v2218 = vunpack.c.l.b16 %v2154
        %v2219 = vunpack.c.l.b16 %v2155
        %v2220 = vunpack.c.l.b16 %v2156
        %v2221 = vunpack.c.l.b16 %v2157
        %v2222 = vunpack.c.l.b16 %v2158
        %v2223 = vpack.c.b16 %v2192, %v2191
        %v2224 = vpack.c.b16 %v2194, %v2193
        %v2225 = vpack.c.b16 %v2196, %v2195
        %v2226 = vpack.c.b16 %v2198, %v2197
        %v2227 = vpack.c.b16 %v2200, %v2199
        %v2228 = vpack.c.b16 %v2202, %v2201
        %v2229 = vpack.c.b16 %v2204, %v2203
        %v2230 = vpack.c.b16 %v2206, %v2205
        %v2231 = vpack.c.b16 %v2208, %v2207
        %v2232 = vpack.c.b16 %v2210, %v2209
        %v2233 = vpack.c.b16 %v2212, %v2211
        %v2234 = vpack.c.b16 %v2214, %v2213
        %v2235 = vpack.c.b16 %v2216, %v2215
        %v2236 = vpack.c.b16 %v2218, %v2217
        %v2237 = vpack.c.b16 %v2220, %v2219
        %v2238 = vpack.c.b16 %v2222, %v2221
        %2255 = vmatprep.subr.bf16.mxu0 0
        %2256 = vmatpush1.bf16.msra.mxu0 %v2223
        %2257 = vmatprep.subr.bf16.mxu0 0
        %2258 = vmatpush1.bf16.msra.mxu0 %v2224
        %2259 = vmatprep.subr.bf16.mxu0 0
        %2260 = vmatpush1.bf16.msra.mxu0 %v2225
        %2261 = vmatprep.subr.bf16.mxu0 0
        %2262 = vmatpush1.bf16.msra.mxu0 %v2226
        %2263 = vmatprep.subr.bf16.mxu0 0
        %2264 = vmatpush1.bf16.msra.mxu0 %v2227
        %2265 = vmatprep.subr.bf16.mxu0 0
        %2266 = vmatpush1.bf16.msra.mxu0 %v2228
        %2267 = vmatprep.subr.bf16.mxu0 0
        %2268 = vmatpush1.bf16.msra.mxu0 %v2229
        %2269 = vmatprep.subr.bf16.mxu0 0
        %2270 = vmatpush1.bf16.msra.mxu0 %v2230
        %2271 = vmatprep.subr.bf16.mxu0 0
        %2272 = vmatpush1.bf16.msra.mxu0 %v2231
        %2273 = vmatprep.subr.bf16.mxu0 0
        %2274 = vmatpush1.bf16.msra.mxu0 %v2232
        %2275 = vmatprep.subr.bf16.mxu0 0
        %2276 = vmatpush1.bf16.msra.mxu0 %v2233
        %2277 = vmatprep.subr.bf16.mxu0 0
        %2278 = vmatpush1.bf16.msra.mxu0 %v2234
        %2279 = vmatprep.subr.bf16.mxu0 0
        %2280 = vmatpush1.bf16.msra.mxu0 %v2235
        %2281 = vmatprep.subr.bf16.mxu0 0
        %2282 = vmatpush1.bf16.msra.mxu0 %v2236
        %2283 = vmatprep.subr.bf16.mxu0 0
        %2284 = vmatpush1.bf16.msra.mxu0 %v2237
        %2285 = vmatprep.subr.bf16.mxu0 0
        %2286 = vmatpush1.bf16.msra.mxu0 %v2238
        %2287 = vmatprep.mubr.bf16.mxu0 %v2118
        %2288 = vmatmul.mubr.bf16.gmra.mrb[0].mxu0 %v2094
        %v2289 = vpop.f32.mrb[0].mxu0
        %v2290 = vadd.f32 0.0, %v2289
        %v2291 = vpop.f32.mrb[0].mxu0
        %v2292 = vpop.f32.mrb[0].mxu0
        %v2293 = vadd.f32 0.0, %v2292
        %v2294 = vpop.f32.mrb[0].mxu0
        %2295 = vmatprep.mubr.bf16.mxu0 %v2119
        %2296 = vmatmul.mubr.bf16.gmra.mrb[0].mxu0 %v2095
        %v2297 = vpop.f32.mrb[0].mxu0
        %v2298 = vadd.f32 0.0, %v2297
        %v2299 = vpop.f32.mrb[0].mxu0
        %v2300 = vpop.f32.mrb[0].mxu0
        %v2301 = vadd.f32 0.0, %v2300
        %v2302 = vpop.f32.mrb[0].mxu0
        %2303 = vmatprep.mubr.bf16.mxu0 %v2120
        %2304 = vmatmul.mubr.bf16.gmra.mrb[0].mxu0 %v2096
        %v2305 = vpop.f32.mrb[0].mxu0
        %v2306 = vadd.f32 0.0, %v2305
        %v2307 = vpop.f32.mrb[0].mxu0
        %v2308 = vpop.f32.mrb[0].mxu0
        %v2309 = vadd.f32 0.0, %v2308
        %v2310 = vpop.f32.mrb[0].mxu0
        %2311 = vmatprep.mubr.bf16.mxu0 %v2121
        %2312 = vmatmul.mubr.bf16.gmra.mrb[0].mxu0 %v2097
        %v2313 = vpop.f32.mrb[0].mxu0
        %v2314 = vadd.f32 0.0, %v2313
        %v2315 = vpop.f32.mrb[0].mxu0
        %v2316 = vpop.f32.mrb[0].mxu0
        %v2317 = vadd.f32 0.0, %v2316
        %v2318 = vpop.f32.mrb[0].mxu0
        %2319 = vdwg.mxu0
        %v2320 = vadd.f32 %v1941, %v2290
        %v2321 = vadd.f32 %v1942, %v2293
        %v2322 = vadd.f32 %v1943, %v2298
        %v2323 = vadd.f32 %v1944, %v2301
        %v2324 = vadd.f32 %v1945, %v2306
        %v2325 = vadd.f32 %v1946, %v2309
        %v2326 = vadd.f32 %v1947, %v2314
        %v2327 = vadd.f32 %v1948, %v2317
        %2328 = vst [vmem:[#allocation3] sm:$0xff] %v2320
        %2329 = vst [vmem:[#allocation3 + $0x8] sm:$0xff] %v2321
        %2330 = vst [vmem:[#allocation3 + $0x10] sm:$0xff] %v2322
        %2331 = vst [vmem:[#allocation3 + $0x18] sm:$0xff] %v2323
        %2332 = vst [vmem:[#allocation3 + $0x20] sm:$0xff] %v2324
        %2333 = vst [vmem:[#allocation3 + $0x28] sm:$0xff] %v2325
        %2334 = vst [vmem:[#allocation3 + $0x30] sm:$0xff] %v2326
        %2335 = vst [vmem:[#allocation3 + $0x38] sm:$0xff] %v2327
        %v2336 = vld [vmem:[#allocation3] sm:$0xff]
        %v2337 = vld [vmem:[#allocation3 + $0x8] sm:$0xff]
        %v2338 = vld [vmem:[#allocation3 + $0x10] sm:$0xff]
        %v2339 = vld [vmem:[#allocation3 + $0x18] sm:$0xff]
        %v2340 = vld [vmem:[#allocation3 + $0x20] sm:$0xff]
        %v2341 = vld [vmem:[#allocation3 + $0x28] sm:$0xff]
        %v2342 = vld [vmem:[#allocation3 + $0x30] sm:$0xff]
        %v2343 = vld [vmem:[#allocation3 + $0x38] sm:$0xff]
        %v2344 = vld [vmem:[%s767] sm:$0xf]
        %v2345 = vld [vmem:[%s767 + $0x4] sm:$0x1]
        %v2346 = vld [vmem:[%s767 + $0x8] sm:$0xf]
        %v2347 = vld [vmem:[%s767 + $0xc] sm:$0x1]
        %v2348 = vld [vmem:[%s767 + $0x10] sm:$0xf]
        %v2349 = vld [vmem:[%s767 + $0x14] sm:$0x1]
        %v2350 = vld [vmem:[%s767 + $0x18] sm:$0xf]
        %v2351 = vld [vmem:[%s767 + $0x1c] sm:$0x1]
        %v2352 = vld [vmem:[%s767 + $0x20] sm:$0xf]
        %v2353 = vld [vmem:[%s767 + $0x24] sm:$0x1]
        %v2354 = vld [vmem:[%s767 + $0x28] sm:$0xf]
        %v2355 = vld [vmem:[%s767 + $0x2c] sm:$0x1]
        %v2356 = vld [vmem:[%s767 + $0x30] sm:$0xf]
        %v2357 = vld [vmem:[%s767 + $0x34] sm:$0x1]
        %v2358 = vld [vmem:[%s767 + $0x38] sm:$0xf]
        %v2359 = vld [vmem:[%s767 + $0x3c] sm:$0x1]
        %v2361 = vshrl.u32 %v2344, 16
        %v2363 = vrot.slane %v2361, 4
        %v2364 = vshll.u32 %v2344, 16
        %v2366 = vrot.slane %v2364, 5
        %v2367 = vor.u32 %v2363, %v2366
        %v2368 = vrot.slane %v2367, 4
        %v2370 = vshll.u32 %v2345, 16
        %v2372 = vrot.slane %v2370, 5
        %v2373 = vsel %vm1587, %v2368, %v2372
        %v2375 = vshrl.u32 %v2346, 16
        %v2377 = vrot.slane %v2375, 4
        %v2378 = vshll.u32 %v2346, 16
        %v2380 = vrot.slane %v2378, 5
        %v2381 = vor.u32 %v2377, %v2380
        %v2382 = vrot.slane %v2381, 4
        %v2384 = vshll.u32 %v2347, 16
        %v2386 = vrot.slane %v2384, 5
        %v2387 = vsel %vm1587, %v2382, %v2386
        %v2389 = vshrl.u32 %v2348, 16
        %v2391 = vrot.slane %v2389, 4
        %v2392 = vshll.u32 %v2348, 16
        %v2394 = vrot.slane %v2392, 5
        %v2395 = vor.u32 %v2391, %v2394
        %v2396 = vrot.slane %v2395, 4
        %v2398 = vshll.u32 %v2349, 16
        %v2400 = vrot.slane %v2398, 5
        %v2401 = vsel %vm1587, %v2396, %v2400
        %v2403 = vshrl.u32 %v2350, 16
        %v2405 = vrot.slane %v2403, 4
        %v2406 = vshll.u32 %v2350, 16
        %v2408 = vrot.slane %v2406, 5
        %v2409 = vor.u32 %v2405, %v2408
        %v2410 = vrot.slane %v2409, 4
        %v2412 = vshll.u32 %v2351, 16
        %v2414 = vrot.slane %v2412, 5
        %v2415 = vsel %vm1587, %v2410, %v2414
        %v2417 = vshrl.u32 %v2352, 16
        %v2419 = vrot.slane %v2417, 4
        %v2420 = vshll.u32 %v2352, 16
        %v2422 = vrot.slane %v2420, 5
        %v2423 = vor.u32 %v2419, %v2422
        %v2424 = vrot.slane %v2423, 4
        %v2426 = vshll.u32 %v2353, 16
        %v2428 = vrot.slane %v2426, 5
        %v2429 = vsel %vm1587, %v2424, %v2428
        %v2431 = vshrl.u32 %v2354, 16
        %v2433 = vrot.slane %v2431, 4
        %v2434 = vshll.u32 %v2354, 16
        %v2436 = vrot.slane %v2434, 5
        %v2437 = vor.u32 %v2433, %v2436
        %v2438 = vrot.slane %v2437, 4
        %v2440 = vshll.u32 %v2355, 16
        %v2442 = vrot.slane %v2440, 5
        %v2443 = vsel %vm1587, %v2438, %v2442
        %v2445 = vshrl.u32 %v2356, 16
        %v2447 = vrot.slane %v2445, 4
        %v2448 = vshll.u32 %v2356, 16
        %v2450 = vrot.slane %v2448, 5
        %v2451 = vor.u32 %v2447, %v2450
        %v2452 = vrot.slane %v2451, 4
        %v2454 = vshll.u32 %v2357, 16
        %v2456 = vrot.slane %v2454, 5
        %v2457 = vsel %vm1587, %v2452, %v2456
        %v2459 = vshrl.u32 %v2358, 16
        %v2461 = vrot.slane %v2459, 4
        %v2462 = vshll.u32 %v2358, 16
        %v2464 = vrot.slane %v2462, 5
        %v2465 = vor.u32 %v2461, %v2464
        %v2466 = vrot.slane %v2465, 4
        %v2468 = vshll.u32 %v2359, 16
        %v2470 = vrot.slane %v2468, 5
        %v2471 = vsel %vm1587, %v2466, %v2470
        %v2472 = vld [vmem:[%s2077] sm:$0xf]
        %v2473 = vld [vmem:[%s2077 + $0x4] sm:$0x1]
        %v2474 = vld [vmem:[%s2077 + $0x8] sm:$0xf]
        %v2475 = vld [vmem:[%s2077 + $0xc] sm:$0x1]
        %v2476 = vld [vmem:[%s2077 + $0x10] sm:$0xf]
        %v2477 = vld [vmem:[%s2077 + $0x14] sm:$0x1]
        %v2478 = vld [vmem:[%s2077 + $0x18] sm:$0xf]
        %v2479 = vld [vmem:[%s2077 + $0x1c] sm:$0x1]
        %v2480 = vld [vmem:[%s2077 + $0x20] sm:$0xf]
        %v2481 = vld [vmem:[%s2077 + $0x24] sm:$0x1]
        %v2482 = vld [vmem:[%s2077 + $0x28] sm:$0xf]
        %v2483 = vld [vmem:[%s2077 + $0x2c] sm:$0x1]
        %v2484 = vld [vmem:[%s2077 + $0x30] sm:$0xf]
        %v2485 = vld [vmem:[%s2077 + $0x34] sm:$0x1]
        %v2486 = vld [vmem:[%s2077 + $0x38] sm:$0xf]
        %v2487 = vld [vmem:[%s2077 + $0x3c] sm:$0x1]
        %v2489 = vshrl.u32 %v2472, 16
        %v2491 = vrot.slane %v2489, 4
        %v2492 = vshll.u32 %v2472, 16
        %v2494 = vrot.slane %v2492, 5
        %v2495 = vor.u32 %v2491, %v2494
        %v2496 = vrot.slane %v2495, 4
        %v2498 = vshll.u32 %v2473, 16
        %v2500 = vrot.slane %v2498, 5
        %v2501 = vsel %vm1587, %v2496, %v2500
        %v2503 = vshrl.u32 %v2474, 16
        %v2505 = vrot.slane %v2503, 4
        %v2506 = vshll.u32 %v2474, 16
        %v2508 = vrot.slane %v2506, 5
        %v2509 = vor.u32 %v2505, %v2508
        %v2510 = vrot.slane %v2509, 4
        %v2512 = vshll.u32 %v2475, 16
        %v2514 = vrot.slane %v2512, 5
        %v2515 = vsel %vm1587, %v2510, %v2514
        %v2517 = vshrl.u32 %v2476, 16
        %v2519 = vrot.slane %v2517, 4
        %v2520 = vshll.u32 %v2476, 16
        %v2522 = vrot.slane %v2520, 5
        %v2523 = vor.u32 %v2519, %v2522
        %v2524 = vrot.slane %v2523, 4
        %v2526 = vshll.u32 %v2477, 16
        %v2528 = vrot.slane %v2526, 5
        %v2529 = vsel %vm1587, %v2524, %v2528
        %v2531 = vshrl.u32 %v2478, 16
        %v2533 = vrot.slane %v2531, 4
        %v2534 = vshll.u32 %v2478, 16
        %v2536 = vrot.slane %v2534, 5
        %v2537 = vor.u32 %v2533, %v2536
        %v2538 = vrot.slane %v2537, 4
        %v2540 = vshll.u32 %v2479, 16
        %v2542 = vrot.slane %v2540, 5
        %v2543 = vsel %vm1587, %v2538, %v2542
        %v2545 = vshrl.u32 %v2480, 16
        %v2547 = vrot.slane %v2545, 4
        %v2548 = vshll.u32 %v2480, 16
        %v2550 = vrot.slane %v2548, 5
        %v2551 = vor.u32 %v2547, %v2550
        %v2552 = vrot.slane %v2551, 4
        %v2554 = vshll.u32 %v2481, 16
        %v2556 = vrot.slane %v2554, 5
        %v2557 = vsel %vm1587, %v2552, %v2556
        %v2559 = vshrl.u32 %v2482, 16
        %v2561 = vrot.slane %v2559, 4
        %v2562 = vshll.u32 %v2482, 16
        %v2564 = vrot.slane %v2562, 5
        %v2565 = vor.u32 %v2561, %v2564
        %v2566 = vrot.slane %v2565, 4
        %v2568 = vshll.u32 %v2483, 16
        %v2570 = vrot.slane %v2568, 5
        %v2571 = vsel %vm1587, %v2566, %v2570
        %v2573 = vshrl.u32 %v2484, 16
        %v2575 = vrot.slane %v2573, 4
        %v2576 = vshll.u32 %v2484, 16
        %v2578 = vrot.slane %v2576, 5
        %v2579 = vor.u32 %v2575, %v2578
        %v2580 = vrot.slane %v2579, 4
        %v2582 = vshll.u32 %v2485, 16
        %v2584 = vrot.slane %v2582, 5
        %v2585 = vsel %vm1587, %v2580, %v2584
        %v2587 = vshrl.u32 %v2486, 16
        %v2589 = vrot.slane %v2587, 4
        %v2590 = vshll.u32 %v2486, 16
        %v2592 = vrot.slane %v2590, 5
        %v2593 = vor.u32 %v2589, %v2592
        %v2594 = vrot.slane %v2593, 4
        %v2596 = vshll.u32 %v2487, 16
        %v2598 = vrot.slane %v2596, 5
        %v2599 = vsel %vm1587, %v2594, %v2598
        %v2600 = vunpack.c.l.b16 %v2373
        %v2601 = vunpack.c.l.b16 %v2387
        %v2602 = vunpack.c.l.b16 %v2401
        %v2603 = vunpack.c.l.b16 %v2415
        %v2604 = vunpack.c.l.b16 %v2429
        %v2605 = vunpack.c.l.b16 %v2443
        %v2606 = vunpack.c.l.b16 %v2457
        %v2607 = vunpack.c.l.b16 %v2471
        %v2608 = vpack.c.b16 %v2601, %v2600
        %v2609 = vpack.c.b16 %v2603, %v2602
        %v2610 = vpack.c.b16 %v2605, %v2604
        %v2611 = vpack.c.b16 %v2607, %v2606
        %v2616 = vunpack.c.l.b16 %v2501
        %v2617 = vunpack.c.l.b16 %v2515
        %v2618 = vunpack.c.l.b16 %v2529
        %v2619 = vunpack.c.l.b16 %v2543
        %v2620 = vunpack.c.l.b16 %v2557
        %v2621 = vunpack.c.l.b16 %v2571
        %v2622 = vunpack.c.l.b16 %v2585
        %v2623 = vunpack.c.l.b16 %v2599
        %v2624 = vpack.c.b16 %v2617, %v2616
        %v2625 = vpack.c.b16 %v2619, %v2618
        %v2626 = vpack.c.b16 %v2621, %v2620
        %v2627 = vpack.c.b16 %v2623, %v2622
        %s2632 = scalar_lea.vmem [#allocation9], 256
        %v2633 = vld [vmem:[%s2632] sm:$0xf]
        %v2634 = vld [vmem:[%s2632 + $0x4] sm:$0xf]
        %v2635 = vld [vmem:[%s2632 + $0x8] sm:$0xf]
        %v2636 = vld [vmem:[%s2632 + $0xc] sm:$0xf]
        %v2637 = vld [vmem:[%s2632 + $0x10] sm:$0xf]
        %v2638 = vld [vmem:[%s2632 + $0x14] sm:$0xf]
        %v2639 = vld [vmem:[%s2632 + $0x18] sm:$0xf]
        %v2640 = vld [vmem:[%s2632 + $0x1c] sm:$0xf]
        %v2641 = vld [vmem:[%s2632 + $0x20] sm:$0xf]
        %v2642 = vld [vmem:[%s2632 + $0x24] sm:$0xf]
        %v2643 = vld [vmem:[%s2632 + $0x28] sm:$0xf]
        %v2644 = vld [vmem:[%s2632 + $0x2c] sm:$0xf]
        %v2645 = vld [vmem:[%s2632 + $0x30] sm:$0xf]
        %v2646 = vld [vmem:[%s2632 + $0x34] sm:$0xf]
        %v2647 = vld [vmem:[%s2632 + $0x38] sm:$0xf]
        %v2648 = vld [vmem:[%s2632 + $0x3c] sm:$0xf]
        %v2649 = vld [vmem:[%s2632 + $0x40] sm:$0xf]
        %v2650 = vld [vmem:[%s2632 + $0x44] sm:$0xf]
        %v2651 = vld [vmem:[%s2632 + $0x48] sm:$0xf]
        %v2652 = vld [vmem:[%s2632 + $0x4c] sm:$0xf]
        %v2653 = vld [vmem:[%s2632 + $0x50] sm:$0xf]
        %v2654 = vld [vmem:[%s2632 + $0x54] sm:$0xf]
        %v2655 = vld [vmem:[%s2632 + $0x58] sm:$0xf]
        %v2656 = vld [vmem:[%s2632 + $0x5c] sm:$0xf]
        %v2657 = vld [vmem:[%s2632 + $0x60] sm:$0xf]
        %v2658 = vld [vmem:[%s2632 + $0x64] sm:$0xf]
        %v2659 = vld [vmem:[%s2632 + $0x68] sm:$0xf]
        %v2660 = vld [vmem:[%s2632 + $0x6c] sm:$0xf]
        %v2661 = vld [vmem:[%s2632 + $0x70] sm:$0xf]
        %v2662 = vld [vmem:[%s2632 + $0x74] sm:$0xf]
        %v2663 = vld [vmem:[%s2632 + $0x78] sm:$0xf]
        %v2664 = vld [vmem:[%s2632 + $0x7c] sm:$0xf]
        %v2697 = vunpack.c.l.b16 %v2633
        %v2698 = vunpack.c.l.b16 %v2634
        %v2699 = vunpack.c.l.b16 %v2635
        %v2700 = vunpack.c.l.b16 %v2636
        %v2701 = vunpack.c.l.b16 %v2637
        %v2702 = vunpack.c.l.b16 %v2638
        %v2703 = vunpack.c.l.b16 %v2639
        %v2704 = vunpack.c.l.b16 %v2640
        %v2705 = vunpack.c.l.b16 %v2641
        %v2706 = vunpack.c.l.b16 %v2642
        %v2707 = vunpack.c.l.b16 %v2643
        %v2708 = vunpack.c.l.b16 %v2644
        %v2709 = vunpack.c.l.b16 %v2645
        %v2710 = vunpack.c.l.b16 %v2646
        %v2711 = vunpack.c.l.b16 %v2647
        %v2712 = vunpack.c.l.b16 %v2648
        %v2713 = vunpack.c.l.b16 %v2649
        %v2714 = vunpack.c.l.b16 %v2650
        %v2715 = vunpack.c.l.b16 %v2651
        %v2716 = vunpack.c.l.b16 %v2652
        %v2717 = vunpack.c.l.b16 %v2653
        %v2718 = vunpack.c.l.b16 %v2654
        %v2719 = vunpack.c.l.b16 %v2655
        %v2720 = vunpack.c.l.b16 %v2656
        %v2721 = vunpack.c.l.b16 %v2657
        %v2722 = vunpack.c.l.b16 %v2658
        %v2723 = vunpack.c.l.b16 %v2659
        %v2724 = vunpack.c.l.b16 %v2660
        %v2725 = vunpack.c.l.b16 %v2661
        %v2726 = vunpack.c.l.b16 %v2662
        %v2727 = vunpack.c.l.b16 %v2663
        %v2728 = vunpack.c.l.b16 %v2664
        %v2729 = vpack.c.b16 %v2698, %v2697
        %v2730 = vpack.c.b16 %v2700, %v2699
        %v2731 = vpack.c.b16 %v2702, %v2701
        %v2732 = vpack.c.b16 %v2704, %v2703
        %v2733 = vpack.c.b16 %v2706, %v2705
        %v2734 = vpack.c.b16 %v2708, %v2707
        %v2735 = vpack.c.b16 %v2710, %v2709
        %v2736 = vpack.c.b16 %v2712, %v2711
        %v2737 = vpack.c.b16 %v2714, %v2713
        %v2738 = vpack.c.b16 %v2716, %v2715
        %v2739 = vpack.c.b16 %v2718, %v2717
        %v2740 = vpack.c.b16 %v2720, %v2719
        %v2741 = vpack.c.b16 %v2722, %v2721
        %v2742 = vpack.c.b16 %v2724, %v2723
        %v2743 = vpack.c.b16 %v2726, %v2725
        %v2744 = vpack.c.b16 %v2728, %v2727
        %2761 = vmatprep.subr.bf16.mxu0 0
        %2762 = vmatpush1.bf16.msra.mxu0 %v2729
        %2763 = vmatprep.subr.bf16.mxu0 0
        %2764 = vmatpush1.bf16.msra.mxu0 %v2730
        %2765 = vmatprep.subr.bf16.mxu0 0
        %2766 = vmatpush1.bf16.msra.mxu0 %v2731
        %2767 = vmatprep.subr.bf16.mxu0 0
        %2768 = vmatpush1.bf16.msra.mxu0 %v2732
        %2769 = vmatprep.subr.bf16.mxu0 0
        %2770 = vmatpush1.bf16.msra.mxu0 %v2733
        %2771 = vmatprep.subr.bf16.mxu0 0
        %2772 = vmatpush1.bf16.msra.mxu0 %v2734
        %2773 = vmatprep.subr.bf16.mxu0 0
        %2774 = vmatpush1.bf16.msra.mxu0 %v2735
        %2775 = vmatprep.subr.bf16.mxu0 0
        %2776 = vmatpush1.bf16.msra.mxu0 %v2736
        %2777 = vmatprep.subr.bf16.mxu0 0
        %2778 = vmatpush1.bf16.msra.mxu0 %v2737
        %2779 = vmatprep.subr.bf16.mxu0 0
        %2780 = vmatpush1.bf16.msra.mxu0 %v2738
        %2781 = vmatprep.subr.bf16.mxu0 0
        %2782 = vmatpush1.bf16.msra.mxu0 %v2739
        %2783 = vmatprep.subr.bf16.mxu0 0
        %2784 = vmatpush1.bf16.msra.mxu0 %v2740
        %2785 = vmatprep.subr.bf16.mxu0 0
        %2786 = vmatpush1.bf16.msra.mxu0 %v2741
        %2787 = vmatprep.subr.bf16.mxu0 0
        %2788 = vmatpush1.bf16.msra.mxu0 %v2742
        %2789 = vmatprep.subr.bf16.mxu0 0
        %2790 = vmatpush1.bf16.msra.mxu0 %v2743
        %2791 = vmatprep.subr.bf16.mxu0 0
        %2792 = vmatpush1.bf16.msra.mxu0 %v2744
        %2793 = vmatprep.mubr.bf16.mxu0 %v2624
        %2794 = vmatmul.mubr.bf16.gmra.mrb[0].mxu0 %v2608
        %v2795 = vpop.f32.mrb[0].mxu0
        %v2796 = vadd.f32 0.0, %v2795
        %v2797 = vpop.f32.mrb[0].mxu0
        %v2798 = vpop.f32.mrb[0].mxu0
        %v2799 = vadd.f32 0.0, %v2798
        %v2800 = vpop.f32.mrb[0].mxu0
        %2801 = vmatprep.mubr.bf16.mxu0 %v2625
        %2802 = vmatmul.mubr.bf16.gmra.mrb[0].mxu0 %v2609
        %v2803 = vpop.f32.mrb[0].mxu0
        %v2804 = vadd.f32 0.0, %v2803
        %v2805 = vpop.f32.mrb[0].mxu0
        %v2806 = vpop.f32.mrb[0].mxu0
        %v2807 = vadd.f32 0.0, %v2806
        %v2808 = vpop.f32.mrb[0].mxu0
        %2809 = vmatprep.mubr.bf16.mxu0 %v2626
        %2810 = vmatmul.mubr.bf16.gmra.mrb[0].mxu0 %v2610
        %v2811 = vpop.f32.mrb[0].mxu0
        %v2812 = vadd.f32 0.0, %v2811
        %v2813 = vpop.f32.mrb[0].mxu0
        %v2814 = vpop.f32.mrb[0].mxu0
        %v2815 = vadd.f32 0.0, %v2814
        %v2816 = vpop.f32.mrb[0].mxu0
        %2817 = vmatprep.mubr.bf16.mxu0 %v2627
        %2818 = vmatmul.mubr.bf16.gmra.mrb[0].mxu0 %v2611
        %v2819 = vpop.f32.mrb[0].mxu0
        %v2820 = vadd.f32 0.0, %v2819
        %v2821 = vpop.f32.mrb[0].mxu0
        %v2822 = vpop.f32.mrb[0].mxu0
        %v2823 = vadd.f32 0.0, %v2822
        %v2824 = vpop.f32.mrb[0].mxu0
        %2825 = vdwg.mxu0
        %v2826 = vadd.f32 %v2336, %v2796
        %v2827 = vadd.f32 %v2337, %v2799
        %v2828 = vadd.f32 %v2338, %v2804
        %v2829 = vadd.f32 %v2339, %v2807
        %v2830 = vadd.f32 %v2340, %v2812
        %v2831 = vadd.f32 %v2341, %v2815
        %v2832 = vadd.f32 %v2342, %v2820
        %v2833 = vadd.f32 %v2343, %v2823
        %2834 = vst [vmem:[#allocation3] sm:$0xff] %v2826
        %2835 = vst [vmem:[#allocation3 + $0x8] sm:$0xff] %v2827
        %2836 = vst [vmem:[#allocation3 + $0x10] sm:$0xff] %v2828
        %2837 = vst [vmem:[#allocation3 + $0x18] sm:$0xff] %v2829
        %2838 = vst [vmem:[#allocation3 + $0x20] sm:$0xff] %v2830
        %2839 = vst [vmem:[#allocation3 + $0x28] sm:$0xff] %v2831
        %2840 = vst [vmem:[#allocation3 + $0x30] sm:$0xff] %v2832
        %2841 = vst [vmem:[#allocation3 + $0x38] sm:$0xff] %v2833
        %v2842 = vld [vmem:[#allocation3] sm:$0xff]
        %v2843 = vld [vmem:[#allocation3 + $0x8] sm:$0xff]
        %v2844 = vld [vmem:[#allocation3 + $0x10] sm:$0xff]
        %v2845 = vld [vmem:[#allocation3 + $0x18] sm:$0xff]
        %v2846 = vld [vmem:[#allocation3 + $0x20] sm:$0xff]
        %v2847 = vld [vmem:[#allocation3 + $0x28] sm:$0xff]
        %v2848 = vld [vmem:[#allocation3 + $0x30] sm:$0xff]
        %v2849 = vld [vmem:[#allocation3 + $0x38] sm:$0xff]
        %s2850 = scalar_lea.vmem [#allocation2], 248
        %v2851 = vld [vmem:[%s2850] sm:$0xf]
        %v2852 = vld [vmem:[%s2850 + $0x8] sm:$0xf]
        %v2853 = vld [vmem:[%s2850 + $0x10] sm:$0xf]
        %v2854 = vld [vmem:[%s2850 + $0x18] sm:$0xf]
        %v2855 = vld [vmem:[%s2850 + $0x20] sm:$0xf]
        %v2856 = vld [vmem:[%s2850 + $0x28] sm:$0xf]
        %v2857 = vld [vmem:[%s2850 + $0x30] sm:$0xf]
        %v2858 = vld [vmem:[%s2850 + $0x38] sm:$0xf]
        %s2859 = scalar_lea.vmem [#allocation2], 168
        %v2860 = vld [vmem:[%s2859] sm:$0xf]
        %v2861 = vld [vmem:[%s2859 + $0x4] sm:$0x1]
        %v2862 = vld [vmem:[%s2859 + $0x8] sm:$0xf]
        %v2863 = vld [vmem:[%s2859 + $0xc] sm:$0x1]
        %v2864 = vld [vmem:[%s2859 + $0x10] sm:$0xf]
        %v2865 = vld [vmem:[%s2859 + $0x14] sm:$0x1]
        %v2866 = vld [vmem:[%s2859 + $0x18] sm:$0xf]
        %v2867 = vld [vmem:[%s2859 + $0x1c] sm:$0x1]
        %v2868 = vld [vmem:[%s2859 + $0x20] sm:$0xf]
        %v2869 = vld [vmem:[%s2859 + $0x24] sm:$0x1]
        %v2870 = vld [vmem:[%s2859 + $0x28] sm:$0xf]
        %v2871 = vld [vmem:[%s2859 + $0x2c] sm:$0x1]
        %v2872 = vld [vmem:[%s2859 + $0x30] sm:$0xf]
        %v2873 = vld [vmem:[%s2859 + $0x34] sm:$0x1]
        %v2874 = vld [vmem:[%s2859 + $0x38] sm:$0xf]
        %v2875 = vld [vmem:[%s2859 + $0x3c] sm:$0x1]
        %v2877 = vshrl.u32 %v2860, 16
        %v2879 = vrot.slane %v2877, 4
        %v2880 = vshll.u32 %v2860, 16
        %v2882 = vrot.slane %v2880, 5
        %v2883 = vor.u32 %v2879, %v2882
        %v2884 = vrot.slane %v2883, 4
        %v2886 = vshll.u32 %v2861, 16
        %v2888 = vrot.slane %v2886, 5
        %v2889 = vsel %vm1587, %v2884, %v2888
        %v2891 = vshrl.u32 %v2862, 16
        %v2893 = vrot.slane %v2891, 4
        %v2894 = vshll.u32 %v2862, 16
        %v2896 = vrot.slane %v2894, 5
        %v2897 = vor.u32 %v2893, %v2896
        %v2898 = vrot.slane %v2897, 4
        %v2900 = vshll.u32 %v2863, 16
        %v2902 = vrot.slane %v2900, 5
        %v2903 = vsel %vm1587, %v2898, %v2902
        %v2905 = vshrl.u32 %v2864, 16
        %v2907 = vrot.slane %v2905, 4
        %v2908 = vshll.u32 %v2864, 16
        %v2910 = vrot.slane %v2908, 5
        %v2911 = vor.u32 %v2907, %v2910
        %v2912 = vrot.slane %v2911, 4
        %v2914 = vshll.u32 %v2865, 16
        %v2916 = vrot.slane %v2914, 5
        %v2917 = vsel %vm1587, %v2912, %v2916
        %v2919 = vshrl.u32 %v2866, 16
        %v2921 = vrot.slane %v2919, 4
        %v2922 = vshll.u32 %v2866, 16
        %v2924 = vrot.slane %v2922, 5
        %v2925 = vor.u32 %v2921, %v2924
        %v2926 = vrot.slane %v2925, 4
        %v2928 = vshll.u32 %v2867, 16
        %v2930 = vrot.slane %v2928, 5
        %v2931 = vsel %vm1587, %v2926, %v2930
        %v2933 = vshrl.u32 %v2868, 16
        %v2935 = vrot.slane %v2933, 4
        %v2936 = vshll.u32 %v2868, 16
        %v2938 = vrot.slane %v2936, 5
        %v2939 = vor.u32 %v2935, %v2938
        %v2940 = vrot.slane %v2939, 4
        %v2942 = vshll.u32 %v2869, 16
        %v2944 = vrot.slane %v2942, 5
        %v2945 = vsel %vm1587, %v2940, %v2944
        %v2947 = vshrl.u32 %v2870, 16
        %v2949 = vrot.slane %v2947, 4
        %v2950 = vshll.u32 %v2870, 16
        %v2952 = vrot.slane %v2950, 5
        %v2953 = vor.u32 %v2949, %v2952
        %v2954 = vrot.slane %v2953, 4
        %v2956 = vshll.u32 %v2871, 16
        %v2958 = vrot.slane %v2956, 5
        %v2959 = vsel %vm1587, %v2954, %v2958
        %v2961 = vshrl.u32 %v2872, 16
        %v2963 = vrot.slane %v2961, 4
        %v2964 = vshll.u32 %v2872, 16
        %v2966 = vrot.slane %v2964, 5
        %v2967 = vor.u32 %v2963, %v2966
        %v2968 = vrot.slane %v2967, 4
        %v2970 = vshll.u32 %v2873, 16
        %v2972 = vrot.slane %v2970, 5
        %v2973 = vsel %vm1587, %v2968, %v2972
        %v2975 = vshrl.u32 %v2874, 16
        %v2977 = vrot.slane %v2975, 4
        %v2978 = vshll.u32 %v2874, 16
        %v2980 = vrot.slane %v2978, 5
        %v2981 = vor.u32 %v2977, %v2980
        %v2982 = vrot.slane %v2981, 4
        %v2984 = vshll.u32 %v2875, 16
        %v2986 = vrot.slane %v2984, 5
        %v2987 = vsel %vm1587, %v2982, %v2986
        %v2996 = vunpack.c.l.b16 %v2851
        %v2997 = vunpack.c.l.b16 %v2852
        %v2998 = vunpack.c.l.b16 %v2853
        %v2999 = vunpack.c.l.b16 %v2854
        %v3000 = vunpack.c.l.b16 %v2855
        %v3001 = vunpack.c.l.b16 %v2856
        %v3002 = vunpack.c.l.b16 %v2857
        %v3003 = vunpack.c.l.b16 %v2858
        %v3004 = vpack.c.b16 %v2997, %v2996
        %v3005 = vpack.c.b16 %v2999, %v2998
        %v3006 = vpack.c.b16 %v3001, %v3000
        %v3007 = vpack.c.b16 %v3003, %v3002
        %v3012 = vunpack.c.l.b16 %v2889
        %v3013 = vunpack.c.l.b16 %v2903
        %v3014 = vunpack.c.l.b16 %v2917
        %v3015 = vunpack.c.l.b16 %v2931
        %v3016 = vunpack.c.l.b16 %v2945
        %v3017 = vunpack.c.l.b16 %v2959
        %v3018 = vunpack.c.l.b16 %v2973
        %v3019 = vunpack.c.l.b16 %v2987
        %v3020 = vpack.c.b16 %v3013, %v3012
        %v3021 = vpack.c.b16 %v3015, %v3014
        %v3022 = vpack.c.b16 %v3017, %v3016
        %v3023 = vpack.c.b16 %v3019, %v3018
        %s3028 = scalar_lea.vmem [#allocation9], 384
        %v3029 = vld [vmem:[%s3028] sm:$0xf]
        %v3030 = vld [vmem:[%s3028 + $0x4] sm:$0xf]
        %v3031 = vld [vmem:[%s3028 + $0x8] sm:$0xf]
        %v3032 = vld [vmem:[%s3028 + $0xc] sm:$0xf]
        %v3033 = vld [vmem:[%s3028 + $0x10] sm:$0xf]
        %v3034 = vld [vmem:[%s3028 + $0x14] sm:$0xf]
        %v3035 = vld [vmem:[%s3028 + $0x18] sm:$0xf]
        %v3036 = vld [vmem:[%s3028 + $0x1c] sm:$0xf]
        %v3037 = vld [vmem:[%s3028 + $0x20] sm:$0xf]
        %v3038 = vld [vmem:[%s3028 + $0x24] sm:$0xf]
        %v3039 = vld [vmem:[%s3028 + $0x28] sm:$0xf]
        %v3040 = vld [vmem:[%s3028 + $0x2c] sm:$0xf]
        %v3041 = vld [vmem:[%s3028 + $0x30] sm:$0xf]
        %v3042 = vld [vmem:[%s3028 + $0x34] sm:$0xf]
        %v3043 = vld [vmem:[%s3028 + $0x38] sm:$0xf]
        %v3044 = vld [vmem:[%s3028 + $0x3c] sm:$0xf]
        %v3045 = vld [vmem:[%s3028 + $0x40] sm:$0xf]
        %v3046 = vld [vmem:[%s3028 + $0x44] sm:$0xf]
        %v3047 = vld [vmem:[%s3028 + $0x48] sm:$0xf]
        %v3048 = vld [vmem:[%s3028 + $0x4c] sm:$0xf]
        %v3049 = vld [vmem:[%s3028 + $0x50] sm:$0xf]
        %v3050 = vld [vmem:[%s3028 + $0x54] sm:$0xf]
        %v3051 = vld [vmem:[%s3028 + $0x58] sm:$0xf]
        %v3052 = vld [vmem:[%s3028 + $0x5c] sm:$0xf]
        %v3053 = vld [vmem:[%s3028 + $0x60] sm:$0xf]
        %v3054 = vld [vmem:[%s3028 + $0x64] sm:$0xf]
        %v3055 = vld [vmem:[%s3028 + $0x68] sm:$0xf]
        %v3056 = vld [vmem:[%s3028 + $0x6c] sm:$0xf]
        %v3057 = vld [vmem:[%s3028 + $0x70] sm:$0xf]
        %v3058 = vld [vmem:[%s3028 + $0x74] sm:$0xf]
        %v3059 = vld [vmem:[%s3028 + $0x78] sm:$0xf]
        %v3060 = vld [vmem:[%s3028 + $0x7c] sm:$0xf]
        %v3093 = vunpack.c.l.b16 %v3029
        %v3094 = vunpack.c.l.b16 %v3030
        %v3095 = vunpack.c.l.b16 %v3031
        %v3096 = vunpack.c.l.b16 %v3032
        %v3097 = vunpack.c.l.b16 %v3033
        %v3098 = vunpack.c.l.b16 %v3034
        %v3099 = vunpack.c.l.b16 %v3035
        %v3100 = vunpack.c.l.b16 %v3036
        %v3101 = vunpack.c.l.b16 %v3037
        %v3102 = vunpack.c.l.b16 %v3038
        %v3103 = vunpack.c.l.b16 %v3039
        %v3104 = vunpack.c.l.b16 %v3040
        %v3105 = vunpack.c.l.b16 %v3041
        %v3106 = vunpack.c.l.b16 %v3042
        %v3107 = vunpack.c.l.b16 %v3043
        %v3108 = vunpack.c.l.b16 %v3044
        %v3109 = vunpack.c.l.b16 %v3045
        %v3110 = vunpack.c.l.b16 %v3046
        %v3111 = vunpack.c.l.b16 %v3047
        %v3112 = vunpack.c.l.b16 %v3048
        %v3113 = vunpack.c.l.b16 %v3049
        %v3114 = vunpack.c.l.b16 %v3050
        %v3115 = vunpack.c.l.b16 %v3051
        %v3116 = vunpack.c.l.b16 %v3052
        %v3117 = vunpack.c.l.b16 %v3053
        %v3118 = vunpack.c.l.b16 %v3054
        %v3119 = vunpack.c.l.b16 %v3055
        %v3120 = vunpack.c.l.b16 %v3056
        %v3121 = vunpack.c.l.b16 %v3057
        %v3122 = vunpack.c.l.b16 %v3058
        %v3123 = vunpack.c.l.b16 %v3059
        %v3124 = vunpack.c.l.b16 %v3060
        %v3125 = vpack.c.b16 %v3094, %v3093
        %v3126 = vpack.c.b16 %v3096, %v3095
        %v3127 = vpack.c.b16 %v3098, %v3097
        %v3128 = vpack.c.b16 %v3100, %v3099
        %v3129 = vpack.c.b16 %v3102, %v3101
        %v3130 = vpack.c.b16 %v3104, %v3103
        %v3131 = vpack.c.b16 %v3106, %v3105
        %v3132 = vpack.c.b16 %v3108, %v3107
        %v3133 = vpack.c.b16 %v3110, %v3109
        %v3134 = vpack.c.b16 %v3112, %v3111
        %v3135 = vpack.c.b16 %v3114, %v3113
        %v3136 = vpack.c.b16 %v3116, %v3115
        %v3137 = vpack.c.b16 %v3118, %v3117
        %v3138 = vpack.c.b16 %v3120, %v3119
        %v3139 = vpack.c.b16 %v3122, %v3121
        %v3140 = vpack.c.b16 %v3124, %v3123
        %3157 = vmatprep.subr.bf16.mxu0 0
        %3158 = vmatpush1.bf16.msra.mxu0 %v3125
        %3159 = vmatprep.subr.bf16.mxu0 0
        %3160 = vmatpush1.bf16.msra.mxu0 %v3126
        %3161 = vmatprep.subr.bf16.mxu0 0
        %3162 = vmatpush1.bf16.msra.mxu0 %v3127
        %3163 = vmatprep.subr.bf16.mxu0 0
        %3164 = vmatpush1.bf16.msra.mxu0 %v3128
        %3165 = vmatprep.subr.bf16.mxu0 0
        %3166 = vmatpush1.bf16.msra.mxu0 %v3129
        %3167 = vmatprep.subr.bf16.mxu0 0
        %3168 = vmatpush1.bf16.msra.mxu0 %v3130
        %3169 = vmatprep.subr.bf16.mxu0 0
        %3170 = vmatpush1.bf16.msra.mxu0 %v3131
        %3171 = vmatprep.subr.bf16.mxu0 0
        %3172 = vmatpush1.bf16.msra.mxu0 %v3132
        %3173 = vmatprep.subr.bf16.mxu0 0
        %3174 = vmatpush1.bf16.msra.mxu0 %v3133
        %3175 = vmatprep.subr.bf16.mxu0 0
        %3176 = vmatpush1.bf16.msra.mxu0 %v3134
        %3177 = vmatprep.subr.bf16.mxu0 0
        %3178 = vmatpush1.bf16.msra.mxu0 %v3135
        %3179 = vmatprep.subr.bf16.mxu0 0
        %3180 = vmatpush1.bf16.msra.mxu0 %v3136
        %3181 = vmatprep.subr.bf16.mxu0 0
        %3182 = vmatpush1.bf16.msra.mxu0 %v3137
        %3183 = vmatprep.subr.bf16.mxu0 0
        %3184 = vmatpush1.bf16.msra.mxu0 %v3138
        %3185 = vmatprep.subr.bf16.mxu0 0
        %3186 = vmatpush1.bf16.msra.mxu0 %v3139
        %3187 = vmatprep.subr.bf16.mxu0 0
        %3188 = vmatpush1.bf16.msra.mxu0 %v3140
        %3189 = vmatprep.mubr.bf16.mxu0 %v3020
        %3190 = vmatmul.mubr.bf16.gmra.mrb[0].mxu0 %v3004
        %v3191 = vpop.f32.mrb[0].mxu0
        %v3192 = vadd.f32 0.0, %v3191
        %v3193 = vpop.f32.mrb[0].mxu0
        %v3194 = vpop.f32.mrb[0].mxu0
        %v3195 = vadd.f32 0.0, %v3194
        %v3196 = vpop.f32.mrb[0].mxu0
        %3197 = vmatprep.mubr.bf16.mxu0 %v3021
        %3198 = vmatmul.mubr.bf16.gmra.mrb[0].mxu0 %v3005
        %v3199 = vpop.f32.mrb[0].mxu0
        %v3200 = vadd.f32 0.0, %v3199
        %v3201 = vpop.f32.mrb[0].mxu0
        %v3202 = vpop.f32.mrb[0].mxu0
        %v3203 = vadd.f32 0.0, %v3202
        %v3204 = vpop.f32.mrb[0].mxu0
        %3205 = vmatprep.mubr.bf16.mxu0 %v3022
        %3206 = vmatmul.mubr.bf16.gmra.mrb[0].mxu0 %v3006
        %v3207 = vpop.f32.mrb[0].mxu0
        %v3208 = vadd.f32 0.0, %v3207
        %v3209 = vpop.f32.mrb[0].mxu0
        %v3210 = vpop.f32.mrb[0].mxu0
        %v3211 = vadd.f32 0.0, %v3210
        %v3212 = vpop.f32.mrb[0].mxu0
        %3213 = vmatprep.mubr.bf16.mxu0 %v3023
        %3214 = vmatmul.mubr.bf16.gmra.mrb[0].mxu0 %v3007
        %v3215 = vpop.f32.mrb[0].mxu0
        %v3216 = vadd.f32 0.0, %v3215
        %v3217 = vpop.f32.mrb[0].mxu0
        %v3218 = vpop.f32.mrb[0].mxu0
        %v3219 = vadd.f32 0.0, %v3218
        %v3220 = vpop.f32.mrb[0].mxu0
        %3221 = vdwg.mxu0
        %v3222 = vadd.f32 %v2842, %v3192
        %v3223 = vadd.f32 %v2843, %v3195
        %v3224 = vadd.f32 %v2844, %v3200
        %v3225 = vadd.f32 %v2845, %v3203
        %v3226 = vadd.f32 %v2846, %v3208
        %v3227 = vadd.f32 %v2847, %v3211
        %v3228 = vadd.f32 %v2848, %v3216
        %v3229 = vadd.f32 %v2849, %v3219
        %3230 = vst [vmem:[#allocation3] sm:$0xff] %v3222
        %3231 = vst [vmem:[#allocation3 + $0x8] sm:$0xff] %v3223
        %3232 = vst [vmem:[#allocation3 + $0x10] sm:$0xff] %v3224
        %3233 = vst [vmem:[#allocation3 + $0x18] sm:$0xff] %v3225
        %3234 = vst [vmem:[#allocation3 + $0x20] sm:$0xff] %v3226
        %3235 = vst [vmem:[#allocation3 + $0x28] sm:$0xff] %v3227
        %3236 = vst [vmem:[#allocation3 + $0x30] sm:$0xff] %v3228
        %3237 = vst [vmem:[#allocation3 + $0x38] sm:$0xff] %v3229
        %v3238 = vld [vmem:[#allocation3] sm:$0xff]
        %v3239 = vld [vmem:[#allocation3 + $0x8] sm:$0xff]
        %v3240 = vld [vmem:[#allocation3 + $0x10] sm:$0xff]
        %v3241 = vld [vmem:[#allocation3 + $0x18] sm:$0xff]
        %v3242 = vld [vmem:[#allocation3 + $0x20] sm:$0xff]
        %v3243 = vld [vmem:[#allocation3 + $0x28] sm:$0xff]
        %v3244 = vld [vmem:[#allocation3 + $0x30] sm:$0xff]
        %v3245 = vld [vmem:[#allocation3 + $0x38] sm:$0xff]
        %v3246 = vld [vmem:[%s2850] sm:$0xf]
        %v3247 = vld [vmem:[%s2850 + $0x4] sm:$0x1]
        %v3248 = vld [vmem:[%s2850 + $0x8] sm:$0xf]
        %v3249 = vld [vmem:[%s2850 + $0xc] sm:$0x1]
        %v3250 = vld [vmem:[%s2850 + $0x10] sm:$0xf]
        %v3251 = vld [vmem:[%s2850 + $0x14] sm:$0x1]
        %v3252 = vld [vmem:[%s2850 + $0x18] sm:$0xf]
        %v3253 = vld [vmem:[%s2850 + $0x1c] sm:$0x1]
        %v3254 = vld [vmem:[%s2850 + $0x20] sm:$0xf]
        %v3255 = vld [vmem:[%s2850 + $0x24] sm:$0x1]
        %v3256 = vld [vmem:[%s2850 + $0x28] sm:$0xf]
        %v3257 = vld [vmem:[%s2850 + $0x2c] sm:$0x1]
        %v3258 = vld [vmem:[%s2850 + $0x30] sm:$0xf]
        %v3259 = vld [vmem:[%s2850 + $0x34] sm:$0x1]
        %v3260 = vld [vmem:[%s2850 + $0x38] sm:$0xf]
        %v3261 = vld [vmem:[%s2850 + $0x3c] sm:$0x1]
        %v3263 = vshrl.u32 %v3246, 16
        %v3265 = vrot.slane %v3263, 4
        %v3266 = vshll.u32 %v3246, 16
        %v3268 = vrot.slane %v3266, 5
        %v3269 = vor.u32 %v3265, %v3268
        %v3270 = vrot.slane %v3269, 4
        %v3272 = vshll.u32 %v3247, 16
        %v3274 = vrot.slane %v3272, 5
        %v3275 = vsel %vm1587, %v3270, %v3274
        %v3277 = vshrl.u32 %v3248, 16
        %v3279 = vrot.slane %v3277, 4
        %v3280 = vshll.u32 %v3248, 16
        %v3282 = vrot.slane %v3280, 5
        %v3283 = vor.u32 %v3279, %v3282
        %v3284 = vrot.slane %v3283, 4
        %v3286 = vshll.u32 %v3249, 16
        %v3288 = vrot.slane %v3286, 5
        %v3289 = vsel %vm1587, %v3284, %v3288
        %v3291 = vshrl.u32 %v3250, 16
        %v3293 = vrot.slane %v3291, 4
        %v3294 = vshll.u32 %v3250, 16
        %v3296 = vrot.slane %v3294, 5
        %v3297 = vor.u32 %v3293, %v3296
        %v3298 = vrot.slane %v3297, 4
        %v3300 = vshll.u32 %v3251, 16
        %v3302 = vrot.slane %v3300, 5
        %v3303 = vsel %vm1587, %v3298, %v3302
        %v3305 = vshrl.u32 %v3252, 16
        %v3307 = vrot.slane %v3305, 4
        %v3308 = vshll.u32 %v3252, 16
        %v3310 = vrot.slane %v3308, 5
        %v3311 = vor.u32 %v3307, %v3310
        %v3312 = vrot.slane %v3311, 4
        %v3314 = vshll.u32 %v3253, 16
        %v3316 = vrot.slane %v3314, 5
        %v3317 = vsel %vm1587, %v3312, %v3316
        %v3319 = vshrl.u32 %v3254, 16
        %v3321 = vrot.slane %v3319, 4
        %v3322 = vshll.u32 %v3254, 16
        %v3324 = vrot.slane %v3322, 5
        %v3325 = vor.u32 %v3321, %v3324
        %v3326 = vrot.slane %v3325, 4
        %v3328 = vshll.u32 %v3255, 16
        %v3330 = vrot.slane %v3328, 5
        %v3331 = vsel %vm1587, %v3326, %v3330
        %v3333 = vshrl.u32 %v3256, 16
        %v3335 = vrot.slane %v3333, 4
        %v3336 = vshll.u32 %v3256, 16
        %v3338 = vrot.slane %v3336, 5
        %v3339 = vor.u32 %v3335, %v3338
        %v3340 = vrot.slane %v3339, 4
        %v3342 = vshll.u32 %v3257, 16
        %v3344 = vrot.slane %v3342, 5
        %v3345 = vsel %vm1587, %v3340, %v3344
        %v3347 = vshrl.u32 %v3258, 16
        %v3349 = vrot.slane %v3347, 4
        %v3350 = vshll.u32 %v3258, 16
        %v3352 = vrot.slane %v3350, 5
        %v3353 = vor.u32 %v3349, %v3352
        %v3354 = vrot.slane %v3353, 4
        %v3356 = vshll.u32 %v3259, 16
        %v3358 = vrot.slane %v3356, 5
        %v3359 = vsel %vm1587, %v3354, %v3358
        %v3361 = vshrl.u32 %v3260, 16
        %v3363 = vrot.slane %v3361, 4
        %v3364 = vshll.u32 %v3260, 16
        %v3366 = vrot.slane %v3364, 5
        %v3367 = vor.u32 %v3363, %v3366
        %v3368 = vrot.slane %v3367, 4
        %v3370 = vshll.u32 %v3261, 16
        %v3372 = vrot.slane %v3370, 5
        %v3373 = vsel %vm1587, %v3368, %v3372
        %s3374 = scalar_lea.vmem [#allocation9], 512
        %v3375 = vld [vmem:[%s3374] sm:$0xf]
        %v3376 = vld [vmem:[%s3374 + $0x4] sm:$0xf]
        %v3377 = vld [vmem:[%s3374 + $0x8] sm:$0xf]
        %v3378 = vld [vmem:[%s3374 + $0xc] sm:$0xf]
        %v3379 = vld [vmem:[%s3374 + $0x10] sm:$0xf]
        %v3380 = vld [vmem:[%s3374 + $0x14] sm:$0xf]
        %v3381 = vld [vmem:[%s3374 + $0x18] sm:$0xf]
        %v3382 = vld [vmem:[%s3374 + $0x1c] sm:$0xf]
        %v3383 = vld [vmem:[%s3374 + $0x20] sm:$0xf]
        %v3384 = vld [vmem:[%s3374 + $0x24] sm:$0xf]
        %v3385 = vld [vmem:[%s3374 + $0x28] sm:$0xf]
        %v3386 = vld [vmem:[%s3374 + $0x2c] sm:$0xf]
        %v3387 = vld [vmem:[%s3374 + $0x30] sm:$0xf]
        %v3388 = vld [vmem:[%s3374 + $0x34] sm:$0xf]
        %v3389 = vld [vmem:[%s3374 + $0x38] sm:$0xf]
        %v3390 = vld [vmem:[%s3374 + $0x3c] sm:$0xf]
        %v3391 = vunpack.c.l.b16 %v3275
        %v3392 = vunpack.c.l.b16 %v3289
        %v3393 = vunpack.c.l.b16 %v3303
        %v3394 = vunpack.c.l.b16 %v3317
        %v3395 = vunpack.c.l.b16 %v3331
        %v3396 = vunpack.c.l.b16 %v3345
        %v3397 = vunpack.c.l.b16 %v3359
        %v3398 = vunpack.c.l.b16 %v3373
        %v3399 = vpack.c.b16 %v3392, %v3391
        %v3400 = vpack.c.b16 %v3394, %v3393
        %v3401 = vpack.c.b16 %v3396, %v3395
        %v3402 = vpack.c.b16 %v3398, %v3397
        %v3423 = vunpack.c.l.b16 %v3375
        %v3424 = vunpack.c.l.b16 %v3376
        %v3425 = vunpack.c.l.b16 %v3377
        %v3426 = vunpack.c.l.b16 %v3378
        %v3427 = vunpack.c.l.b16 %v3379
        %v3428 = vunpack.c.l.b16 %v3380
        %v3429 = vunpack.c.l.b16 %v3381
        %v3430 = vunpack.c.l.b16 %v3382
        %v3431 = vunpack.c.l.b16 %v3383
        %v3432 = vunpack.c.l.b16 %v3384
        %v3433 = vunpack.c.l.b16 %v3385
        %v3434 = vunpack.c.l.b16 %v3386
        %v3435 = vunpack.c.l.b16 %v3387
        %v3436 = vunpack.c.l.b16 %v3388
        %v3437 = vunpack.c.l.b16 %v3389
        %v3438 = vunpack.c.l.b16 %v3390
        %v3439 = vpack.c.b16 %v3424, %v3423
        %v3440 = vpack.c.b16 %v3426, %v3425
        %v3441 = vpack.c.b16 %v3428, %v3427
        %v3442 = vpack.c.b16 %v3430, %v3429
        %v3443 = vpack.c.b16 %v3432, %v3431
        %v3444 = vpack.c.b16 %v3434, %v3433
        %v3445 = vpack.c.b16 %v3436, %v3435
        %v3446 = vpack.c.b16 %v3438, %v3437
        %3455 = vmatprep.subr.bf16.mxu0 0
        %3456 = vmatpush1.bf16.msra.mxu0 %v3439
        %3457 = vmatprep.subr.bf16.mxu0 0
        %3458 = vmatpush1.bf16.msra.mxu0 %v3440
        %3459 = vmatprep.subr.bf16.mxu0 0
        %3460 = vmatpush1.bf16.msra.mxu0 %v3441
        %3461 = vmatprep.subr.bf16.mxu0 0
        %3462 = vmatpush1.bf16.msra.mxu0 %v3442
        %3463 = vmatprep.subr.bf16.mxu0 0
        %3464 = vmatpush1.bf16.msra.mxu0 %v3443
        %3465 = vmatprep.subr.bf16.mxu0 0
        %3466 = vmatpush1.bf16.msra.mxu0 %v3444
        %3467 = vmatprep.subr.bf16.mxu0 0
        %3468 = vmatpush1.bf16.msra.mxu0 %v3445
        %3469 = vmatprep.subr.bf16.mxu0 0
        %3470 = vmatpush1.bf16.msra.mxu0 %v3446
        %3471 = vmatprep.subr.bf16.mxu0 0
        %3472 = vmatpush1.bf16.msra.mxu0 0
        %3473 = vmatprep.subr.bf16.mxu0 0
        %3474 = vmatpush1.bf16.msra.mxu0 0
        %3475 = vmatprep.subr.bf16.mxu0 0
        %3476 = vmatpush1.bf16.msra.mxu0 0
        %3477 = vmatprep.subr.bf16.mxu0 0
        %3478 = vmatpush1.bf16.msra.mxu0 0
        %3479 = vmatprep.subr.bf16.mxu0 0
        %3480 = vmatpush1.bf16.msra.mxu0 0
        %3481 = vmatprep.subr.bf16.mxu0 0
        %3482 = vmatpush1.bf16.msra.mxu0 0
        %3483 = vmatprep.subr.bf16.mxu0 0
        %3484 = vmatpush1.bf16.msra.mxu0 0
        %3485 = vmatprep.subr.bf16.mxu0 0
        %3486 = vmatpush1.bf16.msra.mxu0 0
        %3487 = vmatprep.mubr.bf16.mxu0 0
        %3488 = vmatmul.mubr.bf16.gmra.mrb[0].mxu0 %v3399
        %v3489 = vpop.f32.mrb[0].mxu0
        %v3490 = vadd.f32 0.0, %v3489
        %v3491 = vpop.f32.mrb[0].mxu0
        %v3492 = vpop.f32.mrb[0].mxu0
        %v3493 = vadd.f32 0.0, %v3492
        %v3494 = vpop.f32.mrb[0].mxu0
        %3495 = vmatprep.mubr.bf16.mxu0 0
        %3496 = vmatmul.mubr.bf16.gmra.mrb[0].mxu0 %v3400
        %v3497 = vpop.f32.mrb[0].mxu0
        %v3498 = vadd.f32 0.0, %v3497
        %v3499 = vpop.f32.mrb[0].mxu0
        %v3500 = vpop.f32.mrb[0].mxu0
        %v3501 = vadd.f32 0.0, %v3500
        %v3502 = vpop.f32.mrb[0].mxu0
        %3503 = vmatprep.mubr.bf16.mxu0 0
        %3504 = vmatmul.mubr.bf16.gmra.mrb[0].mxu0 %v3401
        %v3505 = vpop.f32.mrb[0].mxu0
        %v3506 = vadd.f32 0.0, %v3505
        %v3507 = vpop.f32.mrb[0].mxu0
        %v3508 = vpop.f32.mrb[0].mxu0
        %v3509 = vadd.f32 0.0, %v3508
        %v3510 = vpop.f32.mrb[0].mxu0
        %3511 = vmatprep.mubr.bf16.mxu0 0
        %3512 = vmatmul.mubr.bf16.gmra.mrb[0].mxu0 %v3402
        %v3513 = vpop.f32.mrb[0].mxu0
        %v3514 = vadd.f32 0.0, %v3513
        %v3515 = vpop.f32.mrb[0].mxu0
        %v3516 = vpop.f32.mrb[0].mxu0
        %v3517 = vadd.f32 0.0, %v3516
        %v3518 = vpop.f32.mrb[0].mxu0
        %3519 = vdwg.mxu0
        %v3520 = vadd.f32 %v3238, %v3490
        %v3521 = vadd.f32 %v3239, %v3493
        %v3522 = vadd.f32 %v3240, %v3498
        %v3523 = vadd.f32 %v3241, %v3501
        %v3524 = vadd.f32 %v3242, %v3506
        %v3525 = vadd.f32 %v3243, %v3509
        %v3526 = vadd.f32 %v3244, %v3514
        %v3527 = vadd.f32 %v3245, %v3517
        %3528 = vst [vmem:[#allocation3] sm:$0xff] %v3520
        %3529 = vst [vmem:[#allocation3 + $0x8] sm:$0xff] %v3521
        %3530 = vst [vmem:[#allocation3 + $0x10] sm:$0xff] %v3522
        %3531 = vst [vmem:[#allocation3 + $0x18] sm:$0xff] %v3523
        %3532 = vst [vmem:[#allocation3 + $0x20] sm:$0xff] %v3524
        %3533 = vst [vmem:[#allocation3 + $0x28] sm:$0xff] %v3525
        %3534 = vst [vmem:[#allocation3 + $0x30] sm:$0xff] %v3526
        %3535 = vst [vmem:[#allocation3 + $0x38] sm:$0xff] %v3527
        %v3536 = vld [vmem:[#allocation3] sm:$0xff]
        %v3537 = vld [vmem:[#allocation3 + $0x8] sm:$0xff]
        %v3538 = vld [vmem:[#allocation3 + $0x10] sm:$0xff]
        %v3539 = vld [vmem:[#allocation3 + $0x18] sm:$0xff]
        %v3540 = vld [vmem:[#allocation3 + $0x20] sm:$0xff]
        %v3541 = vld [vmem:[#allocation3 + $0x28] sm:$0xff]
        %v3542 = vld [vmem:[#allocation3 + $0x30] sm:$0xff]
        %v3543 = vld [vmem:[#allocation3 + $0x38] sm:$0xff]
        %v3544 = vld [vmem:[%s4] sm:$0x1]
        %v3546 = vlaneseq
        %v3547 = vshrl.u32 %v3546, 7
        %v3548 = vsub.s32 0, %v3547
        %v3549 = vrot.slane %v3544, %v3548
        %v3551 = vadd.f32 %v3536, %v3549
        %v3552 = vadd.f32 %v3537, %v3549
        %v3553 = vadd.f32 %v3538, %v3549
        %v3554 = vadd.f32 %v3539, %v3549
        %v3555 = vadd.f32 %v3540, %v3549
        %v3556 = vadd.f32 %v3541, %v3549
        %v3557 = vadd.f32 %v3542, %v3549
        %v3558 = vadd.f32 %v3543, %v3549
        %v3559 = vmax.f32 %v3551, 0.0
        %v3560 = vmax.f32 %v3552, 0.0
        %v3561 = vmax.f32 %v3553, 0.0
        %v3562 = vmax.f32 %v3554, 0.0
        %v3563 = vmax.f32 %v3555, 0.0
        %v3564 = vmax.f32 %v3556, 0.0
        %v3565 = vmax.f32 %v3557, 0.0
        %v3566 = vmax.f32 %v3558, 0.0
        %v3567 = vpack.c.bf16 %v3560, %v3559
        %v3568 = vpack.c.bf16 %v3562, %v3561
        %v3569 = vpack.c.bf16 %v3564, %v3563
        %v3570 = vpack.c.bf16 %v3566, %v3565
        %v3571 = vld [vmem:[#allocation10] sm:$0xf]
        %v3572 = vld [vmem:[#allocation10 + $0x4] sm:$0xf]
        %v3573 = vld [vmem:[#allocation10 + $0x8] sm:$0xf]
        %v3574 = vld [vmem:[#allocation10 + $0xc] sm:$0xf]
        %v3575 = vld [vmem:[#allocation10 + $0x10] sm:$0xf]
        %v3576 = vld [vmem:[#allocation10 + $0x14] sm:$0xf]
        %v3577 = vld [vmem:[#allocation10 + $0x18] sm:$0xf]
        %v3578 = vld [vmem:[#allocation10 + $0x1c] sm:$0xf]
        %v3579 = vld [vmem:[#allocation10 + $0x20] sm:$0xf]
        %v3580 = vld [vmem:[#allocation10 + $0x24] sm:$0xf]
        %v3581 = vld [vmem:[#allocation10 + $0x28] sm:$0xf]
        %v3582 = vld [vmem:[#allocation10 + $0x2c] sm:$0xf]
        %v3583 = vld [vmem:[#allocation10 + $0x30] sm:$0xf]
        %v3584 = vld [vmem:[#allocation10 + $0x34] sm:$0xf]
        %v3585 = vld [vmem:[#allocation10 + $0x38] sm:$0xf]
        %v3586 = vld [vmem:[#allocation10 + $0x3c] sm:$0xf]
        %v3587 = vld [vmem:[#allocation10 + $0x40] sm:$0xf]
        %v3588 = vld [vmem:[#allocation10 + $0x44] sm:$0xf]
        %v3589 = vld [vmem:[#allocation10 + $0x48] sm:$0xf]
        %v3590 = vld [vmem:[#allocation10 + $0x4c] sm:$0xf]
        %v3591 = vld [vmem:[#allocation10 + $0x50] sm:$0xf]
        %v3592 = vld [vmem:[#allocation10 + $0x54] sm:$0xf]
        %v3593 = vld [vmem:[#allocation10 + $0x58] sm:$0xf]
        %v3594 = vld [vmem:[#allocation10 + $0x5c] sm:$0xf]
        %v3595 = vld [vmem:[#allocation10 + $0x60] sm:$0xf]
        %v3596 = vld [vmem:[#allocation10 + $0x64] sm:$0xf]
        %v3597 = vld [vmem:[#allocation10 + $0x68] sm:$0xf]
        %v3598 = vld [vmem:[#allocation10 + $0x6c] sm:$0xf]
        %v3599 = vld [vmem:[#allocation10 + $0x70] sm:$0xf]
        %v3600 = vld [vmem:[#allocation10 + $0x74] sm:$0xf]
        %v3601 = vld [vmem:[#allocation10 + $0x78] sm:$0xf]
        %v3602 = vld [vmem:[#allocation10 + $0x7c] sm:$0xf]
        %v3603 = vld [vmem:[%s6] sm:$0x1]
        %v3605 = vlaneseq
        %v3606 = vshrl.u32 %v3605, 7
        %v3607 = vsub.s32 0, %v3606
        %v3608 = vrot.slane %v3603, %v3607
        %v3642 = vunpack.c.l.b16 %v3571
        %v3643 = vunpack.c.l.b16 %v3572
        %v3644 = vunpack.c.l.b16 %v3573
        %v3645 = vunpack.c.l.b16 %v3574
        %v3646 = vunpack.c.l.b16 %v3575
        %v3647 = vunpack.c.l.b16 %v3576
        %v3648 = vunpack.c.l.b16 %v3577
        %v3649 = vunpack.c.l.b16 %v3578
        %v3650 = vunpack.c.l.b16 %v3579
        %v3651 = vunpack.c.l.b16 %v3580
        %v3652 = vunpack.c.l.b16 %v3581
        %v3653 = vunpack.c.l.b16 %v3582
        %v3654 = vunpack.c.l.b16 %v3583
        %v3655 = vunpack.c.l.b16 %v3584
        %v3656 = vunpack.c.l.b16 %v3585
        %v3657 = vunpack.c.l.b16 %v3586
        %v3658 = vunpack.c.l.b16 %v3587
        %v3659 = vunpack.c.l.b16 %v3588
        %v3660 = vunpack.c.l.b16 %v3589
        %v3661 = vunpack.c.l.b16 %v3590
        %v3662 = vunpack.c.l.b16 %v3591
        %v3663 = vunpack.c.l.b16 %v3592
        %v3664 = vunpack.c.l.b16 %v3593
        %v3665 = vunpack.c.l.b16 %v3594
        %v3666 = vunpack.c.l.b16 %v3595
        %v3667 = vunpack.c.l.b16 %v3596
        %v3668 = vunpack.c.l.b16 %v3597
        %v3669 = vunpack.c.l.b16 %v3598
        %v3670 = vunpack.c.l.b16 %v3599
        %v3671 = vunpack.c.l.b16 %v3600
        %v3672 = vunpack.c.l.b16 %v3601
        %v3673 = vunpack.c.l.b16 %v3602
        %v3674 = vpack.c.b16 %v3643, %v3642
        %v3675 = vpack.c.b16 %v3645, %v3644
        %v3676 = vpack.c.b16 %v3647, %v3646
        %v3677 = vpack.c.b16 %v3649, %v3648
        %v3678 = vpack.c.b16 %v3651, %v3650
        %v3679 = vpack.c.b16 %v3653, %v3652
        %v3680 = vpack.c.b16 %v3655, %v3654
        %v3681 = vpack.c.b16 %v3657, %v3656
        %v3682 = vpack.c.b16 %v3659, %v3658
        %v3683 = vpack.c.b16 %v3661, %v3660
        %v3684 = vpack.c.b16 %v3663, %v3662
        %v3685 = vpack.c.b16 %v3665, %v3664
        %v3686 = vpack.c.b16 %v3667, %v3666
        %v3687 = vpack.c.b16 %v3669, %v3668
        %v3688 = vpack.c.b16 %v3671, %v3670
        %v3689 = vpack.c.b16 %v3673, %v3672
        %3706 = vmatprep.subr.bf16.mxu0 0
        %3707 = vmatpush1.bf16.msra.mxu0 %v3674
        %3708 = vmatprep.subr.bf16.mxu0 0
        %3709 = vmatpush1.bf16.msra.mxu0 %v3675
        %3710 = vmatprep.subr.bf16.mxu0 0
        %3711 = vmatpush1.bf16.msra.mxu0 %v3676
        %3712 = vmatprep.subr.bf16.mxu0 0
        %3713 = vmatpush1.bf16.msra.mxu0 %v3677
        %3714 = vmatprep.subr.bf16.mxu0 0
        %3715 = vmatpush1.bf16.msra.mxu0 %v3678
        %3716 = vmatprep.subr.bf16.mxu0 0
        %3717 = vmatpush1.bf16.msra.mxu0 %v3679
        %3718 = vmatprep.subr.bf16.mxu0 0
        %3719 = vmatpush1.bf16.msra.mxu0 %v3680
        %3720 = vmatprep.subr.bf16.mxu0 0
        %3721 = vmatpush1.bf16.msra.mxu0 %v3681
        %3722 = vmatprep.subr.bf16.mxu0 0
        %3723 = vmatpush1.bf16.msra.mxu0 %v3682
        %3724 = vmatprep.subr.bf16.mxu0 0
        %3725 = vmatpush1.bf16.msra.mxu0 %v3683
        %3726 = vmatprep.subr.bf16.mxu0 0
        %3727 = vmatpush1.bf16.msra.mxu0 %v3684
        %3728 = vmatprep.subr.bf16.mxu0 0
        %3729 = vmatpush1.bf16.msra.mxu0 %v3685
        %3730 = vmatprep.subr.bf16.mxu0 0
        %3731 = vmatpush1.bf16.msra.mxu0 %v3686
        %3732 = vmatprep.subr.bf16.mxu0 0
        %3733 = vmatpush1.bf16.msra.mxu0 %v3687
        %3734 = vmatprep.subr.bf16.mxu0 0
        %3735 = vmatpush1.bf16.msra.mxu0 %v3688
        %3736 = vmatprep.subr.bf16.mxu0 0
        %3737 = vmatpush1.bf16.msra.mxu0 %v3689
        %3738 = vmatprep.mubr.bf16.mxu0 %v461
        %3739 = vmatmul.mubr.bf16.gmra.mrb[0].mxu0 %v3567
        %v3740 = vpop.f32.mrb[0].mxu0
        %v3741 = vadd.f32 %v3608, %v3740
        %v3742 = vpop.f32.mrb[0].mxu0
        %v3743 = vpop.f32.mrb[0].mxu0
        %v3744 = vadd.f32 %v3608, %v3743
        %v3745 = vpop.f32.mrb[0].mxu0
        %3746 = vmatprep.mubr.bf16.mxu0 %v462
        %3747 = vmatmul.mubr.bf16.gmra.mrb[0].mxu0 %v3568
        %v3748 = vpop.f32.mrb[0].mxu0
        %v3749 = vadd.f32 %v3608, %v3748
        %v3750 = vpop.f32.mrb[0].mxu0
        %v3751 = vpop.f32.mrb[0].mxu0
        %v3752 = vadd.f32 %v3608, %v3751
        %v3753 = vpop.f32.mrb[0].mxu0
        %3754 = vmatprep.mubr.bf16.mxu0 %v463
        %3755 = vmatmul.mubr.bf16.gmra.mrb[0].mxu0 %v3569
        %v3756 = vpop.f32.mrb[0].mxu0
        %v3757 = vadd.f32 %v3608, %v3756
        %v3758 = vpop.f32.mrb[0].mxu0
        %v3759 = vpop.f32.mrb[0].mxu0
        %v3760 = vadd.f32 %v3608, %v3759
        %v3761 = vpop.f32.mrb[0].mxu0
        %3762 = vmatprep.mubr.bf16.mxu0 %v464
        %3763 = vmatmul.mubr.bf16.gmra.mrb[0].mxu0 %v3570
        %v3764 = vpop.f32.mrb[0].mxu0
        %v3765 = vadd.f32 %v3608, %v3764
        %v3766 = vpop.f32.mrb[0].mxu0
        %v3767 = vpop.f32.mrb[0].mxu0
        %v3768 = vadd.f32 %v3608, %v3767
        %v3769 = vpop.f32.mrb[0].mxu0
        %3770 = vdwg.mxu0
        %v3771 = vmax.f32 %v3741, 0.0
        %v3772 = vmax.f32 %v3744, 0.0
        %v3773 = vmax.f32 %v3749, 0.0
        %v3774 = vmax.f32 %v3752, 0.0
        %v3775 = vmax.f32 %v3757, 0.0
        %v3776 = vmax.f32 %v3760, 0.0
        %v3777 = vmax.f32 %v3765, 0.0
        %v3778 = vmax.f32 %v3768, 0.0
        %3779 = vst [vmem:[%s340] sm:$0xff] %v3771
        %3780 = vst [vmem:[%s340 + $0x8] sm:$0xff] %v3772
        %3781 = vst [vmem:[%s340 + $0x10] sm:$0xff] %v3773
        %3782 = vst [vmem:[%s340 + $0x18] sm:$0xff] %v3774
        %3783 = vst [vmem:[%s340 + $0x20] sm:$0xff] %v3775
        %3784 = vst [vmem:[%s340 + $0x28] sm:$0xff] %v3776
        %3785 = vst [vmem:[%s340 + $0x30] sm:$0xff] %v3777
        %3786 = vst [vmem:[%s340 + $0x38] sm:$0xff] %v3778
        %s3787 = sand.u32 %s186, 1
        %s3788 = scalar_lea.sflag [#allocation6], %s3787
        %s3789 = sand.u32 %s186, 1
        %s3790 = smul.addr %s3789, 64
        %s3791 = scalar_lea.vmem [#allocation12], %s3790
        // Predicated region
        $region65: #{tpu_custom_call.1} parent=47 // pred_check
          %p3792 = pneg %p196
        $region66: #{tpu_custom_call.1} parent=47 // pred_check_branch
          %3794 = sbr.rel (%p3792) target = $region68
        $region67: #{tpu_custom_call.1} parent=47 // pred_region
          %s3796 = ssub.s32 1024, 1024
          %3797 = vsyncadd %s3788, %s3796
          %s3798 = smul.addr %s26, 8
          %s3799 = smul.addr %s3798, 128
          %s3800 = scalar_lea.hbm %s7, %s3799
          %s3801 = sshll.u32 %s3791, 4
          %s3802 = int_to_ptr.vmem [resolvable:$true] %s3801
          %3807 = dma.vmem_to_hbm [thread:$0]  %s3802, 1024, %s3800, %s3788, 128, 128, 8
        $region68: #{tpu_custom_call.1} parent=47 // pred_fallthru
          _
      $region48: #{tpu_custom_call.1} parent=5 // pred_fallthru
        _
      %p3808 = scmp.le.s32.totalorder 2, %s21
      // Predicated region
      $region69: #{tpu_custom_call.1} parent=5 // pred_check
        %p3809 = pneg %p3808
      $region70: #{tpu_custom_call.1} parent=5 // pred_check_branch
        %3811 = sbr.rel (%p3809) target = $region72
      $region71: #{tpu_custom_call.1} parent=5 // pred_region
        %s3812 = ssub.s32 %s21, 2
        // Predicated region
        $region73: #{tpu_custom_call.1} parent=71 // pred_check
          %p3813 = pneg %p202
        $region74: #{tpu_custom_call.1} parent=71 // pred_check_branch
          %3815 = sbr.rel (%p3813) target = $region76
        $region75: #{tpu_custom_call.1} parent=71 // pred_region
          %s3816 = sand.u32 %s187, 1
          %s3817 = scalar_lea.sflag [#allocation6], %s3816
          %s3818 = sand.u32 %s187, 1
          %s3819 = smul.addr %s3818, 64
          %s3820 = scalar_lea.vmem [#allocation12], %s3819
          %3821 = dma.done %s3817, 1024
        $region76: #{tpu_custom_call.1} parent=71 // pred_fallthru
          _
      $region72: #{tpu_custom_call.1} parent=5 // pred_fallthru
        _
    $region6: #{tpu_custom_call.1} parent=1 // loop_footer
      %s25 = sadd.s32 1, %s21
    $region7: #{tpu_custom_call.1} parent=1 // loop_footer_branch
      %20 = sbr.rel target = $region3
    $region8: #{tpu_custom_call.1} parent=1 // loop_exit
      _
    %3822 = vsyncpa [#allocation5], 1
    %s3823 = scalar_lea.sflag [#allocation5], 1
    %3824 = vsyncpa %s3823, 1
    %3825 = vsyncpa [#allocation8], 1
    %3826 = vsyncpa [#allocation11], 1
    %3827 = vsyncpa [#allocation6], 1
    %s3828 = scalar_lea.sflag [#allocation6], 1
    %3829 = vsyncpa %s3828, 1

</llo_original>
